<compile_context>
chip_gen: v7x
topology: tpu7x:2x2x1
jax: 0.10.0
libtpu: 0.0.40
codegen_flags: <defaults>
</compile_context>

<pallas_src>
import functools

import jax
import jax.numpy as jnp
import numpy as np
from jax import lax
from jax.experimental import pallas as pl
from jax.experimental.pallas import tpu as pltpu

LANES = 128
BF16_SUBLANES = 16  # packed-bf16 sublane tile


def _round_up(x, m):
    return (x + m - 1) // m * m


def _pick_row_tile(H, row_tile):
    """Largest divisor of H that is <= row_tile (whole image if H is small)."""
    if H <= row_tile:
        return H
    th = row_tile
    while th > 1 and H % th:
        th -= 1
    return th if th >= 8 else H


def _vmem_cap_bytes():
    """~75% of the chip's VMEM, with a v7x-safe fallback."""
    try:
        info = pltpu.get_tpu_info()
        cap = getattr(info, "vmem_capacity_bytes", None)
        if cap:
            return int(cap) * 3 // 4
    except Exception:
        pass
    return 48 * 1024 * 1024


def conv_block_kernel(x_ref, w_ref, b_ref, o_ref, *, TH, W, Wc, C_in, C_out,
                      C_out_p, eps, neg_slope):
    """Fused PixelNorm -> 3x3 conv (9 accumulating bf16 matmuls) -> bias -> LReLU.

    x_ref : (1, H+2, Wp, C_in)     bf16 zero-padded image, one batch element
    w_ref : (9, C_in, C_out_p)     bf16 weights, wscale folded, index = 3*dy+dx
    b_ref : (1, C_out_p)           f32 WScaleLayer bias (zero-padded lanes)
    o_ref : (1, TH, W, C_out)      output row tile, true channel count
    """
    t = pl.program_id(1)
    row0 = pl.multiple_of(t * TH, TH)

    # Row window incl. the 1-row conv halo (leading-dim slice: cheap).
    xw = x_ref[0, pl.ds(row0, TH + 2)]                   # (TH+2, Wp, C_in) bf16

    # PixelNorm over the (unpadded) channel lanes, in f32.
    xf = xw.astype(jnp.float32)
    inv = lax.rsqrt(jnp.mean(xf * xf, axis=-1, keepdims=True) + eps)
    xb = (xf * inv).astype(jnp.bfloat16)                 # single bf16 cast

    # dx taps: three width-shifted views of the normalized bf16 slab, hoisted
    # out of the dy loop.  dx=0 is aligned; dx=1,2 are 1-/2-sublane shifts of
    # bf16 data (far cheaper than shifting a 3x-wide f32 accumulator).
    # TODO(synk): use pltpu.roll(xb, Wp - dx, axis=1) (idle XLU) once packed
    #             sublane rotates are guaranteed by the Mosaic version in use.
    shifted = [xb[:, dx:dx + Wc, :] for dx in range(3)]  # (TH+2, Wc, C_in) each

    M = TH * Wc
    acc = jnp.zeros((M, C_out_p), dtype=jnp.float32)
    for dy in range(3):
        for dx in range(3):
            lhs = shifted[dx][dy:dy + TH].reshape(M, C_in)   # free: Wc % 16 == 0
            acc = acc + jnp.dot(lhs, w_ref[3 * dy + dx],
                                preferred_element_type=jnp.float32)

    y = acc.reshape(TH, Wc, C_out_p) + b_ref[...]        # WScaleLayer bias
    y = jnp.maximum(y, neg_slope * y)                    # LeakyReLU(0.2)
    o_ref[...] = y[None, :, :W, :C_out].astype(o_ref.dtype)


def conv_block_forward(x_nchw, weight_oihw, bias, *, wscale, eps=1e-8,
                       neg_slope=0.2, row_tile=64):
    """ConvBlock forward.

    x_nchw      : (B, C_in, H, W)   float32, PyTorch layout
    weight_oihw : (C_out, C_in, 3, 3)
    bias        : (C_out,)
    returns     : (B, C_out, H, W)  float32
    """
    B, C_in, H, W = x_nchw.shape
    C_out, ci2, KH, KW = weight_oihw.shape
    assert KH == 3 and KW == 3 and ci2 == C_in, "specialised for 3x3, s1, p1"

    C_out_p = _round_up(C_out, LANES)
    Wc = _round_up(W, BF16_SUBLANES)     # compute width (layout-free reshapes)
    Wp = Wc + BF16_SUBLANES              # stored width: room for pad + dx<=2 shift
    TH = _pick_row_tile(H, row_tile)
    Hp = H + 2

    # ---- wrapper-side layout prep (plain XLA) --------------------------------
    x_nhwc = jnp.transpose(x_nchw, (0, 2, 3, 1)).astype(jnp.bfloat16)
    x_pad = jnp.pad(x_nhwc, ((0, 0), (1, 1), (1, Wp - W - 1), (0, 0)))

    # HWIO, wscale folded, C_out zero-padded to 128 lanes, taps flattened to 9.
    w_hwio = jnp.transpose(weight_oihw, (2, 3, 1, 0)) * wscale      # (3,3,Ci,Co)
    w_hwio = jnp.pad(w_hwio, ((0, 0), (0, 0), (0, 0), (0, C_out_p - C_out)))
    w_folded = w_hwio.reshape(9, C_in, C_out_p).astype(jnp.bfloat16)

    b_pad = jnp.pad(bias.astype(jnp.float32),
                    (0, C_out_p - C_out)).reshape(1, C_out_p)

    kernel = functools.partial(
        conv_block_kernel, TH=TH, W=W, Wc=Wc, C_in=C_in, C_out=C_out,
        C_out_p=C_out_p, eps=float(eps), neg_slope=float(neg_slope))

    # ---- VMEM budget from actual block sizes ---------------------------------
    in_block = Hp * Wp * C_in * 2
    w_bytes = 9 * C_in * C_out_p * 2
    bias_bytes = C_out_p * 4
    out_block = TH * W * C_out * 4
    slab_f32 = (TH + 2) * Wp * C_in * 4
    shifted_bf16 = 3 * (TH + 2) * Wc * C_in * 2
    acc_bytes = TH * Wc * C_out_p * 4
    needed = (2 * (in_block + w_bytes + bias_bytes + out_block)   # double buffers
              + 3 * slab_f32 + shifted_bf16 + 2 * acc_bytes)      # live temps
    vmem_limit = int(min(_vmem_cap_bytes(), max(2 * needed, 32 * 1024 * 1024)))

    cost = pl.CostEstimate(
        flops=int(2 * B * H * W * 9 * C_in * C_out + 4 * B * H * W * C_in),
        transcendentals=int(B * H * W),
        bytes_accessed=int(x_pad.size * 2 + w_folded.size * 2 + b_pad.size * 4
                           + B * H * W * C_out * 4))

    out_nhwc = pl.pallas_call(
        kernel,
        out_shape=jax.ShapeDtypeStruct((B, H, W, C_out), jnp.float32),
        grid_spec=pltpu.PrefetchScalarGridSpec(
            num_scalar_prefetch=0,
            grid=(B, H // TH),
            in_specs=[
                # Whole (bf16, true-C_in) padded image resident per batch item;
                # block index only changes with b so it is fetched once per b.
                # TODO(synk): streaming (TH+2)-row halo DMA for large images on v7x.
                pl.BlockSpec((1, Hp, Wp, C_in), lambda b, t: (b, 0, 0, 0)),
                pl.BlockSpec((9, C_in, C_out_p), lambda b, t: (0, 0, 0)),
                pl.BlockSpec((1, C_out_p), lambda b, t: (0, 0)),
            ],
            out_specs=pl.BlockSpec((1, TH, W, C_out),
                                   lambda b, t: (b, t, 0, 0)),
        ),
        compiler_params=pltpu.CompilerParams(
            # Batch axis parallel (megacore shards by b -> no duplicated image
            # DMA across TCs); row-tile axis sequential.
            dimension_semantics=("parallel", "arbitrary"),
            vmem_limit_bytes=vmem_limit),
        cost_estimate=cost,
    )(x_pad, w_folded, b_pad)

    return jnp.transpose(out_nhwc, (0, 3, 1, 2))          # back to NCHW, f32


def conv_block_reference(x_nchw, weight_oihw, bias, *, wscale, eps=1e-8,
                         neg_slope=0.2):
    """Plain-JAX reference mirroring the kernel's bf16 storage / f32 accumulation."""
    x = x_nchw.astype(jnp.bfloat16).astype(jnp.float32)   # bf16 HBM storage
    xn = x * lax.rsqrt(jnp.mean(x * x, axis=1, keepdims=True) + eps)
    w = (weight_oihw * wscale).astype(jnp.bfloat16)
    y = lax.conv_general_dilated(
        xn.astype(jnp.bfloat16), w, (1, 1), ((1, 1), (1, 1)),
        dimension_numbers=("NCHW", "OIHW", "NCHW"),
        preferred_element_type=jnp.float32)
    y = y + bias.reshape(1, -1, 1, 1)
    return jnp.maximum(y, neg_slope * y)


if __name__ == "__main__":
    # ConvBlock(in_channels=4, out_channels=8, kernel_size=3, stride=1,
    # padding=1, add_bias=False, upsample=False, activation='lrelu').
    B, C_in, C_out, H, W, K = 2, 4, 8, 16, 16, 3

    key = jax.random.PRNGKey(0)
    kx, kw, kb = jax.random.split(key, 3)
    x = jax.random.normal(kx, (B, C_in, H, W), dtype=jnp.float32)
    weight = jax.random.normal(kw, (C_out, C_in, K, K), dtype=jnp.float32)
    bias = jax.random.normal(kb, (C_out,), dtype=jnp.float32)

    # WScaleLayer: scale = gain / sqrt(fan_in), gain = sqrt(2),
    # fan_in = in_channels * kernel_size^2 (standard PGGAN wscale; the reference
    # ConvBlock.__init__ passes kwargs that don't match the listed WScaleLayer
    # signature, so we use the intended progressive-GAN semantics).
    wscale = float(np.sqrt(2.0) / np.sqrt(C_in * K * K))

    out = conv_block_forward(x, weight, bias, wscale=wscale)
    out = jax.block_until_ready(out)

    ref = conv_block_reference(x, weight, bias, wscale=wscale)
    # Tolerance covers bf16 rounding of the matmul operands / input storage
    # (both paths use bf16 operands with f32 accumulation; residual diff is
    # accumulation order).
    np.testing.assert_allclose(np.asarray(out), np.asarray(ref),
                               rtol=1e-2, atol=1e-2)

    print("KERNEL_OK")
</pallas_src>

<mosaic_0001>
module attributes {stable_mosaic.version = 11 : i64} {
  func.func @conv_block_kernel(%arg0: i32, %arg1: i32, %arg2: memref<1x18x32x4xbf16, #tpu.memory_space<vmem>>, %arg3: memref<9x4x128xbf16, #tpu.memory_space<vmem>>, %arg4: memref<1x128xf32, #tpu.memory_space<vmem>>, %arg5: memref<1x16x16x8xf32, #tpu.memory_space<vmem>>) attributes {dimension_semantics = [#tpu.dimension_semantics<parallel>, #tpu.dimension_semantics<arbitrary>], iteration_bounds = array<i64: 2, 1>, scalar_prefetch = 0 : i64, scratch_operands = 0 : i64, tpu.core_type = #tpu.core_type<tc>, window_params = [{transform_indices = @transform_0, window_bounds = array<i64: 1, 18, 32, 4>}, {pipeline_mode = #tpu.pipeline_mode<synchronous>, transform_indices = @transform_1, window_bounds = array<i64: 9, 4, 128>}, {pipeline_mode = #tpu.pipeline_mode<synchronous>, transform_indices = @transform_2, window_bounds = array<i64: 1, 128>}, {transform_indices = @transform_3, window_bounds = array<i64: 1, 16, 16, 8>}]} {
    %c16_i32 = arith.constant 16 : i32
    %0 = arith.muli %arg1, %c16_i32 : i32
    %1 = tpu.assume_multiple %0, 16 : i32
    %c0 = arith.constant 0 : index
    %2 = arith.index_cast %1 : i32 to index
    %c0_0 = arith.constant 0 : index
    %c0_1 = arith.constant 0 : index
    %3 = vector.load %arg2[%c0, %2, %c0_0, %c0_1] : memref<1x18x32x4xbf16, #tpu.memory_space<vmem>>, vector<1x18x32x4xbf16>
    %4 = vector.shape_cast %3 : vector<1x18x32x4xbf16> to vector<18x32x4xbf16>
    %5 = arith.extf %4 : vector<18x32x4xbf16> to vector<18x32x4xf32>
    %6 = arith.mulf %5, %5 : vector<18x32x4xf32>
    %cst = arith.constant dense<0.000000e+00> : vector<18x32xf32>
    %7 = vector.multi_reduction <add>, %6, %cst [2] : vector<18x32x4xf32> to vector<18x32xf32>
    %8 = vector.shape_cast %7 : vector<18x32xf32> to vector<18x32x1xf32>
    %cst_2 = arith.constant 4.000000e+00 : f32
    %9 = vector.broadcast %cst_2 : f32 to vector<18x32x1xf32>
    %10 = arith.divf %8, %9 : vector<18x32x1xf32>
    %cst_3 = arith.constant 9.99999993E-9 : f32
    %11 = vector.broadcast %cst_3 : f32 to vector<18x32x1xf32>
    %12 = arith.addf %10, %11 : vector<18x32x1xf32>
    %13 = math.rsqrt %12 : vector<18x32x1xf32>
    %14 = vector.broadcast %13 : vector<18x32x1xf32> to vector<18x32x4xf32>
    %15 = arith.mulf %5, %14 : vector<18x32x4xf32>
    %16 = arith.truncf %15 : vector<18x32x4xf32> to vector<18x32x4xbf16>
    %17 = vector.extract_strided_slice %16 {offsets = [0, 0, 0], sizes = [18, 16, 4], strides = [1, 1, 1]} : vector<18x32x4xbf16> to vector<18x16x4xbf16>
    %18 = vector.extract_strided_slice %16 {offsets = [0, 1, 0], sizes = [18, 16, 4], strides = [1, 1, 1]} : vector<18x32x4xbf16> to vector<18x16x4xbf16>
    %19 = vector.extract_strided_slice %16 {offsets = [0, 2, 0], sizes = [18, 16, 4], strides = [1, 1, 1]} : vector<18x32x4xbf16> to vector<18x16x4xbf16>
    %cst_4 = arith.constant 0.000000e+00 : f32
    %20 = vector.broadcast %cst_4 : f32 to vector<256x128xf32>
    %21 = vector.extract_strided_slice %17 {offsets = [0, 0, 0], sizes = [16, 16, 4], strides = [1, 1, 1]} : vector<18x16x4xbf16> to vector<16x16x4xbf16>
    %22 = vector.shape_cast %21 : vector<16x16x4xbf16> to vector<256x4xbf16>
    %c0_5 = arith.constant 0 : index
    %c0_6 = arith.constant 0 : index
    %c0_7 = arith.constant 0 : index
    %23 = vector.load %arg3[%c0_5, %c0_6, %c0_7] : memref<9x4x128xbf16, #tpu.memory_space<vmem>>, vector<1x4x128xbf16>
    %24 = vector.shape_cast %23 : vector<1x4x128xbf16> to vector<4x128xbf16>
    %cst_8 = arith.constant dense<0.000000e+00> : vector<256x128xf32>
    %25 = tpu.matmul %22, %24, %cst_8 {dimension_numbers = #tpu.dot_dimension_numbers<[1], [0], [0], [1], [0, 0, 1, 1], [], []>} : vector<256x4xbf16>, vector<4x128xbf16>, vector<256x128xf32> -> vector<256x128xf32>
    %26 = arith.addf %20, %25 : vector<256x128xf32>
    %27 = vector.extract_strided_slice %18 {offsets = [0, 0, 0], sizes = [16, 16, 4], strides = [1, 1, 1]} : vector<18x16x4xbf16> to vector<16x16x4xbf16>
    %28 = vector.shape_cast %27 : vector<16x16x4xbf16> to vector<256x4xbf16>
    %c1 = arith.constant 1 : index
    %c0_9 = arith.constant 0 : index
    %c0_10 = arith.constant 0 : index
    %29 = vector.load %arg3[%c1, %c0_9, %c0_10] : memref<9x4x128xbf16, #tpu.memory_space<vmem>>, vector<1x4x128xbf16>
    %30 = vector.shape_cast %29 : vector<1x4x128xbf16> to vector<4x128xbf16>
    %cst_11 = arith.constant dense<0.000000e+00> : vector<256x128xf32>
    %31 = tpu.matmul %28, %30, %cst_11 {dimension_numbers = #tpu.dot_dimension_numbers<[1], [0], [0], [1], [0, 0, 1, 1], [], []>} : vector<256x4xbf16>, vector<4x128xbf16>, vector<256x128xf32> -> vector<256x128xf32>
    %32 = arith.addf %26, %31 : vector<256x128xf32>
    %33 = vector.extract_strided_slice %19 {offsets = [0, 0, 0], sizes = [16, 16, 4], strides = [1, 1, 1]} : vector<18x16x4xbf16> to vector<16x16x4xbf16>
    %34 = vector.shape_cast %33 : vector<16x16x4xbf16> to vector<256x4xbf16>
    %c2 = arith.constant 2 : index
    %c0_12 = arith.constant 0 : index
    %c0_13 = arith.constant 0 : index
    %35 = vector.load %arg3[%c2, %c0_12, %c0_13] : memref<9x4x128xbf16, #tpu.memory_space<vmem>>, vector<1x4x128xbf16>
    %36 = vector.shape_cast %35 : vector<1x4x128xbf16> to vector<4x128xbf16>
    %cst_14 = arith.constant dense<0.000000e+00> : vector<256x128xf32>
    %37 = tpu.matmul %34, %36, %cst_14 {dimension_numbers = #tpu.dot_dimension_numbers<[1], [0], [0], [1], [0, 0, 1, 1], [], []>} : vector<256x4xbf16>, vector<4x128xbf16>, vector<256x128xf32> -> vector<256x128xf32>
    %38 = arith.addf %32, %37 : vector<256x128xf32>
    %39 = vector.extract_strided_slice %17 {offsets = [1, 0, 0], sizes = [16, 16, 4], strides = [1, 1, 1]} : vector<18x16x4xbf16> to vector<16x16x4xbf16>
    %40 = vector.shape_cast %39 : vector<16x16x4xbf16> to vector<256x4xbf16>
    %c3 = arith.constant 3 : index
    %c0_15 = arith.constant 0 : index
    %c0_16 = arith.constant 0 : index
    %41 = vector.load %arg3[%c3, %c0_15, %c0_16] : memref<9x4x128xbf16, #tpu.memory_space<vmem>>, vector<1x4x128xbf16>
    %42 = vector.shape_cast %41 : vector<1x4x128xbf16> to vector<4x128xbf16>
    %cst_17 = arith.constant dense<0.000000e+00> : vector<256x128xf32>
    %43 = tpu.matmul %40, %42, %cst_17 {dimension_numbers = #tpu.dot_dimension_numbers<[1], [0], [0], [1], [0, 0, 1, 1], [], []>} : vector<256x4xbf16>, vector<4x128xbf16>, vector<256x128xf32> -> vector<256x128xf32>
    %44 = arith.addf %38, %43 : vector<256x128xf32>
    %45 = vector.extract_strided_slice %18 {offsets = [1, 0, 0], sizes = [16, 16, 4], strides = [1, 1, 1]} : vector<18x16x4xbf16> to vector<16x16x4xbf16>
    %46 = vector.shape_cast %45 : vector<16x16x4xbf16> to vector<256x4xbf16>
    %c4 = arith.constant 4 : index
    %c0_18 = arith.constant 0 : index
    %c0_19 = arith.constant 0 : index
    %47 = vector.load %arg3[%c4, %c0_18, %c0_19] : memref<9x4x128xbf16, #tpu.memory_space<vmem>>, vector<1x4x128xbf16>
    %48 = vector.shape_cast %47 : vector<1x4x128xbf16> to vector<4x128xbf16>
    %cst_20 = arith.constant dense<0.000000e+00> : vector<256x128xf32>
    %49 = tpu.matmul %46, %48, %cst_20 {dimension_numbers = #tpu.dot_dimension_numbers<[1], [0], [0], [1], [0, 0, 1, 1], [], []>} : vector<256x4xbf16>, vector<4x128xbf16>, vector<256x128xf32> -> vector<256x128xf32>
    %50 = arith.addf %44, %49 : vector<256x128xf32>
    %51 = vector.extract_strided_slice %19 {offsets = [1, 0, 0], sizes = [16, 16, 4], strides = [1, 1, 1]} : vector<18x16x4xbf16> to vector<16x16x4xbf16>
    %52 = vector.shape_cast %51 : vector<16x16x4xbf16> to vector<256x4xbf16>
    %c5 = arith.constant 5 : index
    %c0_21 = arith.constant 0 : index
    %c0_22 = arith.constant 0 : index
    %53 = vector.load %arg3[%c5, %c0_21, %c0_22] : memref<9x4x128xbf16, #tpu.memory_space<vmem>>, vector<1x4x128xbf16>
    %54 = vector.shape_cast %53 : vector<1x4x128xbf16> to vector<4x128xbf16>
    %cst_23 = arith.constant dense<0.000000e+00> : vector<256x128xf32>
    %55 = tpu.matmul %52, %54, %cst_23 {dimension_numbers = #tpu.dot_dimension_numbers<[1], [0], [0], [1], [0, 0, 1, 1], [], []>} : vector<256x4xbf16>, vector<4x128xbf16>, vector<256x128xf32> -> vector<256x128xf32>
    %56 = arith.addf %50, %55 : vector<256x128xf32>
    %57 = vector.extract_strided_slice %17 {offsets = [2, 0, 0], sizes = [16, 16, 4], strides = [1, 1, 1]} : vector<18x16x4xbf16> to vector<16x16x4xbf16>
    %58 = vector.shape_cast %57 : vector<16x16x4xbf16> to vector<256x4xbf16>
    %c6 = arith.constant 6 : index
    %c0_24 = arith.constant 0 : index
    %c0_25 = arith.constant 0 : index
    %59 = vector.load %arg3[%c6, %c0_24, %c0_25] : memref<9x4x128xbf16, #tpu.memory_space<vmem>>, vector<1x4x128xbf16>
    %60 = vector.shape_cast %59 : vector<1x4x128xbf16> to vector<4x128xbf16>
    %cst_26 = arith.constant dense<0.000000e+00> : vector<256x128xf32>
    %61 = tpu.matmul %58, %60, %cst_26 {dimension_numbers = #tpu.dot_dimension_numbers<[1], [0], [0], [1], [0, 0, 1, 1], [], []>} : vector<256x4xbf16>, vector<4x128xbf16>, vector<256x128xf32> -> vector<256x128xf32>
    %62 = arith.addf %56, %61 : vector<256x128xf32>
    %63 = vector.extract_strided_slice %18 {offsets = [2, 0, 0], sizes = [16, 16, 4], strides = [1, 1, 1]} : vector<18x16x4xbf16> to vector<16x16x4xbf16>
    %64 = vector.shape_cast %63 : vector<16x16x4xbf16> to vector<256x4xbf16>
    %c7 = arith.constant 7 : index
    %c0_27 = arith.constant 0 : index
    %c0_28 = arith.constant 0 : index
    %65 = vector.load %arg3[%c7, %c0_27, %c0_28] : memref<9x4x128xbf16, #tpu.memory_space<vmem>>, vector<1x4x128xbf16>
    %66 = vector.shape_cast %65 : vector<1x4x128xbf16> to vector<4x128xbf16>
    %cst_29 = arith.constant dense<0.000000e+00> : vector<256x128xf32>
    %67 = tpu.matmul %64, %66, %cst_29 {dimension_numbers = #tpu.dot_dimension_numbers<[1], [0], [0], [1], [0, 0, 1, 1], [], []>} : vector<256x4xbf16>, vector<4x128xbf16>, vector<256x128xf32> -> vector<256x128xf32>
    %68 = arith.addf %62, %67 : vector<256x128xf32>
    %69 = vector.extract_strided_slice %19 {offsets = [2, 0, 0], sizes = [16, 16, 4], strides = [1, 1, 1]} : vector<18x16x4xbf16> to vector<16x16x4xbf16>
    %70 = vector.shape_cast %69 : vector<16x16x4xbf16> to vector<256x4xbf16>
    %c8 = arith.constant 8 : index
    %c0_30 = arith.constant 0 : index
    %c0_31 = arith.constant 0 : index
    %71 = vector.load %arg3[%c8, %c0_30, %c0_31] : memref<9x4x128xbf16, #tpu.memory_space<vmem>>, vector<1x4x128xbf16>
    %72 = vector.shape_cast %71 : vector<1x4x128xbf16> to vector<4x128xbf16>
    %cst_32 = arith.constant dense<0.000000e+00> : vector<256x128xf32>
    %73 = tpu.matmul %70, %72, %cst_32 {dimension_numbers = #tpu.dot_dimension_numbers<[1], [0], [0], [1], [0, 0, 1, 1], [], []>} : vector<256x4xbf16>, vector<4x128xbf16>, vector<256x128xf32> -> vector<256x128xf32>
    %74 = arith.addf %68, %73 : vector<256x128xf32>
    %75 = vector.shape_cast %74 : vector<256x128xf32> to vector<16x16x128xf32>
    %c0_33 = arith.constant 0 : index
    %c0_34 = arith.constant 0 : index
    %76 = vector.load %arg4[%c0_33, %c0_34] : memref<1x128xf32, #tpu.memory_space<vmem>>, vector<1x128xf32>
    %77 = vector.shape_cast %76 : vector<1x128xf32> to vector<1x1x128xf32>
    %78 = vector.broadcast %77 : vector<1x1x128xf32> to vector<16x16x128xf32>
    %79 = arith.addf %75, %78 : vector<16x16x128xf32>
    %cst_35 = arith.constant 2.000000e-01 : f32
    %80 = vector.broadcast %cst_35 : f32 to vector<16x16x128xf32>
    %81 = arith.mulf %80, %79 : vector<16x16x128xf32>
    %82 = arith.maximumf %79, %81 : vector<16x16x128xf32>
    %83 = vector.extract_strided_slice %82 {offsets = [0, 0, 0], sizes = [16, 16, 8], strides = [1, 1, 1]} : vector<16x16x128xf32> to vector<16x16x8xf32>
    %84 = vector.shape_cast %83 : vector<16x16x8xf32> to vector<1x16x16x8xf32>
    %c0_36 = arith.constant 0 : index
    %c0_37 = arith.constant 0 : index
    %c0_38 = arith.constant 0 : index
    %c0_39 = arith.constant 0 : index
    %85 = vector.load %arg5[%c0_36, %c0_37, %c0_38, %c0_39] : memref<1x16x16x8xf32, #tpu.memory_space<vmem>>, vector<1x16x16x8xf32>
    tpu.vector_store %arg5[%c0_36, %c0_37, %c0_38, %c0_39], %84 {strides = array<i32>} : memref<1x16x16x8xf32, #tpu.memory_space<vmem>>, vector<1x16x16x8xf32>,
    return
  }
  func.func @transform_0(%arg0: i32, %arg1: i32) -> (i32, i32, i32, i32) {
    %c0_i32 = arith.constant 0 : i32
    %c0_i32_0 = arith.constant 0 : i32
    %c0_i32_1 = arith.constant 0 : i32
    %c0_i32_2 = arith.constant 0 : i32
    return %arg0, %c0_i32, %c0_i32_0, %c0_i32_1 : i32, i32, i32, i32
  }
  func.func @transform_1(%arg0: i32, %arg1: i32) -> (i32, i32, i32) {
    %c0_i32 = arith.constant 0 : i32
    %c0_i32_0 = arith.constant 0 : i32
    %c0_i32_1 = arith.constant 0 : i32
    %c0_i32_2 = arith.constant 0 : i32
    return %c0_i32, %c0_i32_0, %c0_i32_1 : i32, i32, i32
  }
  func.func @transform_2(%arg0: i32, %arg1: i32) -> (i32, i32) {
    %c0_i32 = arith.constant 0 : i32
    %c0_i32_0 = arith.constant 0 : i32
    %c0_i32_1 = arith.constant 0 : i32
    return %c0_i32, %c0_i32_0 : i32, i32
  }
  func.func @transform_3(%arg0: i32, %arg1: i32) -> (i32, i32, i32, i32) {
    %c0_i32 = arith.constant 0 : i32
    %c0_i32_0 = arith.constant 0 : i32
    %c0_i32_1 = arith.constant 0 : i32
    return %arg0, %arg1, %c0_i32, %c0_i32_0 : i32, i32, i32, i32
  }
}

</mosaic_0001>

<llo_original>
// kernel: tpu_custom_call.1
$region0: #{tpu_custom_call.1}
  #allocation0 [shape = 'u32[]', space=smem, size = 0x4, offset = 0x4, fixed_abs, tag = 'smem constant byte address 0x4 - core index']
  #allocation1 [shape = 'u32[144,128]{1,0:T(1,128)}', space=vmem, size = 0x12000, scoped, tag = 'internal scratch']
  %s0 = inlined_call_operand.vmem [shape: bf16[2,18,32,4], index: 0, kind: input, shape index: {}]
  %s1 = inlined_call_operand.vmem [shape: bf16[9,4,128], index: 1, kind: input, shape index: {}]
  %s2 = inlined_call_operand.vmem [shape: f32[1,128], index: 2, kind: input, shape index: {}]
  %s3 = inlined_call_operand.vmem [shape: f32[2,16,16,8], index: 3, kind: output, shape index: {}]
  %s4 = sld [smem:[#allocation0]]
  $region45: #{tpu_custom_call.1} parent=0
    _
  %s6 = ssub.s32 1, %s4
  %s7 = scalar_select 0, %s6, %s4
  loop: start=0, step=1, limit=4
  $region2: #{tpu_custom_call.1} parent=0 // loop_pre_header
    _
  $region3: #{tpu_custom_call.1} parent=0 // loop_header
    %s9 = sphi 0, %s13
    %p10 = scmp.ge.s32.totalorder %s9, 4
    %s16 = sphi 0, %s28
    %s17 = sphi 0, %s24
    %s18 = sphi 0, %s16
    %s19 = sphi 0, %s17
    %s20 = sphi 0, %s18
    %s21 = sphi 0, %s19
    %s31 = sphi 0, %s33
    %s34 = sphi 0, %s31
    %s35 = sphi 0, %s34
    %s51 = sphi 0, %s35
    %s55 = sphi 0, %s55
    %s57 = sphi 0, %s55
    %s58 = sphi 0, %s57
    %s72 = sphi 0, %s58
    %s76 = sphi 0, %s76
    %s78 = sphi 0, %s76
    %s79 = sphi 0, %s78
    %s93 = sphi 0, %s79
    %s101 = sphi 0, %s103
    %s104 = sphi 0, %s101
    %s105 = sphi 0, %s104
    %s121 = sphi 0, %s105
  $region4: #{tpu_custom_call.1} parent=0 // loop_header_branch
    %12 = sbr.rel (%p10) target = $region8
  $region5: #{tpu_custom_call.1} parent=0 // loop_body
    %s14 = ssub.s32 %s9, 1
    %s15 = ssub.s32 %s9, 2
    %s22 = sadd.s32 1, %s17
    %p23 = scmp.ge.s32.totalorder %s22, 1
    %s24 = scalar_select %p23, 0, %s22
    %s25 = sadd.s32 1, %s16
    %s26 = scalar_select %p23, %s25, %s16
    %p27 = scmp.ge.s32.totalorder %s26, 2
    %s28 = scalar_select %p27, 0, %s26
    %s29 = ssub.s32 %s16, %s28
    %p30 = scmp.eq.s32.totalorder %s29, 0
    %s32 = sadd.s32 %s31, 1
    %s33 = scalar_select %p30, %s31, %s32
    %p36 = pneg %p30
    %p37 = scmp.eq.s32.totalorder %s9, 1
    %p38 = por %p36, %p37
    %p39 = scmp.ne.s32.totalorder %s31, %s34
    %p40 = scmp.eq.s32.totalorder %s9, 0
    %p41 = por %p39, %p40
    %p42 = scmp.ne.s32.totalorder %s31, %s34
    %p43 = scmp.eq.s32.totalorder %s14, 1
    %p44 = por %p42, %p43
    %p45 = scmp.ne.s32.totalorder %s34, %s35
    %p46 = scmp.eq.s32.totalorder %s14, 0
    %p47 = por %p45, %p46
    %p48 = scmp.ne.s32.totalorder %s34, %s35
    %p49 = scmp.eq.s32.totalorder %s15, 1
    %p50 = por %p48, %p49
    %p52 = scmp.ne.s32.totalorder %s35, %s51
    %p53 = scmp.eq.s32.totalorder %s15, 0
    %p54 = por %p52, %p53
    %s56 = sadd.s32 %s55, 1
    %p59 = scmp.eq.s32.totalorder %s9, 1
    %p60 = scmp.ne.s32.totalorder %s55, %s57
    %p61 = scmp.eq.s32.totalorder %s9, 0
    %p62 = por %p60, %p61
    %p63 = scmp.ne.s32.totalorder %s55, %s57
    %p64 = scmp.eq.s32.totalorder %s14, 1
    %p65 = por %p63, %p64
    %p66 = scmp.ne.s32.totalorder %s57, %s58
    %p67 = scmp.eq.s32.totalorder %s14, 0
    %p68 = por %p66, %p67
    %p69 = scmp.ne.s32.totalorder %s57, %s58
    %p70 = scmp.eq.s32.totalorder %s15, 1
    %p71 = por %p69, %p70
    %p73 = scmp.ne.s32.totalorder %s58, %s72
    %p74 = scmp.eq.s32.totalorder %s15, 0
    %p75 = por %p73, %p74
    %s77 = sadd.s32 %s76, 1
    %p80 = scmp.eq.s32.totalorder %s9, 1
    %p81 = scmp.ne.s32.totalorder %s76, %s78
    %p82 = scmp.eq.s32.totalorder %s9, 0
    %p83 = por %p81, %p82
    %p84 = scmp.ne.s32.totalorder %s76, %s78
    %p85 = scmp.eq.s32.totalorder %s14, 1
    %p86 = por %p84, %p85
    %p87 = scmp.ne.s32.totalorder %s78, %s79
    %p88 = scmp.eq.s32.totalorder %s14, 0
    %p89 = por %p87, %p88
    %p90 = scmp.ne.s32.totalorder %s78, %s79
    %p91 = scmp.eq.s32.totalorder %s15, 1
    %p92 = por %p90, %p91
    %p94 = scmp.ne.s32.totalorder %s79, %s93
    %p95 = scmp.eq.s32.totalorder %s15, 0
    %p96 = por %p94, %p95
    %s97 = ssub.s32 %s16, %s28
    %s98 = ssub.s32 %s17, %s24
    %s99 = sor.u32 %s97, %s98
    %p100 = scmp.eq.s32.totalorder %s99, 0
    %s102 = sadd.s32 %s101, 1
    %s103 = scalar_select %p100, %s101, %s102
    %p106 = pneg %p100
    %p107 = scmp.eq.s32.totalorder %s9, 1
    %p108 = por %p106, %p107
    %p109 = scmp.ne.s32.totalorder %s101, %s104
    %p110 = scmp.eq.s32.totalorder %s9, 0
    %p111 = por %p109, %p110
    %p112 = scmp.ne.s32.totalorder %s101, %s104
    %p113 = scmp.eq.s32.totalorder %s14, 1
    %p114 = por %p112, %p113
    %p115 = scmp.ne.s32.totalorder %s104, %s105
    %p116 = scmp.eq.s32.totalorder %s14, 0
    %p117 = por %p115, %p116
    %p118 = scmp.ne.s32.totalorder %s104, %s105
    %p119 = scmp.eq.s32.totalorder %s15, 1
    %p120 = por %p118, %p119
    %p122 = scmp.ne.s32.totalorder %s105, %s121
    %p123 = scmp.eq.s32.totalorder %s15, 0
    %p124 = por %p122, %p123
    %p125 = scmp.le.s32.totalorder 1, %s9
    %p126 = scmp.lt.s32.totalorder %s9, 3
    %p127 = pnand %p125, %p126
    %p128 = pneg %p127
    // Predicated region
    $region9: #{tpu_custom_call.1} parent=5 // pred_check
      _
    $region10: #{tpu_custom_call.1} parent=5 // pred_check_branch
      %130 = sbr.rel (%p127) target = $region12
    $region11: #{tpu_custom_call.1} parent=5 // pred_region
      %s131 = ssub.s32 %s9, 1
      // Predicated region
      $region13: #{tpu_custom_call.1} parent=11 // pred_check
        %p132 = pneg %p68
      $region14: #{tpu_custom_call.1} parent=11 // pred_check_branch
        %134 = sbr.rel (%p132) target = $region16
      $region15: #{tpu_custom_call.1} parent=11 // pred_region
        _
      $region16: #{tpu_custom_call.1} parent=11 // pred_fallthru
        _
      // Predicated region
      $region17: #{tpu_custom_call.1} parent=11 // pred_check
        %p135 = pneg %p89
      $region18: #{tpu_custom_call.1} parent=11 // pred_check_branch
        %137 = sbr.rel (%p135) target = $region20
      $region19: #{tpu_custom_call.1} parent=11 // pred_region
        _
      $region20: #{tpu_custom_call.1} parent=11 // pred_fallthru
        _
    $region12: #{tpu_custom_call.1} parent=5 // pred_fallthru
      _
    %p138 = scmp.lt.s32.totalorder %s9, 2
    // Predicated region
    $region21: #{tpu_custom_call.1} parent=5 // pred_check
      %p139 = pneg %p138
    $region22: #{tpu_custom_call.1} parent=5 // pred_check_branch
      %141 = sbr.rel (%p139) target = $region24
    $region23: #{tpu_custom_call.1} parent=5 // pred_region
      // Predicated region
      $region25: #{tpu_custom_call.1} parent=23 // pred_check
        %p142 = pneg %p41
      $region26: #{tpu_custom_call.1} parent=23 // pred_check_branch
        %144 = sbr.rel (%p142) target = $region28
      $region27: #{tpu_custom_call.1} parent=23 // pred_region
        %p145 = scmp.lt.s32.totalorder %s16, 1
        %s146 = scalar_select %p145, %s16, 1
        %s147 = smul.addr %s146, 72
        %s148 = smul.addr %s147, 4
        %s149 = scalar_lea.vmem %s0, %s148
      $region28: #{tpu_custom_call.1} parent=23 // pred_fallthru
        _
    $region24: #{tpu_custom_call.1} parent=5 // pred_fallthru
      _
    %p150 = scmp.le.s32.totalorder 1, %s9
    %p151 = scmp.lt.s32.totalorder %s9, 3
    %p152 = pnand %p150, %p151
    %p153 = pneg %p152
    // Predicated region
    $region29: #{tpu_custom_call.1} parent=5 // pred_check
      _
    $region30: #{tpu_custom_call.1} parent=5 // pred_check_branch
      %155 = sbr.rel (%p152) target = $region32
    $region31: #{tpu_custom_call.1} parent=5 // pred_region
      %s156 = ssub.s32 %s9, 1
      %p157 = scmp.lt.s32.totalorder %s18, 1
      %s158 = scalar_select %p157, %s18, 1
      %s159 = smul.addr %s158, 72
      %s160 = smul.addr %s159, 4
      %s161 = scalar_lea.vmem %s0, %s160
      %p162 = pneg %p47
      %p163 = pneg %p44
      %p164 = pneg %p68
      %p165 = pneg %p65
      %p166 = pneg %p89
      %p167 = pneg %p86
      %p168 = pneg %p117
      %p169 = pneg %p114
      %s170 = smul.u32 16, %s19
      %p171 = scmp.lt.s32.totalorder %s18, 1
      %s172 = scalar_select %p171, %s18, 1
      %p173 = scmp.lt.s32.totalorder %s170, 15
      %s174 = scalar_select %p173, %s170, 15
      %s175 = smul.addr %s174, 2
      %s176 = smul.addr %s172, 32
      %s177 = sadd.s32 %s175, %s176
      %s178 = smul.addr %s177, 8
      %s179 = scalar_lea.vmem %s3, %s178
      %p180 = scmp.lt.s32.totalorder %s18, 1
      %s181 = scalar_select %p180, %s18, 1
      %s182 = smul.addr %s181, 72
      %s183 = smul.addr %s182, 4
      %s184 = scalar_lea.vmem %s0, %s183
      %s185 = smul.u32 16, %s19
      %p186 = scmp.lt.s32.totalorder %s18, 1
      %s187 = scalar_select %p186, %s18, 1
      %p188 = scmp.lt.s32.totalorder %s185, 15
      %s189 = scalar_select %p188, %s185, 15
      %s190 = smul.addr %s189, 2
      %s191 = smul.addr %s187, 32
      %s192 = sadd.s32 %s190, %s191
      %s193 = smul.addr %s192, 8
      %s194 = scalar_lea.vmem %s3, %s193
      %s195 = smul.u32 16, %s19
      %s197 = smul.u32 %s19, 16
      %s198 = smul.u32 %s197, 4
      %s199 = smul.addr %s198, 4
      %s200 = scalar_lea.vmem %s184, %s199
      %v201 = vld [vmem:[%s200] sm:$0xf]
      %v202 = vld [vmem:[%s200 + $0x4] sm:$0xf]
      %v203 = vld [vmem:[%s200 + $0x8] sm:$0xf]
      %v204 = vld [vmem:[%s200 + $0xc] sm:$0xf]
      %v205 = vld [vmem:[%s200 + $0x10] sm:$0xf]
      %v206 = vld [vmem:[%s200 + $0x14] sm:$0xf]
      %v207 = vld [vmem:[%s200 + $0x18] sm:$0xf]
      %v208 = vld [vmem:[%s200 + $0x1c] sm:$0xf]
      %v209 = vld [vmem:[%s200 + $0x20] sm:$0xf]
      %v210 = vld [vmem:[%s200 + $0x24] sm:$0xf]
      %v211 = vld [vmem:[%s200 + $0x28] sm:$0xf]
      %v212 = vld [vmem:[%s200 + $0x2c] sm:$0xf]
      %v213 = vld [vmem:[%s200 + $0x30] sm:$0xf]
      %v214 = vld [vmem:[%s200 + $0x34] sm:$0xf]
      %v215 = vld [vmem:[%s200 + $0x38] sm:$0xf]
      %v216 = vld [vmem:[%s200 + $0x3c] sm:$0xf]
      %v217 = vld [vmem:[%s200 + $0x40] sm:$0xf]
      %v218 = vld [vmem:[%s200 + $0x44] sm:$0xf]
      %v219 = vld [vmem:[%s200 + $0x48] sm:$0xf]
      %v220 = vld [vmem:[%s200 + $0x4c] sm:$0xf]
      %v221 = vld [vmem:[%s200 + $0x50] sm:$0xf]
      %v222 = vld [vmem:[%s200 + $0x54] sm:$0xf]
      %v223 = vld [vmem:[%s200 + $0x58] sm:$0xf]
      %v224 = vld [vmem:[%s200 + $0x5c] sm:$0xf]
      %v225 = vld [vmem:[%s200 + $0x60] sm:$0xf]
      %v226 = vld [vmem:[%s200 + $0x64] sm:$0xf]
      %v227 = vld [vmem:[%s200 + $0x68] sm:$0xf]
      %v228 = vld [vmem:[%s200 + $0x6c] sm:$0xf]
      %v229 = vld [vmem:[%s200 + $0x70] sm:$0xf]
      %v230 = vld [vmem:[%s200 + $0x74] sm:$0xf]
      %v231 = vld [vmem:[%s200 + $0x78] sm:$0xf]
      %v232 = vld [vmem:[%s200 + $0x7c] sm:$0xf]
      %v233 = vld [vmem:[%s200 + $0x80] sm:$0xf]
      %v234 = vld [vmem:[%s200 + $0x84] sm:$0xf]
      %v235 = vld [vmem:[%s200 + $0x88] sm:$0xf]
      %v236 = vld [vmem:[%s200 + $0x8c] sm:$0xf]
      %v237 = vld [vmem:[%s200 + $0x90] sm:$0xf]
      %v238 = vld [vmem:[%s200 + $0x94] sm:$0xf]
      %v239 = vld [vmem:[%s200 + $0x98] sm:$0xf]
      %v240 = vld [vmem:[%s200 + $0x9c] sm:$0xf]
      %v241 = vld [vmem:[%s200 + $0xa0] sm:$0xf]
      %v242 = vld [vmem:[%s200 + $0xa4] sm:$0xf]
      %v243 = vld [vmem:[%s200 + $0xa8] sm:$0xf]
      %v244 = vld [vmem:[%s200 + $0xac] sm:$0xf]
      %v245 = vld [vmem:[%s200 + $0xb0] sm:$0xf]
      %v246 = vld [vmem:[%s200 + $0xb4] sm:$0xf]
      %v247 = vld [vmem:[%s200 + $0xb8] sm:$0xf]
      %v248 = vld [vmem:[%s200 + $0xbc] sm:$0xf]
      %v249 = vld [vmem:[%s200 + $0xc0] sm:$0xf]
      %v250 = vld [vmem:[%s200 + $0xc4] sm:$0xf]
      %v251 = vld [vmem:[%s200 + $0xc8] sm:$0xf]
      %v252 = vld [vmem:[%s200 + $0xcc] sm:$0xf]
      %v253 = vld [vmem:[%s200 + $0xd0] sm:$0xf]
      %v254 = vld [vmem:[%s200 + $0xd4] sm:$0xf]
      %v255 = vld [vmem:[%s200 + $0xd8] sm:$0xf]
      %v256 = vld [vmem:[%s200 + $0xdc] sm:$0xf]
      %v257 = vld [vmem:[%s200 + $0xe0] sm:$0xf]
      %v258 = vld [vmem:[%s200 + $0xe4] sm:$0xf]
      %v259 = vld [vmem:[%s200 + $0xe8] sm:$0xf]
      %v260 = vld [vmem:[%s200 + $0xec] sm:$0xf]
      %v261 = vld [vmem:[%s200 + $0xf0] sm:$0xf]
      %v262 = vld [vmem:[%s200 + $0xf4] sm:$0xf]
      %v263 = vld [vmem:[%s200 + $0xf8] sm:$0xf]
      %v264 = vld [vmem:[%s200 + $0xfc] sm:$0xf]
      %v265 = vld [vmem:[%s200 + $0x100] sm:$0xf]
      %v266 = vld [vmem:[%s200 + $0x104] sm:$0xf]
      %v267 = vld [vmem:[%s200 + $0x108] sm:$0xf]
      %v268 = vld [vmem:[%s200 + $0x10c] sm:$0xf]
      %v269 = vld [vmem:[%s200 + $0x110] sm:$0xf]
      %v270 = vld [vmem:[%s200 + $0x114] sm:$0xf]
      %v271 = vld [vmem:[%s200 + $0x118] sm:$0xf]
      %v272 = vld [vmem:[%s200 + $0x11c] sm:$0xf]
      %v273 = vunpack.c.l.bf16 %v201
      %v274 = vunpack.c.l.bf16 %v202
      %v275 = vunpack.c.l.bf16 %v203
      %v276 = vunpack.c.l.bf16 %v204
      %v277 = vunpack.c.l.bf16 %v205
      %v278 = vunpack.c.l.bf16 %v206
      %v279 = vunpack.c.l.bf16 %v207
      %v280 = vunpack.c.l.bf16 %v208
      %v281 = vunpack.c.l.bf16 %v209
      %v282 = vunpack.c.l.bf16 %v210
      %v283 = vunpack.c.l.bf16 %v211
      %v284 = vunpack.c.l.bf16 %v212
      %v285 = vunpack.c.l.bf16 %v213
      %v286 = vunpack.c.l.bf16 %v214
      %v287 = vunpack.c.l.bf16 %v215
      %v288 = vunpack.c.l.bf16 %v216
      %v289 = vunpack.c.l.bf16 %v217
      %v290 = vunpack.c.l.bf16 %v218
      %v291 = vunpack.c.l.bf16 %v219
      %v292 = vunpack.c.l.bf16 %v220
      %v293 = vunpack.c.l.bf16 %v221
      %v294 = vunpack.c.l.bf16 %v222
      %v295 = vunpack.c.l.bf16 %v223
      %v296 = vunpack.c.l.bf16 %v224
      %v297 = vunpack.c.l.bf16 %v225
      %v298 = vunpack.c.l.bf16 %v226
      %v299 = vunpack.c.l.bf16 %v227
      %v300 = vunpack.c.l.bf16 %v228
      %v301 = vunpack.c.l.bf16 %v229
      %v302 = vunpack.c.l.bf16 %v230
      %v303 = vunpack.c.l.bf16 %v231
      %v304 = vunpack.c.l.bf16 %v232
      %v305 = vunpack.c.l.bf16 %v233
      %v306 = vunpack.c.l.bf16 %v234
      %v307 = vunpack.c.l.bf16 %v235
      %v308 = vunpack.c.l.bf16 %v236
      %v309 = vunpack.c.l.bf16 %v237
      %v310 = vunpack.c.l.bf16 %v238
      %v311 = vunpack.c.l.bf16 %v239
      %v312 = vunpack.c.l.bf16 %v240
      %v313 = vunpack.c.l.bf16 %v241
      %v314 = vunpack.c.l.bf16 %v242
      %v315 = vunpack.c.l.bf16 %v243
      %v316 = vunpack.c.l.bf16 %v244
      %v317 = vunpack.c.l.bf16 %v245
      %v318 = vunpack.c.l.bf16 %v246
      %v319 = vunpack.c.l.bf16 %v247
      %v320 = vunpack.c.l.bf16 %v248
      %v321 = vunpack.c.l.bf16 %v249
      %v322 = vunpack.c.l.bf16 %v250
      %v323 = vunpack.c.l.bf16 %v251
      %v324 = vunpack.c.l.bf16 %v252
      %v325 = vunpack.c.l.bf16 %v253
      %v326 = vunpack.c.l.bf16 %v254
      %v327 = vunpack.c.l.bf16 %v255
      %v328 = vunpack.c.l.bf16 %v256
      %v329 = vunpack.c.l.bf16 %v257
      %v330 = vunpack.c.l.bf16 %v258
      %v331 = vunpack.c.l.bf16 %v259
      %v332 = vunpack.c.l.bf16 %v260
      %v333 = vunpack.c.l.bf16 %v261
      %v334 = vunpack.c.l.bf16 %v262
      %v335 = vunpack.c.l.bf16 %v263
      %v336 = vunpack.c.l.bf16 %v264
      %v337 = vunpack.c.l.bf16 %v265
      %v338 = vunpack.c.l.bf16 %v266
      %v339 = vunpack.c.l.bf16 %v267
      %v340 = vunpack.c.l.bf16 %v268
      %v341 = vunpack.c.l.bf16 %v269
      %v342 = vunpack.c.l.bf16 %v270
      %v343 = vunpack.c.l.bf16 %v271
      %v344 = vunpack.c.l.bf16 %v272
      %v345 = vmul.f32 %v273, %v273
      %v346 = vmul.f32 %v274, %v274
      %v347 = vmul.f32 %v275, %v275
      %v348 = vmul.f32 %v276, %v276
      %v349 = vmul.f32 %v277, %v277
      %v350 = vmul.f32 %v278, %v278
      %v351 = vmul.f32 %v279, %v279
      %v352 = vmul.f32 %v280, %v280
      %v353 = vmul.f32 %v281, %v281
      %v354 = vmul.f32 %v282, %v282
      %v355 = vmul.f32 %v283, %v283
      %v356 = vmul.f32 %v284, %v284
      %v357 = vmul.f32 %v285, %v285
      %v358 = vmul.f32 %v286, %v286
      %v359 = vmul.f32 %v287, %v287
      %v360 = vmul.f32 %v288, %v288
      %v361 = vmul.f32 %v289, %v289
      %v362 = vmul.f32 %v290, %v290
      %v363 = vmul.f32 %v291, %v291
      %v364 = vmul.f32 %v292, %v292
      %v365 = vmul.f32 %v293, %v293
      %v366 = vmul.f32 %v294, %v294
      %v367 = vmul.f32 %v295, %v295
      %v368 = vmul.f32 %v296, %v296
      %v369 = vmul.f32 %v297, %v297
      %v370 = vmul.f32 %v298, %v298
      %v371 = vmul.f32 %v299, %v299
      %v372 = vmul.f32 %v300, %v300
      %v373 = vmul.f32 %v301, %v301
      %v374 = vmul.f32 %v302, %v302
      %v375 = vmul.f32 %v303, %v303
      %v376 = vmul.f32 %v304, %v304
      %v377 = vmul.f32 %v305, %v305
      %v378 = vmul.f32 %v306, %v306
      %v379 = vmul.f32 %v307, %v307
      %v380 = vmul.f32 %v308, %v308
      %v381 = vmul.f32 %v309, %v309
      %v382 = vmul.f32 %v310, %v310
      %v383 = vmul.f32 %v311, %v311
      %v384 = vmul.f32 %v312, %v312
      %v385 = vmul.f32 %v313, %v313
      %v386 = vmul.f32 %v314, %v314
      %v387 = vmul.f32 %v315, %v315
      %v388 = vmul.f32 %v316, %v316
      %v389 = vmul.f32 %v317, %v317
      %v390 = vmul.f32 %v318, %v318
      %v391 = vmul.f32 %v319, %v319
      %v392 = vmul.f32 %v320, %v320
      %v393 = vmul.f32 %v321, %v321
      %v394 = vmul.f32 %v322, %v322
      %v395 = vmul.f32 %v323, %v323
      %v396 = vmul.f32 %v324, %v324
      %v397 = vmul.f32 %v325, %v325
      %v398 = vmul.f32 %v326, %v326
      %v399 = vmul.f32 %v327, %v327
      %v400 = vmul.f32 %v328, %v328
      %v401 = vmul.f32 %v329, %v329
      %v402 = vmul.f32 %v330, %v330
      %v403 = vmul.f32 %v331, %v331
      %v404 = vmul.f32 %v332, %v332
      %v405 = vmul.f32 %v333, %v333
      %v406 = vmul.f32 %v334, %v334
      %v407 = vmul.f32 %v335, %v335
      %v408 = vmul.f32 %v336, %v336
      %v409 = vmul.f32 %v337, %v337
      %v410 = vmul.f32 %v338, %v338
      %v411 = vmul.f32 %v339, %v339
      %v412 = vmul.f32 %v340, %v340
      %v413 = vmul.f32 %v341, %v341
      %v414 = vmul.f32 %v342, %v342
      %v415 = vmul.f32 %v343, %v343
      %v416 = vmul.f32 %v344, %v344
      %vm417 = vcmask 31744
      %v418 = vsel %vm417, %v345, 0.0
      %419 = vadd.xlane.f32.xlu0 %v418
      %v420 = vpop.xlane.xlu0 %419
      %v421 = vsel %vm417, %v346, 0.0
      %422 = vadd.xlane.f32.xlu0 %v421
      %v423 = vpop.xlane.xlu0 %422
      %v424 = vsel %vm417, %v347, 0.0
      %425 = vadd.xlane.f32.xlu0 %v424
      %v426 = vpop.xlane.xlu0 %425
      %v427 = vsel %vm417, %v348, 0.0
      %428 = vadd.xlane.f32.xlu0 %v427
      %v429 = vpop.xlane.xlu0 %428
      %v430 = vsel %vm417, %v349, 0.0
      %431 = vadd.xlane.f32.xlu0 %v430
      %v432 = vpop.xlane.xlu0 %431
      %v433 = vsel %vm417, %v350, 0.0
      %434 = vadd.xlane.f32.xlu0 %v433
      %v435 = vpop.xlane.xlu0 %434
      %v436 = vsel %vm417, %v351, 0.0
      %437 = vadd.xlane.f32.xlu0 %v436
      %v438 = vpop.xlane.xlu0 %437
      %v439 = vsel %vm417, %v352, 0.0
      %440 = vadd.xlane.f32.xlu0 %v439
      %v441 = vpop.xlane.xlu0 %440
      %v442 = vsel %vm417, %v353, 0.0
      %443 = vadd.xlane.f32.xlu0 %v442
      %v444 = vpop.xlane.xlu0 %443
      %v445 = vsel %vm417, %v354, 0.0
      %446 = vadd.xlane.f32.xlu0 %v445
      %v447 = vpop.xlane.xlu0 %446
      %v448 = vsel %vm417, %v355, 0.0
      %449 = vadd.xlane.f32.xlu0 %v448
      %v450 = vpop.xlane.xlu0 %449
      %v451 = vsel %vm417, %v356, 0.0
      %452 = vadd.xlane.f32.xlu0 %v451
      %v453 = vpop.xlane.xlu0 %452
      %v454 = vsel %vm417, %v357, 0.0
      %455 = vadd.xlane.f32.xlu0 %v454
      %v456 = vpop.xlane.xlu0 %455
      %v457 = vsel %vm417, %v358, 0.0
      %458 = vadd.xlane.f32.xlu0 %v457
      %v459 = vpop.xlane.xlu0 %458
      %v460 = vsel %vm417, %v359, 0.0
      %461 = vadd.xlane.f32.xlu0 %v460
      %v462 = vpop.xlane.xlu0 %461
      %v463 = vsel %vm417, %v360, 0.0
      %464 = vadd.xlane.f32.xlu0 %v463
      %v465 = vpop.xlane.xlu0 %464
      %v466 = vsel %vm417, %v361, 0.0
      %467 = vadd.xlane.f32.xlu0 %v466
      %v468 = vpop.xlane.xlu0 %467
      %v469 = vsel %vm417, %v362, 0.0
      %470 = vadd.xlane.f32.xlu0 %v469
      %v471 = vpop.xlane.xlu0 %470
      %v472 = vsel %vm417, %v363, 0.0
      %473 = vadd.xlane.f32.xlu0 %v472
      %v474 = vpop.xlane.xlu0 %473
      %v475 = vsel %vm417, %v364, 0.0
      %476 = vadd.xlane.f32.xlu0 %v475
      %v477 = vpop.xlane.xlu0 %476
      %v478 = vsel %vm417, %v365, 0.0
      %479 = vadd.xlane.f32.xlu0 %v478
      %v480 = vpop.xlane.xlu0 %479
      %v481 = vsel %vm417, %v366, 0.0
      %482 = vadd.xlane.f32.xlu0 %v481
      %v483 = vpop.xlane.xlu0 %482
      %v484 = vsel %vm417, %v367, 0.0
      %485 = vadd.xlane.f32.xlu0 %v484
      %v486 = vpop.xlane.xlu0 %485
      %v487 = vsel %vm417, %v368, 0.0
      %488 = vadd.xlane.f32.xlu0 %v487
      %v489 = vpop.xlane.xlu0 %488
      %v490 = vsel %vm417, %v369, 0.0
      %491 = vadd.xlane.f32.xlu0 %v490
      %v492 = vpop.xlane.xlu0 %491
      %v493 = vsel %vm417, %v370, 0.0
      %494 = vadd.xlane.f32.xlu0 %v493
      %v495 = vpop.xlane.xlu0 %494
      %v496 = vsel %vm417, %v371, 0.0
      %497 = vadd.xlane.f32.xlu0 %v496
      %v498 = vpop.xlane.xlu0 %497
      %v499 = vsel %vm417, %v372, 0.0
      %500 = vadd.xlane.f32.xlu0 %v499
      %v501 = vpop.xlane.xlu0 %500
      %v502 = vsel %vm417, %v373, 0.0
      %503 = vadd.xlane.f32.xlu0 %v502
      %v504 = vpop.xlane.xlu0 %503
      %v505 = vsel %vm417, %v374, 0.0
      %506 = vadd.xlane.f32.xlu0 %v505
      %v507 = vpop.xlane.xlu0 %506
      %v508 = vsel %vm417, %v375, 0.0
      %509 = vadd.xlane.f32.xlu0 %v508
      %v510 = vpop.xlane.xlu0 %509
      %v511 = vsel %vm417, %v376, 0.0
      %512 = vadd.xlane.f32.xlu0 %v511
      %v513 = vpop.xlane.xlu0 %512
      %v514 = vsel %vm417, %v377, 0.0
      %515 = vadd.xlane.f32.xlu0 %v514
      %v516 = vpop.xlane.xlu0 %515
      %v517 = vsel %vm417, %v378, 0.0
      %518 = vadd.xlane.f32.xlu0 %v517
      %v519 = vpop.xlane.xlu0 %518
      %v520 = vsel %vm417, %v379, 0.0
      %521 = vadd.xlane.f32.xlu0 %v520
      %v522 = vpop.xlane.xlu0 %521
      %v523 = vsel %vm417, %v380, 0.0
      %524 = vadd.xlane.f32.xlu0 %v523
      %v525 = vpop.xlane.xlu0 %524
      %v526 = vsel %vm417, %v381, 0.0
      %527 = vadd.xlane.f32.xlu0 %v526
      %v528 = vpop.xlane.xlu0 %527
      %v529 = vsel %vm417, %v382, 0.0
      %530 = vadd.xlane.f32.xlu0 %v529
      %v531 = vpop.xlane.xlu0 %530
      %v532 = vsel %vm417, %v383, 0.0
      %533 = vadd.xlane.f32.xlu0 %v532
      %v534 = vpop.xlane.xlu0 %533
      %v535 = vsel %vm417, %v384, 0.0
      %536 = vadd.xlane.f32.xlu0 %v535
      %v537 = vpop.xlane.xlu0 %536
      %v538 = vsel %vm417, %v385, 0.0
      %539 = vadd.xlane.f32.xlu0 %v538
      %v540 = vpop.xlane.xlu0 %539
      %v541 = vsel %vm417, %v386, 0.0
      %542 = vadd.xlane.f32.xlu0 %v541
      %v543 = vpop.xlane.xlu0 %542
      %v544 = vsel %vm417, %v387, 0.0
      %545 = vadd.xlane.f32.xlu0 %v544
      %v546 = vpop.xlane.xlu0 %545
      %v547 = vsel %vm417, %v388, 0.0
      %548 = vadd.xlane.f32.xlu0 %v547
      %v549 = vpop.xlane.xlu0 %548
      %v550 = vsel %vm417, %v389, 0.0
      %551 = vadd.xlane.f32.xlu0 %v550
      %v552 = vpop.xlane.xlu0 %551
      %v553 = vsel %vm417, %v390, 0.0
      %554 = vadd.xlane.f32.xlu0 %v553
      %v555 = vpop.xlane.xlu0 %554
      %v556 = vsel %vm417, %v391, 0.0
      %557 = vadd.xlane.f32.xlu0 %v556
      %v558 = vpop.xlane.xlu0 %557
      %v559 = vsel %vm417, %v392, 0.0
      %560 = vadd.xlane.f32.xlu0 %v559
      %v561 = vpop.xlane.xlu0 %560
      %v562 = vsel %vm417, %v393, 0.0
      %563 = vadd.xlane.f32.xlu0 %v562
      %v564 = vpop.xlane.xlu0 %563
      %v565 = vsel %vm417, %v394, 0.0
      %566 = vadd.xlane.f32.xlu0 %v565
      %v567 = vpop.xlane.xlu0 %566
      %v568 = vsel %vm417, %v395, 0.0
      %569 = vadd.xlane.f32.xlu0 %v568
      %v570 = vpop.xlane.xlu0 %569
      %v571 = vsel %vm417, %v396, 0.0
      %572 = vadd.xlane.f32.xlu0 %v571
      %v573 = vpop.xlane.xlu0 %572
      %v574 = vsel %vm417, %v397, 0.0
      %575 = vadd.xlane.f32.xlu0 %v574
      %v576 = vpop.xlane.xlu0 %575
      %v577 = vsel %vm417, %v398, 0.0
      %578 = vadd.xlane.f32.xlu0 %v577
      %v579 = vpop.xlane.xlu0 %578
      %v580 = vsel %vm417, %v399, 0.0
      %581 = vadd.xlane.f32.xlu0 %v580
      %v582 = vpop.xlane.xlu0 %581
      %v583 = vsel %vm417, %v400, 0.0
      %584 = vadd.xlane.f32.xlu0 %v583
      %v585 = vpop.xlane.xlu0 %584
      %v586 = vsel %vm417, %v401, 0.0
      %587 = vadd.xlane.f32.xlu0 %v586
      %v588 = vpop.xlane.xlu0 %587
      %v589 = vsel %vm417, %v402, 0.0
      %590 = vadd.xlane.f32.xlu0 %v589
      %v591 = vpop.xlane.xlu0 %590
      %v592 = vsel %vm417, %v403, 0.0
      %593 = vadd.xlane.f32.xlu0 %v592
      %v594 = vpop.xlane.xlu0 %593
      %v595 = vsel %vm417, %v404, 0.0
      %596 = vadd.xlane.f32.xlu0 %v595
      %v597 = vpop.xlane.xlu0 %596
      %v598 = vsel %vm417, %v405, 0.0
      %599 = vadd.xlane.f32.xlu0 %v598
      %v600 = vpop.xlane.xlu0 %599
      %v601 = vsel %vm417, %v406, 0.0
      %602 = vadd.xlane.f32.xlu0 %v601
      %v603 = vpop.xlane.xlu0 %602
      %v604 = vsel %vm417, %v407, 0.0
      %605 = vadd.xlane.f32.xlu0 %v604
      %v606 = vpop.xlane.xlu0 %605
      %v607 = vsel %vm417, %v408, 0.0
      %608 = vadd.xlane.f32.xlu0 %v607
      %v609 = vpop.xlane.xlu0 %608
      %v610 = vsel %vm417, %v409, 0.0
      %611 = vadd.xlane.f32.xlu0 %v610
      %v612 = vpop.xlane.xlu0 %611
      %v613 = vsel %vm417, %v410, 0.0
      %614 = vadd.xlane.f32.xlu0 %v613
      %v615 = vpop.xlane.xlu0 %614
      %v616 = vsel %vm417, %v411, 0.0
      %617 = vadd.xlane.f32.xlu0 %v616
      %v618 = vpop.xlane.xlu0 %617
      %v619 = vsel %vm417, %v412, 0.0
      %620 = vadd.xlane.f32.xlu0 %v619
      %v621 = vpop.xlane.xlu0 %620
      %v622 = vsel %vm417, %v413, 0.0
      %623 = vadd.xlane.f32.xlu0 %v622
      %v624 = vpop.xlane.xlu0 %623
      %v625 = vsel %vm417, %v414, 0.0
      %626 = vadd.xlane.f32.xlu0 %v625
      %v627 = vpop.xlane.xlu0 %626
      %v628 = vsel %vm417, %v415, 0.0
      %629 = vadd.xlane.f32.xlu0 %v628
      %v630 = vpop.xlane.xlu0 %629
      %v631 = vsel %vm417, %v416, 0.0
      %632 = vadd.xlane.f32.xlu0 %v631
      %v633 = vpop.xlane.xlu0 %632
      %v634 = vrcp.pop 4.0
      %v635 = vmul.f32 %v420, %v634
      %v636 = vmul.f32 %v423, %v634
      %v637 = vmul.f32 %v426, %v634
      %v638 = vmul.f32 %v429, %v634
      %v639 = vmul.f32 %v432, %v634
      %v640 = vmul.f32 %v435, %v634
      %v641 = vmul.f32 %v438, %v634
      %v642 = vmul.f32 %v441, %v634
      %v643 = vmul.f32 %v444, %v634
      %v644 = vmul.f32 %v447, %v634
      %v645 = vmul.f32 %v450, %v634
      %v646 = vmul.f32 %v453, %v634
      %v647 = vmul.f32 %v456, %v634
      %v648 = vmul.f32 %v459, %v634
      %v649 = vmul.f32 %v462, %v634
      %v650 = vmul.f32 %v465, %v634
      %v651 = vmul.f32 %v468, %v634
      %v652 = vmul.f32 %v471, %v634
      %v653 = vmul.f32 %v474, %v634
      %v654 = vmul.f32 %v477, %v634
      %v655 = vmul.f32 %v480, %v634
      %v656 = vmul.f32 %v483, %v634
      %v657 = vmul.f32 %v486, %v634
      %v658 = vmul.f32 %v489, %v634
      %v659 = vmul.f32 %v492, %v634
      %v660 = vmul.f32 %v495, %v634
      %v661 = vmul.f32 %v498, %v634
      %v662 = vmul.f32 %v501, %v634
      %v663 = vmul.f32 %v504, %v634
      %v664 = vmul.f32 %v507, %v634
      %v665 = vmul.f32 %v510, %v634
      %v666 = vmul.f32 %v513, %v634
      %v667 = vmul.f32 %v516, %v634
      %v668 = vmul.f32 %v519, %v634
      %v669 = vmul.f32 %v522, %v634
      %v670 = vmul.f32 %v525, %v634
      %v671 = vmul.f32 %v528, %v634
      %v672 = vmul.f32 %v531, %v634
      %v673 = vmul.f32 %v534, %v634
      %v674 = vmul.f32 %v537, %v634
      %v675 = vmul.f32 %v540, %v634
      %v676 = vmul.f32 %v543, %v634
      %v677 = vmul.f32 %v546, %v634
      %v678 = vmul.f32 %v549, %v634
      %v679 = vmul.f32 %v552, %v634
      %v680 = vmul.f32 %v555, %v634
      %v681 = vmul.f32 %v558, %v634
      %v682 = vmul.f32 %v561, %v634
      %v683 = vmul.f32 %v564, %v634
      %v684 = vmul.f32 %v567, %v634
      %v685 = vmul.f32 %v570, %v634
      %v686 = vmul.f32 %v573, %v634
      %v687 = vmul.f32 %v576, %v634
      %v688 = vmul.f32 %v579, %v634
      %v689 = vmul.f32 %v582, %v634
      %v690 = vmul.f32 %v585, %v634
      %v691 = vmul.f32 %v588, %v634
      %v692 = vmul.f32 %v591, %v634
      %v693 = vmul.f32 %v594, %v634
      %v694 = vmul.f32 %v597, %v634
      %v695 = vmul.f32 %v600, %v634
      %v696 = vmul.f32 %v603, %v634
      %v697 = vmul.f32 %v606, %v634
      %v698 = vmul.f32 %v609, %v634
      %v699 = vmul.f32 %v612, %v634
      %v700 = vmul.f32 %v615, %v634
      %v701 = vmul.f32 %v618, %v634
      %v702 = vmul.f32 %v621, %v634
      %v703 = vmul.f32 %v624, %v634
      %v704 = vmul.f32 %v627, %v634
      %v705 = vmul.f32 %v630, %v634
      %v706 = vmul.f32 %v633, %v634
      %v707 = vadd.f32 %v635, 1e-08
      %v708 = vadd.f32 %v636, 1e-08
      %v709 = vadd.f32 %v637, 1e-08
      %v710 = vadd.f32 %v638, 1e-08
      %v711 = vadd.f32 %v639, 1e-08
      %v712 = vadd.f32 %v640, 1e-08
      %v713 = vadd.f32 %v641, 1e-08
      %v714 = vadd.f32 %v642, 1e-08
      %v715 = vadd.f32 %v643, 1e-08
      %v716 = vadd.f32 %v644, 1e-08
      %v717 = vadd.f32 %v645, 1e-08
      %v718 = vadd.f32 %v646, 1e-08
      %v719 = vadd.f32 %v647, 1e-08
      %v720 = vadd.f32 %v648, 1e-08
      %v721 = vadd.f32 %v649, 1e-08
      %v722 = vadd.f32 %v650, 1e-08
      %v723 = vadd.f32 %v651, 1e-08
      %v724 = vadd.f32 %v652, 1e-08
      %v725 = vadd.f32 %v653, 1e-08
      %v726 = vadd.f32 %v654, 1e-08
      %v727 = vadd.f32 %v655, 1e-08
      %v728 = vadd.f32 %v656, 1e-08
      %v729 = vadd.f32 %v657, 1e-08
      %v730 = vadd.f32 %v658, 1e-08
      %v731 = vadd.f32 %v659, 1e-08
      %v732 = vadd.f32 %v660, 1e-08
      %v733 = vadd.f32 %v661, 1e-08
      %v734 = vadd.f32 %v662, 1e-08
      %v735 = vadd.f32 %v663, 1e-08
      %v736 = vadd.f32 %v664, 1e-08
      %v737 = vadd.f32 %v665, 1e-08
      %v738 = vadd.f32 %v666, 1e-08
      %v739 = vadd.f32 %v667, 1e-08
      %v740 = vadd.f32 %v668, 1e-08
      %v741 = vadd.f32 %v669, 1e-08
      %v742 = vadd.f32 %v670, 1e-08
      %v743 = vadd.f32 %v671, 1e-08
      %v744 = vadd.f32 %v672, 1e-08
      %v745 = vadd.f32 %v673, 1e-08
      %v746 = vadd.f32 %v674, 1e-08
      %v747 = vadd.f32 %v675, 1e-08
      %v748 = vadd.f32 %v676, 1e-08
      %v749 = vadd.f32 %v677, 1e-08
      %v750 = vadd.f32 %v678, 1e-08
      %v751 = vadd.f32 %v679, 1e-08
      %v752 = vadd.f32 %v680, 1e-08
      %v753 = vadd.f32 %v681, 1e-08
      %v754 = vadd.f32 %v682, 1e-08
      %v755 = vadd.f32 %v683, 1e-08
      %v756 = vadd.f32 %v684, 1e-08
      %v757 = vadd.f32 %v685, 1e-08
      %v758 = vadd.f32 %v686, 1e-08
      %v759 = vadd.f32 %v687, 1e-08
      %v760 = vadd.f32 %v688, 1e-08
      %v761 = vadd.f32 %v689, 1e-08
      %v762 = vadd.f32 %v690, 1e-08
      %v763 = vadd.f32 %v691, 1e-08
      %v764 = vadd.f32 %v692, 1e-08
      %v765 = vadd.f32 %v693, 1e-08
      %v766 = vadd.f32 %v694, 1e-08
      %v767 = vadd.f32 %v695, 1e-08
      %v768 = vadd.f32 %v696, 1e-08
      %v769 = vadd.f32 %v697, 1e-08
      %v770 = vadd.f32 %v698, 1e-08
      %v771 = vadd.f32 %v699, 1e-08
      %v772 = vadd.f32 %v700, 1e-08
      %v773 = vadd.f32 %v701, 1e-08
      %v774 = vadd.f32 %v702, 1e-08
      %v775 = vadd.f32 %v703, 1e-08
      %v776 = vadd.f32 %v704, 1e-08
      %v777 = vadd.f32 %v705, 1e-08
      %v778 = vadd.f32 %v706, 1e-08
      %v779 = vrsqrt.pop %v707
      %v780 = vrsqrt.pop %v708
      %v781 = vrsqrt.pop %v709
      %v782 = vrsqrt.pop %v710
      %v783 = vrsqrt.pop %v711
      %v784 = vrsqrt.pop %v712
      %v785 = vrsqrt.pop %v713
      %v786 = vrsqrt.pop %v714
      %v787 = vrsqrt.pop %v715
      %v788 = vrsqrt.pop %v716
      %v789 = vrsqrt.pop %v717
      %v790 = vrsqrt.pop %v718
      %v791 = vrsqrt.pop %v719
      %v792 = vrsqrt.pop %v720
      %v793 = vrsqrt.pop %v721
      %v794 = vrsqrt.pop %v722
      %v795 = vrsqrt.pop %v723
      %v796 = vrsqrt.pop %v724
      %v797 = vrsqrt.pop %v725
      %v798 = vrsqrt.pop %v726
      %v799 = vrsqrt.pop %v727
      %v800 = vrsqrt.pop %v728
      %v801 = vrsqrt.pop %v729
      %v802 = vrsqrt.pop %v730
      %v803 = vrsqrt.pop %v731
      %v804 = vrsqrt.pop %v732
      %v805 = vrsqrt.pop %v733
      %v806 = vrsqrt.pop %v734
      %v807 = vrsqrt.pop %v735
      %v808 = vrsqrt.pop %v736
      %v809 = vrsqrt.pop %v737
      %v810 = vrsqrt.pop %v738
      %v811 = vrsqrt.pop %v739
      %v812 = vrsqrt.pop %v740
      %v813 = vrsqrt.pop %v741
      %v814 = vrsqrt.pop %v742
      %v815 = vrsqrt.pop %v743
      %v816 = vrsqrt.pop %v744
      %v817 = vrsqrt.pop %v745
      %v818 = vrsqrt.pop %v746
      %v819 = vrsqrt.pop %v747
      %v820 = vrsqrt.pop %v748
      %v821 = vrsqrt.pop %v749
      %v822 = vrsqrt.pop %v750
      %v823 = vrsqrt.pop %v751
      %v824 = vrsqrt.pop %v752
      %v825 = vrsqrt.pop %v753
      %v826 = vrsqrt.pop %v754
      %v827 = vrsqrt.pop %v755
      %v828 = vrsqrt.pop %v756
      %v829 = vrsqrt.pop %v757
      %v830 = vrsqrt.pop %v758
      %v831 = vrsqrt.pop %v759
      %v832 = vrsqrt.pop %v760
      %v833 = vrsqrt.pop %v761
      %v834 = vrsqrt.pop %v762
      %v835 = vrsqrt.pop %v763
      %v836 = vrsqrt.pop %v764
      %v837 = vrsqrt.pop %v765
      %v838 = vrsqrt.pop %v766
      %v839 = vrsqrt.pop %v767
      %v840 = vrsqrt.pop %v768
      %v841 = vrsqrt.pop %v769
      %v842 = vrsqrt.pop %v770
      %v843 = vrsqrt.pop %v771
      %v844 = vrsqrt.pop %v772
      %v845 = vrsqrt.pop %v773
      %v846 = vrsqrt.pop %v774
      %v847 = vrsqrt.pop %v775
      %v848 = vrsqrt.pop %v776
      %v849 = vrsqrt.pop %v777
      %v850 = vrsqrt.pop %v778
      %v851 = vmul.f32 %v273, %v779
      %v852 = vmul.f32 %v274, %v780
      %v853 = vmul.f32 %v275, %v781
      %v854 = vmul.f32 %v276, %v782
      %v855 = vmul.f32 %v277, %v783
      %v856 = vmul.f32 %v278, %v784
      %v857 = vmul.f32 %v279, %v785
      %v858 = vmul.f32 %v280, %v786
      %v859 = vmul.f32 %v281, %v787
      %v860 = vmul.f32 %v282, %v788
      %v861 = vmul.f32 %v283, %v789
      %v862 = vmul.f32 %v284, %v790
      %v863 = vmul.f32 %v285, %v791
      %v864 = vmul.f32 %v286, %v792
      %v865 = vmul.f32 %v287, %v793
      %v866 = vmul.f32 %v288, %v794
      %v867 = vmul.f32 %v289, %v795
      %v868 = vmul.f32 %v290, %v796
      %v869 = vmul.f32 %v291, %v797
      %v870 = vmul.f32 %v292, %v798
      %v871 = vmul.f32 %v293, %v799
      %v872 = vmul.f32 %v294, %v800
      %v873 = vmul.f32 %v295, %v801
      %v874 = vmul.f32 %v296, %v802
      %v875 = vmul.f32 %v297, %v803
      %v876 = vmul.f32 %v298, %v804
      %v877 = vmul.f32 %v299, %v805
      %v878 = vmul.f32 %v300, %v806
      %v879 = vmul.f32 %v301, %v807
      %v880 = vmul.f32 %v302, %v808
      %v881 = vmul.f32 %v303, %v809
      %v882 = vmul.f32 %v304, %v810
      %v883 = vmul.f32 %v305, %v811
      %v884 = vmul.f32 %v306, %v812
      %v885 = vmul.f32 %v307, %v813
      %v886 = vmul.f32 %v308, %v814
      %v887 = vmul.f32 %v309, %v815
      %v888 = vmul.f32 %v310, %v816
      %v889 = vmul.f32 %v311, %v817
      %v890 = vmul.f32 %v312, %v818
      %v891 = vmul.f32 %v313, %v819
      %v892 = vmul.f32 %v314, %v820
      %v893 = vmul.f32 %v315, %v821
      %v894 = vmul.f32 %v316, %v822
      %v895 = vmul.f32 %v317, %v823
      %v896 = vmul.f32 %v318, %v824
      %v897 = vmul.f32 %v319, %v825
      %v898 = vmul.f32 %v320, %v826
      %v899 = vmul.f32 %v321, %v827
      %v900 = vmul.f32 %v322, %v828
      %v901 = vmul.f32 %v323, %v829
      %v902 = vmul.f32 %v324, %v830
      %v903 = vmul.f32 %v325, %v831
      %v904 = vmul.f32 %v326, %v832
      %v905 = vmul.f32 %v327, %v833
      %v906 = vmul.f32 %v328, %v834
      %v907 = vmul.f32 %v329, %v835
      %v908 = vmul.f32 %v330, %v836
      %v909 = vmul.f32 %v331, %v837
      %v910 = vmul.f32 %v332, %v838
      %v911 = vmul.f32 %v333, %v839
      %v912 = vmul.f32 %v334, %v840
      %v913 = vmul.f32 %v335, %v841
      %v914 = vmul.f32 %v336, %v842
      %v915 = vmul.f32 %v337, %v843
      %v916 = vmul.f32 %v338, %v844
      %v917 = vmul.f32 %v339, %v845
      %v918 = vmul.f32 %v340, %v846
      %v919 = vmul.f32 %v341, %v847
      %v920 = vmul.f32 %v342, %v848
      %v921 = vmul.f32 %v343, %v849
      %v922 = vmul.f32 %v344, %v850
      %v923 = vpack.c.bf16 %v852, %v851
      %v924 = vpack.c.bf16 %v854, %v853
      %v925 = vpack.c.bf16 %v856, %v855
      %v926 = vpack.c.bf16 %v858, %v857
      %v927 = vpack.c.bf16 %v860, %v859
      %v928 = vpack.c.bf16 %v862, %v861
      %v929 = vpack.c.bf16 %v864, %v863
      %v930 = vpack.c.bf16 %v866, %v865
      %v931 = vpack.c.bf16 %v868, %v867
      %v932 = vpack.c.bf16 %v870, %v869
      %v933 = vpack.c.bf16 %v872, %v871
      %v934 = vpack.c.bf16 %v874, %v873
      %v935 = vpack.c.bf16 %v876, %v875
      %v936 = vpack.c.bf16 %v878, %v877
      %v937 = vpack.c.bf16 %v880, %v879
      %v938 = vpack.c.bf16 %v882, %v881
      %v939 = vpack.c.bf16 %v884, %v883
      %v940 = vpack.c.bf16 %v886, %v885
      %v941 = vpack.c.bf16 %v888, %v887
      %v942 = vpack.c.bf16 %v890, %v889
      %v943 = vpack.c.bf16 %v892, %v891
      %v944 = vpack.c.bf16 %v894, %v893
      %v945 = vpack.c.bf16 %v896, %v895
      %v946 = vpack.c.bf16 %v898, %v897
      %v947 = vpack.c.bf16 %v900, %v899
      %v948 = vpack.c.bf16 %v902, %v901
      %v949 = vpack.c.bf16 %v904, %v903
      %v950 = vpack.c.bf16 %v906, %v905
      %v951 = vpack.c.bf16 %v908, %v907
      %v952 = vpack.c.bf16 %v910, %v909
      %v953 = vpack.c.bf16 %v912, %v911
      %v954 = vpack.c.bf16 %v914, %v913
      %v955 = vpack.c.bf16 %v916, %v915
      %v956 = vpack.c.bf16 %v918, %v917
      %v957 = vpack.c.bf16 %v920, %v919
      %v958 = vpack.c.bf16 %v922, %v921
      %v959 = vld [vmem:[%s1] sm:$0x3]
      %vm960 = vsmask.f32 7424
      %v962 = vshrl.u32 %v923, 16
      %v964 = vshll.u32 %v923, 16
      %v966 = vrot.slane %v964, 1
      %v967 = vor.u32 %v962, %v966
      %v969 = vshll.u32 %v924, 16
      %v971 = vrot.slane %v969, 1
      %v972 = vsel %vm960, %v967, %v971
      %v974 = vshrl.u32 %v925, 16
      %v976 = vshll.u32 %v925, 16
      %v978 = vrot.slane %v976, 1
      %v979 = vor.u32 %v974, %v978
      %v981 = vshll.u32 %v926, 16
      %v983 = vrot.slane %v981, 1
      %v984 = vsel %vm960, %v979, %v983
      %v986 = vshrl.u32 %v927, 16
      %v988 = vshll.u32 %v927, 16
      %v990 = vrot.slane %v988, 1
      %v991 = vor.u32 %v986, %v990
      %v993 = vshll.u32 %v928, 16
      %v995 = vrot.slane %v993, 1
      %v996 = vsel %vm960, %v991, %v995
      %v998 = vshrl.u32 %v929, 16
      %v1000 = vshll.u32 %v929, 16
      %v1002 = vrot.slane %v1000, 1
      %v1003 = vor.u32 %v998, %v1002
      %v1005 = vshll.u32 %v930, 16
      %v1007 = vrot.slane %v1005, 1
      %v1008 = vsel %vm960, %v1003, %v1007
      %v1010 = vshrl.u32 %v931, 16
      %v1012 = vshll.u32 %v931, 16
      %v1014 = vrot.slane %v1012, 1
      %v1015 = vor.u32 %v1010, %v1014
      %v1017 = vshll.u32 %v932, 16
      %v1019 = vrot.slane %v1017, 1
      %v1020 = vsel %vm960, %v1015, %v1019
      %v1022 = vshrl.u32 %v933, 16
      %v1024 = vshll.u32 %v933, 16
      %v1026 = vrot.slane %v1024, 1
      %v1027 = vor.u32 %v1022, %v1026
      %v1029 = vshll.u32 %v934, 16
      %v1031 = vrot.slane %v1029, 1
      %v1032 = vsel %vm960, %v1027, %v1031
      %v1034 = vshrl.u32 %v935, 16
      %v1036 = vshll.u32 %v935, 16
      %v1038 = vrot.slane %v1036, 1
      %v1039 = vor.u32 %v1034, %v1038
      %v1041 = vshll.u32 %v936, 16
      %v1043 = vrot.slane %v1041, 1
      %v1044 = vsel %vm960, %v1039, %v1043
      %v1046 = vshrl.u32 %v937, 16
      %v1048 = vshll.u32 %v937, 16
      %v1050 = vrot.slane %v1048, 1
      %v1051 = vor.u32 %v1046, %v1050
      %v1053 = vshll.u32 %v938, 16
      %v1055 = vrot.slane %v1053, 1
      %v1056 = vsel %vm960, %v1051, %v1055
      %v1058 = vshrl.u32 %v939, 16
      %v1060 = vshll.u32 %v939, 16
      %v1062 = vrot.slane %v1060, 1
      %v1063 = vor.u32 %v1058, %v1062
      %v1065 = vshll.u32 %v940, 16
      %v1067 = vrot.slane %v1065, 1
      %v1068 = vsel %vm960, %v1063, %v1067
      %v1070 = vshrl.u32 %v941, 16
      %v1072 = vshll.u32 %v941, 16
      %v1074 = vrot.slane %v1072, 1
      %v1075 = vor.u32 %v1070, %v1074
      %v1077 = vshll.u32 %v942, 16
      %v1079 = vrot.slane %v1077, 1
      %v1080 = vsel %vm960, %v1075, %v1079
      %v1082 = vshrl.u32 %v943, 16
      %v1084 = vshll.u32 %v943, 16
      %v1086 = vrot.slane %v1084, 1
      %v1087 = vor.u32 %v1082, %v1086
      %v1089 = vshll.u32 %v944, 16
      %v1091 = vrot.slane %v1089, 1
      %v1092 = vsel %vm960, %v1087, %v1091
      %v1094 = vshrl.u32 %v945, 16
      %v1096 = vshll.u32 %v945, 16
      %v1098 = vrot.slane %v1096, 1
      %v1099 = vor.u32 %v1094, %v1098
      %v1101 = vshll.u32 %v946, 16
      %v1103 = vrot.slane %v1101, 1
      %v1104 = vsel %vm960, %v1099, %v1103
      %v1106 = vshrl.u32 %v947, 16
      %v1108 = vshll.u32 %v947, 16
      %v1110 = vrot.slane %v1108, 1
      %v1111 = vor.u32 %v1106, %v1110
      %v1113 = vshll.u32 %v948, 16
      %v1115 = vrot.slane %v1113, 1
      %v1116 = vsel %vm960, %v1111, %v1115
      %v1118 = vshrl.u32 %v949, 16
      %v1120 = vshll.u32 %v949, 16
      %v1122 = vrot.slane %v1120, 1
      %v1123 = vor.u32 %v1118, %v1122
      %v1125 = vshll.u32 %v950, 16
      %v1127 = vrot.slane %v1125, 1
      %v1128 = vsel %vm960, %v1123, %v1127
      %v1130 = vshrl.u32 %v951, 16
      %v1132 = vshll.u32 %v951, 16
      %v1134 = vrot.slane %v1132, 1
      %v1135 = vor.u32 %v1130, %v1134
      %v1137 = vshll.u32 %v952, 16
      %v1139 = vrot.slane %v1137, 1
      %v1140 = vsel %vm960, %v1135, %v1139
      %v1142 = vshrl.u32 %v953, 16
      %v1144 = vshll.u32 %v953, 16
      %v1146 = vrot.slane %v1144, 1
      %v1147 = vor.u32 %v1142, %v1146
      %v1149 = vshll.u32 %v954, 16
      %v1151 = vrot.slane %v1149, 1
      %v1152 = vsel %vm960, %v1147, %v1151
      %s1153 = scalar_lea.vmem %s1, 2
      %v1154 = vld [vmem:[%s1153] sm:$0x3]
      %v1156 = vsel %vm417, %v972, 0
      %v1159 = vsel %vm417, %v984, 0
      %v1162 = vsel %vm417, %v996, 0
      %v1165 = vsel %vm417, %v1008, 0
      %v1168 = vsel %vm417, %v1020, 0
      %v1171 = vsel %vm417, %v1032, 0
      %v1174 = vsel %vm417, %v1044, 0
      %v1177 = vsel %vm417, %v1056, 0
      %v1180 = vsel %vm417, %v1068, 0
      %v1183 = vsel %vm417, %v1080, 0
      %v1186 = vsel %vm417, %v1092, 0
      %v1189 = vsel %vm417, %v1104, 0
      %v1192 = vsel %vm417, %v1116, 0
      %v1195 = vsel %vm417, %v1128, 0
      %v1198 = vsel %vm417, %v1140, 0
      %v1201 = vsel %vm417, %v1152, 0
      %vm1203 = vcmask 1041408
      %v1205 = vsel %vm1203, %v1154, 0
      %1207 = vmatprep.subr.bf16.mxu0 0
      %1208 = vmatpush1.bf16.msra.mxu0 %v1205
      %1209 = vmatprep.subr.bf16.mxu0 0
      %1210 = vmatpush1.bf16.msra.mxu0 0
      %1211 = vmatprep.subr.bf16.mxu0 0
      %1212 = vmatpush1.bf16.msra.mxu0 0
      %1213 = vmatprep.subr.bf16.mxu0 0
      %1214 = vmatpush1.bf16.msra.mxu0 0
      %1215 = vmatprep.subr.bf16.mxu0 0
      %1216 = vmatpush1.bf16.msra.mxu0 0
      %1217 = vmatprep.subr.bf16.mxu0 0
      %1218 = vmatpush1.bf16.msra.mxu0 0
      %1219 = vmatprep.subr.bf16.mxu0 0
      %1220 = vmatpush1.bf16.msra.mxu0 0
      %1221 = vmatprep.subr.bf16.mxu0 0
      %1222 = vmatpush1.bf16.msra.mxu0 0
      %1223 = vmatprep.subr.bf16.mxu0 0
      %1224 = vmatpush1.bf16.msra.mxu0 0
      %1225 = vmatprep.subr.bf16.mxu0 0
      %1226 = vmatpush1.bf16.msra.mxu0 0
      %1227 = vmatprep.subr.bf16.mxu0 0
      %1228 = vmatpush1.bf16.msra.mxu0 0
      %1229 = vmatprep.subr.bf16.mxu0 0
      %1230 = vmatpush1.bf16.msra.mxu0 0
      %1231 = vmatprep.subr.bf16.mxu0 0
      %1232 = vmatpush1.bf16.msra.mxu0 0
      %1233 = vmatprep.subr.bf16.mxu0 0
      %1234 = vmatpush1.bf16.msra.mxu0 0
      %1235 = vmatprep.subr.bf16.mxu0 0
      %1236 = vmatpush1.bf16.msra.mxu0 0
      %1237 = vmatprep.subr.bf16.mxu0 0
      %1238 = vmatpush1.bf16.msra.mxu0 0
      %1239 = vmatprep.mubr.bf16.mxu0 0
      %1240 = vmatmul.mubr.bf16.gmra.mrb[0].mxu0 %v1156
      %v1241 = vpop.f32.mrb[0].mxu0
      %v1242 = vadd.f32 0.0, %v1241
      %v1243 = vpop.f32.mrb[0].mxu0
      %v1244 = vpop.f32.mrb[0].mxu0
      %v1245 = vadd.f32 0.0, %v1244
      %v1246 = vpop.f32.mrb[0].mxu0
      %1247 = vmatprep.mubr.bf16.mxu0 0
      %1248 = vmatmul.mubr.bf16.gmra.mrb[0].mxu0 %v1159
      %v1249 = vpop.f32.mrb[0].mxu0
      %v1250 = vadd.f32 0.0, %v1249
      %v1251 = vpop.f32.mrb[0].mxu0
      %v1252 = vpop.f32.mrb[0].mxu0
      %v1253 = vadd.f32 0.0, %v1252
      %v1254 = vpop.f32.mrb[0].mxu0
      %1255 = vmatprep.mubr.bf16.mxu0 0
      %1256 = vmatmul.mubr.bf16.gmra.mrb[0].mxu0 %v1162
      %v1257 = vpop.f32.mrb[0].mxu0
      %v1258 = vadd.f32 0.0, %v1257
      %v1259 = vpop.f32.mrb[0].mxu0
      %v1260 = vpop.f32.mrb[0].mxu0
      %v1261 = vadd.f32 0.0, %v1260
      %v1262 = vpop.f32.mrb[0].mxu0
      %1263 = vmatprep.mubr.bf16.mxu0 0
      %1264 = vmatmul.mubr.bf16.gmra.mrb[0].mxu0 %v1165
      %v1265 = vpop.f32.mrb[0].mxu0
      %v1266 = vadd.f32 0.0, %v1265
      %v1267 = vpop.f32.mrb[0].mxu0
      %v1268 = vpop.f32.mrb[0].mxu0
      %v1269 = vadd.f32 0.0, %v1268
      %v1270 = vpop.f32.mrb[0].mxu0
      %1271 = vmatprep.mubr.bf16.mxu0 0
      %1272 = vmatmul.mubr.bf16.gmra.mrb[0].mxu0 %v1168
      %v1273 = vpop.f32.mrb[0].mxu0
      %v1274 = vadd.f32 0.0, %v1273
      %v1275 = vpop.f32.mrb[0].mxu0
      %v1276 = vpop.f32.mrb[0].mxu0
      %v1277 = vadd.f32 0.0, %v1276
      %v1278 = vpop.f32.mrb[0].mxu0
      %1279 = vmatprep.mubr.bf16.mxu0 0
      %1280 = vmatmul.mubr.bf16.gmra.mrb[0].mxu0 %v1171
      %v1281 = vpop.f32.mrb[0].mxu0
      %v1282 = vadd.f32 0.0, %v1281
      %v1283 = vpop.f32.mrb[0].mxu0
      %v1284 = vpop.f32.mrb[0].mxu0
      %v1285 = vadd.f32 0.0, %v1284
      %v1286 = vpop.f32.mrb[0].mxu0
      %1287 = vmatprep.mubr.bf16.mxu0 0
      %1288 = vmatmul.mubr.bf16.gmra.mrb[0].mxu0 %v1174
      %v1289 = vpop.f32.mrb[0].mxu0
      %v1290 = vadd.f32 0.0, %v1289
      %v1291 = vpop.f32.mrb[0].mxu0
      %v1292 = vpop.f32.mrb[0].mxu0
      %v1293 = vadd.f32 0.0, %v1292
      %v1294 = vpop.f32.mrb[0].mxu0
      %1295 = vmatprep.mubr.bf16.mxu0 0
      %1296 = vmatmul.mubr.bf16.gmra.mrb[0].mxu0 %v1177
      %v1297 = vpop.f32.mrb[0].mxu0
      %v1298 = vadd.f32 0.0, %v1297
      %v1299 = vpop.f32.mrb[0].mxu0
      %v1300 = vpop.f32.mrb[0].mxu0
      %v1301 = vadd.f32 0.0, %v1300
      %v1302 = vpop.f32.mrb[0].mxu0
      %1303 = vmatprep.mubr.bf16.mxu0 0
      %1304 = vmatmul.mubr.bf16.gmra.mrb[0].mxu0 %v1180
      %v1305 = vpop.f32.mrb[0].mxu0
      %v1306 = vadd.f32 0.0, %v1305
      %v1307 = vpop.f32.mrb[0].mxu0
      %v1308 = vpop.f32.mrb[0].mxu0
      %v1309 = vadd.f32 0.0, %v1308
      %v1310 = vpop.f32.mrb[0].mxu0
      %1311 = vmatprep.mubr.bf16.mxu0 0
      %1312 = vmatmul.mubr.bf16.gmra.mrb[0].mxu0 %v1183
      %v1313 = vpop.f32.mrb[0].mxu0
      %v1314 = vadd.f32 0.0, %v1313
      %v1315 = vpop.f32.mrb[0].mxu0
      %v1316 = vpop.f32.mrb[0].mxu0
      %v1317 = vadd.f32 0.0, %v1316
      %v1318 = vpop.f32.mrb[0].mxu0
      %1319 = vmatprep.mubr.bf16.mxu0 0
      %1320 = vmatmul.mubr.bf16.gmra.mrb[0].mxu0 %v1186
      %v1321 = vpop.f32.mrb[0].mxu0
      %v1322 = vadd.f32 0.0, %v1321
      %v1323 = vpop.f32.mrb[0].mxu0
      %v1324 = vpop.f32.mrb[0].mxu0
      %v1325 = vadd.f32 0.0, %v1324
      %v1326 = vpop.f32.mrb[0].mxu0
      %1327 = vmatprep.mubr.bf16.mxu0 0
      %1328 = vmatmul.mubr.bf16.gmra.mrb[0].mxu0 %v1189
      %v1329 = vpop.f32.mrb[0].mxu0
      %v1330 = vadd.f32 0.0, %v1329
      %v1331 = vpop.f32.mrb[0].mxu0
      %v1332 = vpop.f32.mrb[0].mxu0
      %v1333 = vadd.f32 0.0, %v1332
      %v1334 = vpop.f32.mrb[0].mxu0
      %1335 = vmatprep.mubr.bf16.mxu0 0
      %1336 = vmatmul.mubr.bf16.gmra.mrb[0].mxu0 %v1192
      %v1337 = vpop.f32.mrb[0].mxu0
      %v1338 = vadd.f32 0.0, %v1337
      %v1339 = vpop.f32.mrb[0].mxu0
      %v1340 = vpop.f32.mrb[0].mxu0
      %v1341 = vadd.f32 0.0, %v1340
      %v1342 = vpop.f32.mrb[0].mxu0
      %1343 = vmatprep.mubr.bf16.mxu0 0
      %1344 = vmatmul.mubr.bf16.gmra.mrb[0].mxu0 %v1195
      %v1345 = vpop.f32.mrb[0].mxu0
      %v1346 = vadd.f32 0.0, %v1345
      %v1347 = vpop.f32.mrb[0].mxu0
      %v1348 = vpop.f32.mrb[0].mxu0
      %v1349 = vadd.f32 0.0, %v1348
      %v1350 = vpop.f32.mrb[0].mxu0
      %1351 = vmatprep.mubr.bf16.mxu0 0
      %1352 = vmatmul.mubr.bf16.gmra.mrb[0].mxu0 %v1198
      %v1353 = vpop.f32.mrb[0].mxu0
      %v1354 = vadd.f32 0.0, %v1353
      %v1355 = vpop.f32.mrb[0].mxu0
      %v1356 = vpop.f32.mrb[0].mxu0
      %v1357 = vadd.f32 0.0, %v1356
      %v1358 = vpop.f32.mrb[0].mxu0
      %1359 = vmatprep.mubr.bf16.mxu0 0
      %1360 = vmatmul.mubr.bf16.gmra.mrb[0].mxu0 %v1201
      %v1361 = vpop.f32.mrb[0].mxu0
      %v1362 = vadd.f32 0.0, %v1361
      %v1363 = vpop.f32.mrb[0].mxu0
      %v1364 = vpop.f32.mrb[0].mxu0
      %v1365 = vadd.f32 0.0, %v1364
      %v1366 = vpop.f32.mrb[0].mxu0
      %1367 = vdwg.mxu0
      %v1368 = vsel %vm417, %v923, 0
      %v1370 = vsel %vm417, %v925, 0
      %v1372 = vsel %vm417, %v927, 0
      %v1374 = vsel %vm417, %v929, 0
      %v1376 = vsel %vm417, %v931, 0
      %v1378 = vsel %vm417, %v933, 0
      %v1380 = vsel %vm417, %v935, 0
      %v1382 = vsel %vm417, %v937, 0
      %v1384 = vsel %vm417, %v939, 0
      %v1386 = vsel %vm417, %v941, 0
      %v1388 = vsel %vm417, %v943, 0
      %v1390 = vsel %vm417, %v945, 0
      %v1392 = vsel %vm417, %v947, 0
      %v1394 = vsel %vm417, %v949, 0
      %v1396 = vsel %vm417, %v951, 0
      %v1398 = vsel %vm417, %v953, 0
      %v1401 = vsel %vm1203, %v959, 0
      %1403 = vmatprep.subr.bf16.mxu0 0
      %1404 = vmatpush1.bf16.msra.mxu0 %v1401
      %1405 = vmatprep.subr.bf16.mxu0 0
      %1406 = vmatpush1.bf16.msra.mxu0 0
      %1407 = vmatprep.subr.bf16.mxu0 0
      %1408 = vmatpush1.bf16.msra.mxu0 0
      %1409 = vmatprep.subr.bf16.mxu0 0
      %1410 = vmatpush1.bf16.msra.mxu0 0
      %1411 = vmatprep.subr.bf16.mxu0 0
      %1412 = vmatpush1.bf16.msra.mxu0 0
      %1413 = vmatprep.subr.bf16.mxu0 0
      %1414 = vmatpush1.bf16.msra.mxu0 0
      %1415 = vmatprep.subr.bf16.mxu0 0
      %1416 = vmatpush1.bf16.msra.mxu0 0
      %1417 = vmatprep.subr.bf16.mxu0 0
      %1418 = vmatpush1.bf16.msra.mxu0 0
      %1419 = vmatprep.subr.bf16.mxu0 0
      %1420 = vmatpush1.bf16.msra.mxu0 0
      %1421 = vmatprep.subr.bf16.mxu0 0
      %1422 = vmatpush1.bf16.msra.mxu0 0
      %1423 = vmatprep.subr.bf16.mxu0 0
      %1424 = vmatpush1.bf16.msra.mxu0 0
      %1425 = vmatprep.subr.bf16.mxu0 0
      %1426 = vmatpush1.bf16.msra.mxu0 0
      %1427 = vmatprep.subr.bf16.mxu0 0
      %1428 = vmatpush1.bf16.msra.mxu0 0
      %1429 = vmatprep.subr.bf16.mxu0 0
      %1430 = vmatpush1.bf16.msra.mxu0 0
      %1431 = vmatprep.subr.bf16.mxu0 0
      %1432 = vmatpush1.bf16.msra.mxu0 0
      %1433 = vmatprep.subr.bf16.mxu0 0
      %1434 = vmatpush1.bf16.msra.mxu0 0
      %1435 = vmatprep.mubr.bf16.mxu0 0
      %1436 = vmatmul.mubr.bf16.gmra.mrb[0].mxu0 %v1368
      %v1437 = vpop.f32.mrb[0].mxu0
      %v1438 = vadd.f32 %v1242, %v1437
      %v1439 = vpop.f32.mrb[0].mxu0
      %v1440 = vpop.f32.mrb[0].mxu0
      %v1441 = vadd.f32 %v1245, %v1440
      %v1442 = vpop.f32.mrb[0].mxu0
      %1443 = vmatprep.mubr.bf16.mxu0 0
      %1444 = vmatmul.mubr.bf16.gmra.mrb[0].mxu0 %v1370
      %v1445 = vpop.f32.mrb[0].mxu0
      %v1446 = vadd.f32 %v1250, %v1445
      %v1447 = vpop.f32.mrb[0].mxu0
      %v1448 = vpop.f32.mrb[0].mxu0
      %v1449 = vadd.f32 %v1253, %v1448
      %v1450 = vpop.f32.mrb[0].mxu0
      %1451 = vmatprep.mubr.bf16.mxu0 0
      %1452 = vmatmul.mubr.bf16.gmra.mrb[0].mxu0 %v1372
      %v1453 = vpop.f32.mrb[0].mxu0
      %v1454 = vadd.f32 %v1258, %v1453
      %v1455 = vpop.f32.mrb[0].mxu0
      %v1456 = vpop.f32.mrb[0].mxu0
      %v1457 = vadd.f32 %v1261, %v1456
      %v1458 = vpop.f32.mrb[0].mxu0
      %1459 = vmatprep.mubr.bf16.mxu0 0
      %1460 = vmatmul.mubr.bf16.gmra.mrb[0].mxu0 %v1374
      %v1461 = vpop.f32.mrb[0].mxu0
      %v1462 = vadd.f32 %v1266, %v1461
      %v1463 = vpop.f32.mrb[0].mxu0
      %v1464 = vpop.f32.mrb[0].mxu0
      %v1465 = vadd.f32 %v1269, %v1464
      %v1466 = vpop.f32.mrb[0].mxu0
      %1467 = vmatprep.mubr.bf16.mxu0 0
      %1468 = vmatmul.mubr.bf16.gmra.mrb[0].mxu0 %v1376
      %v1469 = vpop.f32.mrb[0].mxu0
      %v1470 = vadd.f32 %v1274, %v1469
      %v1471 = vpop.f32.mrb[0].mxu0
      %v1472 = vpop.f32.mrb[0].mxu0
      %v1473 = vadd.f32 %v1277, %v1472
      %v1474 = vpop.f32.mrb[0].mxu0
      %1475 = vmatprep.mubr.bf16.mxu0 0
      %1476 = vmatmul.mubr.bf16.gmra.mrb[0].mxu0 %v1378
      %v1477 = vpop.f32.mrb[0].mxu0
      %v1478 = vadd.f32 %v1282, %v1477
      %v1479 = vpop.f32.mrb[0].mxu0
      %v1480 = vpop.f32.mrb[0].mxu0
      %v1481 = vadd.f32 %v1285, %v1480
      %v1482 = vpop.f32.mrb[0].mxu0
      %1483 = vmatprep.mubr.bf16.mxu0 0
      %1484 = vmatmul.mubr.bf16.gmra.mrb[0].mxu0 %v1380
      %v1485 = vpop.f32.mrb[0].mxu0
      %v1486 = vadd.f32 %v1290, %v1485
      %v1487 = vpop.f32.mrb[0].mxu0
      %v1488 = vpop.f32.mrb[0].mxu0
      %v1489 = vadd.f32 %v1293, %v1488
      %v1490 = vpop.f32.mrb[0].mxu0
      %1491 = vmatprep.mubr.bf16.mxu0 0
      %1492 = vmatmul.mubr.bf16.gmra.mrb[0].mxu0 %v1382
      %v1493 = vpop.f32.mrb[0].mxu0
      %v1494 = vadd.f32 %v1298, %v1493
      %v1495 = vpop.f32.mrb[0].mxu0
      %v1496 = vpop.f32.mrb[0].mxu0
      %v1497 = vadd.f32 %v1301, %v1496
      %v1498 = vpop.f32.mrb[0].mxu0
      %1499 = vmatprep.mubr.bf16.mxu0 0
      %1500 = vmatmul.mubr.bf16.gmra.mrb[0].mxu0 %v1384
      %v1501 = vpop.f32.mrb[0].mxu0
      %v1502 = vadd.f32 %v1306, %v1501
      %v1503 = vpop.f32.mrb[0].mxu0
      %v1504 = vpop.f32.mrb[0].mxu0
      %v1505 = vadd.f32 %v1309, %v1504
      %v1506 = vpop.f32.mrb[0].mxu0
      %1507 = vmatprep.mubr.bf16.mxu0 0
      %1508 = vmatmul.mubr.bf16.gmra.mrb[0].mxu0 %v1386
      %v1509 = vpop.f32.mrb[0].mxu0
      %v1510 = vadd.f32 %v1314, %v1509
      %v1511 = vpop.f32.mrb[0].mxu0
      %v1512 = vpop.f32.mrb[0].mxu0
      %v1513 = vadd.f32 %v1317, %v1512
      %v1514 = vpop.f32.mrb[0].mxu0
      %1515 = vmatprep.mubr.bf16.mxu0 0
      %1516 = vmatmul.mubr.bf16.gmra.mrb[0].mxu0 %v1388
      %v1517 = vpop.f32.mrb[0].mxu0
      %v1518 = vadd.f32 %v1322, %v1517
      %v1519 = vpop.f32.mrb[0].mxu0
      %v1520 = vpop.f32.mrb[0].mxu0
      %v1521 = vadd.f32 %v1325, %v1520
      %v1522 = vpop.f32.mrb[0].mxu0
      %1523 = vmatprep.mubr.bf16.mxu0 0
      %1524 = vmatmul.mubr.bf16.gmra.mrb[0].mxu0 %v1390
      %v1525 = vpop.f32.mrb[0].mxu0
      %v1526 = vadd.f32 %v1330, %v1525
      %v1527 = vpop.f32.mrb[0].mxu0
      %v1528 = vpop.f32.mrb[0].mxu0
      %v1529 = vadd.f32 %v1333, %v1528
      %v1530 = vpop.f32.mrb[0].mxu0
      %1531 = vmatprep.mubr.bf16.mxu0 0
      %1532 = vmatmul.mubr.bf16.gmra.mrb[0].mxu0 %v1392
      %v1533 = vpop.f32.mrb[0].mxu0
      %v1534 = vadd.f32 %v1338, %v1533
      %v1535 = vpop.f32.mrb[0].mxu0
      %v1536 = vpop.f32.mrb[0].mxu0
      %v1537 = vadd.f32 %v1341, %v1536
      %v1538 = vpop.f32.mrb[0].mxu0
      %1539 = vmatprep.mubr.bf16.mxu0 0
      %1540 = vmatmul.mubr.bf16.gmra.mrb[0].mxu0 %v1394
      %v1541 = vpop.f32.mrb[0].mxu0
      %v1542 = vadd.f32 %v1346, %v1541
      %v1543 = vpop.f32.mrb[0].mxu0
      %v1544 = vpop.f32.mrb[0].mxu0
      %v1545 = vadd.f32 %v1349, %v1544
      %v1546 = vpop.f32.mrb[0].mxu0
      %1547 = vmatprep.mubr.bf16.mxu0 0
      %1548 = vmatmul.mubr.bf16.gmra.mrb[0].mxu0 %v1396
      %v1549 = vpop.f32.mrb[0].mxu0
      %v1550 = vadd.f32 %v1354, %v1549
      %v1551 = vpop.f32.mrb[0].mxu0
      %v1552 = vpop.f32.mrb[0].mxu0
      %v1553 = vadd.f32 %v1357, %v1552
      %v1554 = vpop.f32.mrb[0].mxu0
      %1555 = vmatprep.mubr.bf16.mxu0 0
      %1556 = vmatmul.mubr.bf16.gmra.mrb[0].mxu0 %v1398
      %v1557 = vpop.f32.mrb[0].mxu0
      %v1558 = vadd.f32 %v1362, %v1557
      %v1559 = vpop.f32.mrb[0].mxu0
      %v1560 = vpop.f32.mrb[0].mxu0
      %v1561 = vadd.f32 %v1365, %v1560
      %v1562 = vpop.f32.mrb[0].mxu0
      %1563 = vdwg.mxu0
      %vm1596 = vcmask 1046528
      %v1597 = vrot.slane %v923, 1
      %v1598 = vrot.slane %v924, 1
      %v1599 = vsel %vm1596, %v1597, %v1598
      %v1600 = vrot.slane %v925, 1
      %v1601 = vrot.slane %v926, 1
      %v1602 = vsel %vm1596, %v1600, %v1601
      %v1603 = vrot.slane %v927, 1
      %v1604 = vrot.slane %v928, 1
      %v1605 = vsel %vm1596, %v1603, %v1604
      %v1606 = vrot.slane %v929, 1
      %v1607 = vrot.slane %v930, 1
      %v1608 = vsel %vm1596, %v1606, %v1607
      %v1609 = vrot.slane %v931, 1
      %v1610 = vrot.slane %v932, 1
      %v1611 = vsel %vm1596, %v1609, %v1610
      %v1612 = vrot.slane %v933, 1
      %v1613 = vrot.slane %v934, 1
      %v1614 = vsel %vm1596, %v1612, %v1613
      %v1615 = vrot.slane %v935, 1
      %v1616 = vrot.slane %v936, 1
      %v1617 = vsel %vm1596, %v1615, %v1616
      %v1618 = vrot.slane %v937, 1
      %v1619 = vrot.slane %v938, 1
      %v1620 = vsel %vm1596, %v1618, %v1619
      %v1621 = vrot.slane %v939, 1
      %v1622 = vrot.slane %v940, 1
      %v1623 = vsel %vm1596, %v1621, %v1622
      %v1624 = vrot.slane %v941, 1
      %v1625 = vrot.slane %v942, 1
      %v1626 = vsel %vm1596, %v1624, %v1625
      %v1627 = vrot.slane %v943, 1
      %v1628 = vrot.slane %v944, 1
      %v1629 = vsel %vm1596, %v1627, %v1628
      %v1630 = vrot.slane %v945, 1
      %v1631 = vrot.slane %v946, 1
      %v1632 = vsel %vm1596, %v1630, %v1631
      %v1633 = vrot.slane %v947, 1
      %v1634 = vrot.slane %v948, 1
      %v1635 = vsel %vm1596, %v1633, %v1634
      %v1636 = vrot.slane %v949, 1
      %v1637 = vrot.slane %v950, 1
      %v1638 = vsel %vm1596, %v1636, %v1637
      %v1639 = vrot.slane %v951, 1
      %v1640 = vrot.slane %v952, 1
      %v1641 = vsel %vm1596, %v1639, %v1640
      %v1642 = vrot.slane %v953, 1
      %v1643 = vrot.slane %v954, 1
      %v1644 = vsel %vm1596, %v1642, %v1643
      %s1645 = scalar_lea.vmem %s1, 4
      %v1646 = vld [vmem:[%s1645] sm:$0x3]
      %v1648 = vsel %vm417, %v1599, 0
      %v1651 = vsel %vm417, %v1602, 0
      %v1654 = vsel %vm417, %v1605, 0
      %v1657 = vsel %vm417, %v1608, 0
      %v1660 = vsel %vm417, %v1611, 0
      %v1663 = vsel %vm417, %v1614, 0
      %v1666 = vsel %vm417, %v1617, 0
      %v1669 = vsel %vm417, %v1620, 0
      %v1672 = vsel %vm417, %v1623, 0
      %v1675 = vsel %vm417, %v1626, 0
      %v1678 = vsel %vm417, %v1629, 0
      %v1681 = vsel %vm417, %v1632, 0
      %v1684 = vsel %vm417, %v1635, 0
      %v1687 = vsel %vm417, %v1638, 0
      %v1690 = vsel %vm417, %v1641, 0
      %v1693 = vsel %vm417, %v1644, 0
      %v1696 = vsel %vm1203, %v1646, 0
      %1698 = vmatprep.subr.bf16.mxu0 0
      %1699 = vmatpush1.bf16.msra.mxu0 %v1696
      %1700 = vmatprep.subr.bf16.mxu0 0
      %1701 = vmatpush1.bf16.msra.mxu0 0
      %1702 = vmatprep.subr.bf16.mxu0 0
      %1703 = vmatpush1.bf16.msra.mxu0 0
      %1704 = vmatprep.subr.bf16.mxu0 0
      %1705 = vmatpush1.bf16.msra.mxu0 0
      %1706 = vmatprep.subr.bf16.mxu0 0
      %1707 = vmatpush1.bf16.msra.mxu0 0
      %1708 = vmatprep.subr.bf16.mxu0 0
      %1709 = vmatpush1.bf16.msra.mxu0 0
      %1710 = vmatprep.subr.bf16.mxu0 0
      %1711 = vmatpush1.bf16.msra.mxu0 0
      %1712 = vmatprep.subr.bf16.mxu0 0
      %1713 = vmatpush1.bf16.msra.mxu0 0
      %1714 = vmatprep.subr.bf16.mxu0 0
      %1715 = vmatpush1.bf16.msra.mxu0 0
      %1716 = vmatprep.subr.bf16.mxu0 0
      %1717 = vmatpush1.bf16.msra.mxu0 0
      %1718 = vmatprep.subr.bf16.mxu0 0
      %1719 = vmatpush1.bf16.msra.mxu0 0
      %1720 = vmatprep.subr.bf16.mxu0 0
      %1721 = vmatpush1.bf16.msra.mxu0 0
      %1722 = vmatprep.subr.bf16.mxu0 0
      %1723 = vmatpush1.bf16.msra.mxu0 0
      %1724 = vmatprep.subr.bf16.mxu0 0
      %1725 = vmatpush1.bf16.msra.mxu0 0
      %1726 = vmatprep.subr.bf16.mxu0 0
      %1727 = vmatpush1.bf16.msra.mxu0 0
      %1728 = vmatprep.subr.bf16.mxu0 0
      %1729 = vmatpush1.bf16.msra.mxu0 0
      %1730 = vmatprep.mubr.bf16.mxu0 0
      %1731 = vmatmul.mubr.bf16.gmra.mrb[0].mxu0 %v1648
      %v1732 = vpop.f32.mrb[0].mxu0
      %v1733 = vadd.f32 0.0, %v1732
      %v1734 = vpop.f32.mrb[0].mxu0
      %v1735 = vpop.f32.mrb[0].mxu0
      %v1736 = vadd.f32 0.0, %v1735
      %v1737 = vpop.f32.mrb[0].mxu0
      %1738 = vmatprep.mubr.bf16.mxu0 0
      %1739 = vmatmul.mubr.bf16.gmra.mrb[0].mxu0 %v1651
      %v1740 = vpop.f32.mrb[0].mxu0
      %v1741 = vadd.f32 0.0, %v1740
      %v1742 = vpop.f32.mrb[0].mxu0
      %v1743 = vpop.f32.mrb[0].mxu0
      %v1744 = vadd.f32 0.0, %v1743
      %v1745 = vpop.f32.mrb[0].mxu0
      %1746 = vmatprep.mubr.bf16.mxu0 0
      %1747 = vmatmul.mubr.bf16.gmra.mrb[0].mxu0 %v1654
      %v1748 = vpop.f32.mrb[0].mxu0
      %v1749 = vadd.f32 0.0, %v1748
      %v1750 = vpop.f32.mrb[0].mxu0
      %v1751 = vpop.f32.mrb[0].mxu0
      %v1752 = vadd.f32 0.0, %v1751
      %v1753 = vpop.f32.mrb[0].mxu0
      %1754 = vmatprep.mubr.bf16.mxu0 0
      %1755 = vmatmul.mubr.bf16.gmra.mrb[0].mxu0 %v1657
      %v1756 = vpop.f32.mrb[0].mxu0
      %v1757 = vadd.f32 0.0, %v1756
      %v1758 = vpop.f32.mrb[0].mxu0
      %v1759 = vpop.f32.mrb[0].mxu0
      %v1760 = vadd.f32 0.0, %v1759
      %v1761 = vpop.f32.mrb[0].mxu0
      %1762 = vmatprep.mubr.bf16.mxu0 0
      %1763 = vmatmul.mubr.bf16.gmra.mrb[0].mxu0 %v1660
      %v1764 = vpop.f32.mrb[0].mxu0
      %v1765 = vadd.f32 0.0, %v1764
      %v1766 = vpop.f32.mrb[0].mxu0
      %v1767 = vpop.f32.mrb[0].mxu0
      %v1768 = vadd.f32 0.0, %v1767
      %v1769 = vpop.f32.mrb[0].mxu0
      %1770 = vmatprep.mubr.bf16.mxu0 0
      %1771 = vmatmul.mubr.bf16.gmra.mrb[0].mxu0 %v1663
      %v1772 = vpop.f32.mrb[0].mxu0
      %v1773 = vadd.f32 0.0, %v1772
      %v1774 = vpop.f32.mrb[0].mxu0
      %v1775 = vpop.f32.mrb[0].mxu0
      %v1776 = vadd.f32 0.0, %v1775
      %v1777 = vpop.f32.mrb[0].mxu0
      %1778 = vmatprep.mubr.bf16.mxu0 0
      %1779 = vmatmul.mubr.bf16.gmra.mrb[0].mxu0 %v1666
      %v1780 = vpop.f32.mrb[0].mxu0
      %v1781 = vadd.f32 0.0, %v1780
      %v1782 = vpop.f32.mrb[0].mxu0
      %v1783 = vpop.f32.mrb[0].mxu0
      %v1784 = vadd.f32 0.0, %v1783
      %v1785 = vpop.f32.mrb[0].mxu0
      %1786 = vmatprep.mubr.bf16.mxu0 0
      %1787 = vmatmul.mubr.bf16.gmra.mrb[0].mxu0 %v1669
      %v1788 = vpop.f32.mrb[0].mxu0
      %v1789 = vadd.f32 0.0, %v1788
      %v1790 = vpop.f32.mrb[0].mxu0
      %v1791 = vpop.f32.mrb[0].mxu0
      %v1792 = vadd.f32 0.0, %v1791
      %v1793 = vpop.f32.mrb[0].mxu0
      %1794 = vmatprep.mubr.bf16.mxu0 0
      %1795 = vmatmul.mubr.bf16.gmra.mrb[0].mxu0 %v1672
      %v1796 = vpop.f32.mrb[0].mxu0
      %v1797 = vadd.f32 0.0, %v1796
      %v1798 = vpop.f32.mrb[0].mxu0
      %v1799 = vpop.f32.mrb[0].mxu0
      %v1800 = vadd.f32 0.0, %v1799
      %v1801 = vpop.f32.mrb[0].mxu0
      %1802 = vmatprep.mubr.bf16.mxu0 0
      %1803 = vmatmul.mubr.bf16.gmra.mrb[0].mxu0 %v1675
      %v1804 = vpop.f32.mrb[0].mxu0
      %v1805 = vadd.f32 0.0, %v1804
      %v1806 = vpop.f32.mrb[0].mxu0
      %v1807 = vpop.f32.mrb[0].mxu0
      %v1808 = vadd.f32 0.0, %v1807
      %v1809 = vpop.f32.mrb[0].mxu0
      %1810 = vmatprep.mubr.bf16.mxu0 0
      %1811 = vmatmul.mubr.bf16.gmra.mrb[0].mxu0 %v1678
      %v1812 = vpop.f32.mrb[0].mxu0
      %v1813 = vadd.f32 0.0, %v1812
      %v1814 = vpop.f32.mrb[0].mxu0
      %v1815 = vpop.f32.mrb[0].mxu0
      %v1816 = vadd.f32 0.0, %v1815
      %v1817 = vpop.f32.mrb[0].mxu0
      %1818 = vmatprep.mubr.bf16.mxu0 0
      %1819 = vmatmul.mubr.bf16.gmra.mrb[0].mxu0 %v1681
      %v1820 = vpop.f32.mrb[0].mxu0
      %v1821 = vadd.f32 0.0, %v1820
      %v1822 = vpop.f32.mrb[0].mxu0
      %v1823 = vpop.f32.mrb[0].mxu0
      %v1824 = vadd.f32 0.0, %v1823
      %v1825 = vpop.f32.mrb[0].mxu0
      %1826 = vmatprep.mubr.bf16.mxu0 0
      %1827 = vmatmul.mubr.bf16.gmra.mrb[0].mxu0 %v1684
      %v1828 = vpop.f32.mrb[0].mxu0
      %v1829 = vadd.f32 0.0, %v1828
      %v1830 = vpop.f32.mrb[0].mxu0
      %v1831 = vpop.f32.mrb[0].mxu0
      %v1832 = vadd.f32 0.0, %v1831
      %v1833 = vpop.f32.mrb[0].mxu0
      %1834 = vmatprep.mubr.bf16.mxu0 0
      %1835 = vmatmul.mubr.bf16.gmra.mrb[0].mxu0 %v1687
      %v1836 = vpop.f32.mrb[0].mxu0
      %v1837 = vadd.f32 0.0, %v1836
      %v1838 = vpop.f32.mrb[0].mxu0
      %v1839 = vpop.f32.mrb[0].mxu0
      %v1840 = vadd.f32 0.0, %v1839
      %v1841 = vpop.f32.mrb[0].mxu0
      %1842 = vmatprep.mubr.bf16.mxu0 0
      %1843 = vmatmul.mubr.bf16.gmra.mrb[0].mxu0 %v1690
      %v1844 = vpop.f32.mrb[0].mxu0
      %v1845 = vadd.f32 0.0, %v1844
      %v1846 = vpop.f32.mrb[0].mxu0
      %v1847 = vpop.f32.mrb[0].mxu0
      %v1848 = vadd.f32 0.0, %v1847
      %v1849 = vpop.f32.mrb[0].mxu0
      %1850 = vmatprep.mubr.bf16.mxu0 0
      %1851 = vmatmul.mubr.bf16.gmra.mrb[0].mxu0 %v1693
      %v1852 = vpop.f32.mrb[0].mxu0
      %v1853 = vadd.f32 0.0, %v1852
      %v1854 = vpop.f32.mrb[0].mxu0
      %v1855 = vpop.f32.mrb[0].mxu0
      %v1856 = vadd.f32 0.0, %v1855
      %v1857 = vpop.f32.mrb[0].mxu0
      %1858 = vdwg.mxu0
      %v1859 = vadd.f32 %v1438, %v1733
      %v1860 = vadd.f32 %v1441, %v1736
      %v1861 = vadd.f32 %v1446, %v1741
      %v1862 = vadd.f32 %v1449, %v1744
      %v1863 = vadd.f32 %v1454, %v1749
      %v1864 = vadd.f32 %v1457, %v1752
      %v1865 = vadd.f32 %v1462, %v1757
      %v1866 = vadd.f32 %v1465, %v1760
      %v1867 = vadd.f32 %v1470, %v1765
      %v1868 = vadd.f32 %v1473, %v1768
      %v1869 = vadd.f32 %v1478, %v1773
      %v1870 = vadd.f32 %v1481, %v1776
      %v1871 = vadd.f32 %v1486, %v1781
      %v1872 = vadd.f32 %v1489, %v1784
      %v1873 = vadd.f32 %v1494, %v1789
      %v1874 = vadd.f32 %v1497, %v1792
      %v1875 = vadd.f32 %v1502, %v1797
      %v1876 = vadd.f32 %v1505, %v1800
      %v1877 = vadd.f32 %v1510, %v1805
      %v1878 = vadd.f32 %v1513, %v1808
      %v1879 = vadd.f32 %v1518, %v1813
      %v1880 = vadd.f32 %v1521, %v1816
      %v1881 = vadd.f32 %v1526, %v1821
      %v1882 = vadd.f32 %v1529, %v1824
      %v1883 = vadd.f32 %v1534, %v1829
      %v1884 = vadd.f32 %v1537, %v1832
      %v1885 = vadd.f32 %v1542, %v1837
      %v1886 = vadd.f32 %v1545, %v1840
      %v1887 = vadd.f32 %v1550, %v1845
      %v1888 = vadd.f32 %v1553, %v1848
      %v1889 = vadd.f32 %v1558, %v1853
      %v1890 = vadd.f32 %v1561, %v1856
      %s1891 = scalar_lea.vmem %s1, 6
      %v1892 = vld [vmem:[%s1891] sm:$0x3]
      %v1894 = vsel %vm417, %v955, 0
      %v1897 = vsel %vm1203, %v1892, 0
      %1899 = vmatprep.subr.bf16.mxu0 0
      %1900 = vmatpush1.bf16.msra.mxu0 %v1897
      %1901 = vmatprep.subr.bf16.mxu0 0
      %1902 = vmatpush1.bf16.msra.mxu0 0
      %1903 = vmatprep.subr.bf16.mxu0 0
      %1904 = vmatpush1.bf16.msra.mxu0 0
      %1905 = vmatprep.subr.bf16.mxu0 0
      %1906 = vmatpush1.bf16.msra.mxu0 0
      %1907 = vmatprep.subr.bf16.mxu0 0
      %1908 = vmatpush1.bf16.msra.mxu0 0
      %1909 = vmatprep.subr.bf16.mxu0 0
      %1910 = vmatpush1.bf16.msra.mxu0 0
      %1911 = vmatprep.subr.bf16.mxu0 0
      %1912 = vmatpush1.bf16.msra.mxu0 0
      %1913 = vmatprep.subr.bf16.mxu0 0
      %1914 = vmatpush1.bf16.msra.mxu0 0
      %1915 = vmatprep.subr.bf16.mxu0 0
      %1916 = vmatpush1.bf16.msra.mxu0 0
      %1917 = vmatprep.subr.bf16.mxu0 0
      %1918 = vmatpush1.bf16.msra.mxu0 0
      %1919 = vmatprep.subr.bf16.mxu0 0
      %1920 = vmatpush1.bf16.msra.mxu0 0
      %1921 = vmatprep.subr.bf16.mxu0 0
      %1922 = vmatpush1.bf16.msra.mxu0 0
      %1923 = vmatprep.subr.bf16.mxu0 0
      %1924 = vmatpush1.bf16.msra.mxu0 0
      %1925 = vmatprep.subr.bf16.mxu0 0
      %1926 = vmatpush1.bf16.msra.mxu0 0
      %1927 = vmatprep.subr.bf16.mxu0 0
      %1928 = vmatpush1.bf16.msra.mxu0 0
      %1929 = vmatprep.subr.bf16.mxu0 0
      %1930 = vmatpush1.bf16.msra.mxu0 0
      %1931 = vmatprep.mubr.bf16.mxu0 0
      %1932 = vmatmul.mubr.bf16.gmra.mrb[0].mxu0 %v1370
      %v1933 = vpop.f32.mrb[0].mxu0
      %v1934 = vadd.f32 0.0, %v1933
      %v1935 = vpop.f32.mrb[0].mxu0
      %v1936 = vpop.f32.mrb[0].mxu0
      %v1937 = vadd.f32 0.0, %v1936
      %v1938 = vpop.f32.mrb[0].mxu0
      %1939 = vmatprep.mubr.bf16.mxu0 0
      %1940 = vmatmul.mubr.bf16.gmra.mrb[0].mxu0 %v1372
      %v1941 = vpop.f32.mrb[0].mxu0
      %v1942 = vadd.f32 0.0, %v1941
      %v1943 = vpop.f32.mrb[0].mxu0
      %v1944 = vpop.f32.mrb[0].mxu0
      %v1945 = vadd.f32 0.0, %v1944
      %v1946 = vpop.f32.mrb[0].mxu0
      %1947 = vmatprep.mubr.bf16.mxu0 0
      %1948 = vmatmul.mubr.bf16.gmra.mrb[0].mxu0 %v1374
      %v1949 = vpop.f32.mrb[0].mxu0
      %v1950 = vadd.f32 0.0, %v1949
      %v1951 = vpop.f32.mrb[0].mxu0
      %v1952 = vpop.f32.mrb[0].mxu0
      %v1953 = vadd.f32 0.0, %v1952
      %v1954 = vpop.f32.mrb[0].mxu0
      %1955 = vmatprep.mubr.bf16.mxu0 0
      %1956 = vmatmul.mubr.bf16.gmra.mrb[0].mxu0 %v1376
      %v1957 = vpop.f32.mrb[0].mxu0
      %v1958 = vadd.f32 0.0, %v1957
      %v1959 = vpop.f32.mrb[0].mxu0
      %v1960 = vpop.f32.mrb[0].mxu0
      %v1961 = vadd.f32 0.0, %v1960
      %v1962 = vpop.f32.mrb[0].mxu0
      %1963 = vmatprep.mubr.bf16.mxu0 0
      %1964 = vmatmul.mubr.bf16.gmra.mrb[0].mxu0 %v1378
      %v1965 = vpop.f32.mrb[0].mxu0
      %v1966 = vadd.f32 0.0, %v1965
      %v1967 = vpop.f32.mrb[0].mxu0
      %v1968 = vpop.f32.mrb[0].mxu0
      %v1969 = vadd.f32 0.0, %v1968
      %v1970 = vpop.f32.mrb[0].mxu0
      %1971 = vmatprep.mubr.bf16.mxu0 0
      %1972 = vmatmul.mubr.bf16.gmra.mrb[0].mxu0 %v1380
      %v1973 = vpop.f32.mrb[0].mxu0
      %v1974 = vadd.f32 0.0, %v1973
      %v1975 = vpop.f32.mrb[0].mxu0
      %v1976 = vpop.f32.mrb[0].mxu0
      %v1977 = vadd.f32 0.0, %v1976
      %v1978 = vpop.f32.mrb[0].mxu0
      %1979 = vmatprep.mubr.bf16.mxu0 0
      %1980 = vmatmul.mubr.bf16.gmra.mrb[0].mxu0 %v1382
      %v1981 = vpop.f32.mrb[0].mxu0
      %v1982 = vadd.f32 0.0, %v1981
      %v1983 = vpop.f32.mrb[0].mxu0
      %v1984 = vpop.f32.mrb[0].mxu0
      %v1985 = vadd.f32 0.0, %v1984
      %v1986 = vpop.f32.mrb[0].mxu0
      %1987 = vmatprep.mubr.bf16.mxu0 0
      %1988 = vmatmul.mubr.bf16.gmra.mrb[0].mxu0 %v1384
      %v1989 = vpop.f32.mrb[0].mxu0
      %v1990 = vadd.f32 0.0, %v1989
      %v1991 = vpop.f32.mrb[0].mxu0
      %v1992 = vpop.f32.mrb[0].mxu0
      %v1993 = vadd.f32 0.0, %v1992
      %v1994 = vpop.f32.mrb[0].mxu0
      %1995 = vmatprep.mubr.bf16.mxu0 0
      %1996 = vmatmul.mubr.bf16.gmra.mrb[0].mxu0 %v1386
      %v1997 = vpop.f32.mrb[0].mxu0
      %v1998 = vadd.f32 0.0, %v1997
      %v1999 = vpop.f32.mrb[0].mxu0
      %v2000 = vpop.f32.mrb[0].mxu0
      %v2001 = vadd.f32 0.0, %v2000
      %v2002 = vpop.f32.mrb[0].mxu0
      %2003 = vmatprep.mubr.bf16.mxu0 0
      %2004 = vmatmul.mubr.bf16.gmra.mrb[0].mxu0 %v1388
      %v2005 = vpop.f32.mrb[0].mxu0
      %v2006 = vadd.f32 0.0, %v2005
      %v2007 = vpop.f32.mrb[0].mxu0
      %v2008 = vpop.f32.mrb[0].mxu0
      %v2009 = vadd.f32 0.0, %v2008
      %v2010 = vpop.f32.mrb[0].mxu0
      %2011 = vmatprep.mubr.bf16.mxu0 0
      %2012 = vmatmul.mubr.bf16.gmra.mrb[0].mxu0 %v1390
      %v2013 = vpop.f32.mrb[0].mxu0
      %v2014 = vadd.f32 0.0, %v2013
      %v2015 = vpop.f32.mrb[0].mxu0
      %v2016 = vpop.f32.mrb[0].mxu0
      %v2017 = vadd.f32 0.0, %v2016
      %v2018 = vpop.f32.mrb[0].mxu0
      %2019 = vmatprep.mubr.bf16.mxu0 0
      %2020 = vmatmul.mubr.bf16.gmra.mrb[0].mxu0 %v1392
      %v2021 = vpop.f32.mrb[0].mxu0
      %v2022 = vadd.f32 0.0, %v2021
      %v2023 = vpop.f32.mrb[0].mxu0
      %v2024 = vpop.f32.mrb[0].mxu0
      %v2025 = vadd.f32 0.0, %v2024
      %v2026 = vpop.f32.mrb[0].mxu0
      %2027 = vmatprep.mubr.bf16.mxu0 0
      %2028 = vmatmul.mubr.bf16.gmra.mrb[0].mxu0 %v1394
      %v2029 = vpop.f32.mrb[0].mxu0
      %v2030 = vadd.f32 0.0, %v2029
      %v2031 = vpop.f32.mrb[0].mxu0
      %v2032 = vpop.f32.mrb[0].mxu0
      %v2033 = vadd.f32 0.0, %v2032
      %v2034 = vpop.f32.mrb[0].mxu0
      %2035 = vmatprep.mubr.bf16.mxu0 0
      %2036 = vmatmul.mubr.bf16.gmra.mrb[0].mxu0 %v1396
      %v2037 = vpop.f32.mrb[0].mxu0
      %v2038 = vadd.f32 0.0, %v2037
      %v2039 = vpop.f32.mrb[0].mxu0
      %v2040 = vpop.f32.mrb[0].mxu0
      %v2041 = vadd.f32 0.0, %v2040
      %v2042 = vpop.f32.mrb[0].mxu0
      %2043 = vmatprep.mubr.bf16.mxu0 0
      %2044 = vmatmul.mubr.bf16.gmra.mrb[0].mxu0 %v1398
      %v2045 = vpop.f32.mrb[0].mxu0
      %v2046 = vadd.f32 0.0, %v2045
      %v2047 = vpop.f32.mrb[0].mxu0
      %v2048 = vpop.f32.mrb[0].mxu0
      %v2049 = vadd.f32 0.0, %v2048
      %v2050 = vpop.f32.mrb[0].mxu0
      %2051 = vmatprep.mubr.bf16.mxu0 0
      %2052 = vmatmul.mubr.bf16.gmra.mrb[0].mxu0 %v1894
      %v2053 = vpop.f32.mrb[0].mxu0
      %v2054 = vadd.f32 0.0, %v2053
      %v2055 = vpop.f32.mrb[0].mxu0
      %v2056 = vpop.f32.mrb[0].mxu0
      %v2057 = vadd.f32 0.0, %v2056
      %v2058 = vpop.f32.mrb[0].mxu0
      %2059 = vdwg.mxu0
      %v2060 = vadd.f32 %v1859, %v1934
      %v2061 = vadd.f32 %v1860, %v1937
      %v2062 = vadd.f32 %v1861, %v1942
      %v2063 = vadd.f32 %v1862, %v1945
      %v2064 = vadd.f32 %v1863, %v1950
      %v2065 = vadd.f32 %v1864, %v1953
      %v2066 = vadd.f32 %v1865, %v1958
      %v2067 = vadd.f32 %v1866, %v1961
      %v2068 = vadd.f32 %v1867, %v1966
      %v2069 = vadd.f32 %v1868, %v1969
      %v2070 = vadd.f32 %v1869, %v1974
      %v2071 = vadd.f32 %v1870, %v1977
      %v2072 = vadd.f32 %v1871, %v1982
      %v2073 = vadd.f32 %v1872, %v1985
      %v2074 = vadd.f32 %v1873, %v1990
      %v2075 = vadd.f32 %v1874, %v1993
      %v2076 = vadd.f32 %v1875, %v1998
      %v2077 = vadd.f32 %v1876, %v2001
      %v2078 = vadd.f32 %v1877, %v2006
      %v2079 = vadd.f32 %v1878, %v2009
      %v2080 = vadd.f32 %v1879, %v2014
      %v2081 = vadd.f32 %v1880, %v2017
      %v2082 = vadd.f32 %v1881, %v2022
      %v2083 = vadd.f32 %v1882, %v2025
      %v2084 = vadd.f32 %v1883, %v2030
      %v2085 = vadd.f32 %v1884, %v2033
      %v2086 = vadd.f32 %v1885, %v2038
      %v2087 = vadd.f32 %v1886, %v2041
      %v2088 = vadd.f32 %v1887, %v2046
      %v2089 = vadd.f32 %v1888, %v2049
      %v2090 = vadd.f32 %v1889, %v2054
      %v2091 = vadd.f32 %v1890, %v2057
      %v2092 = vshrl.u32 %v955, 16
      %v2094 = vshll.u32 %v955, 16
      %v2096 = vrot.slane %v2094, 1
      %v2097 = vor.u32 %v2092, %v2096
      %v2099 = vshll.u32 %v956, 16
      %v2101 = vrot.slane %v2099, 1
      %v2102 = vsel %vm960, %v2097, %v2101
      %s2103 = scalar_lea.vmem %s1, 8
      %v2104 = vld [vmem:[%s2103] sm:$0x3]
      %v2106 = vsel %vm417, %v2102, 0
      %v2109 = vsel %vm1203, %v2104, 0
      %2111 = vmatprep.subr.bf16.mxu0 0
      %2112 = vmatpush1.bf16.msra.mxu0 %v2109
      %2113 = vmatprep.subr.bf16.mxu0 0
      %2114 = vmatpush1.bf16.msra.mxu0 0
      %2115 = vmatprep.subr.bf16.mxu0 0
      %2116 = vmatpush1.bf16.msra.mxu0 0
      %2117 = vmatprep.subr.bf16.mxu0 0
      %2118 = vmatpush1.bf16.msra.mxu0 0
      %2119 = vmatprep.subr.bf16.mxu0 0
      %2120 = vmatpush1.bf16.msra.mxu0 0
      %2121 = vmatprep.subr.bf16.mxu0 0
      %2122 = vmatpush1.bf16.msra.mxu0 0
      %2123 = vmatprep.subr.bf16.mxu0 0
      %2124 = vmatpush1.bf16.msra.mxu0 0
      %2125 = vmatprep.subr.bf16.mxu0 0
      %2126 = vmatpush1.bf16.msra.mxu0 0
      %2127 = vmatprep.subr.bf16.mxu0 0
      %2128 = vmatpush1.bf16.msra.mxu0 0
      %2129 = vmatprep.subr.bf16.mxu0 0
      %2130 = vmatpush1.bf16.msra.mxu0 0
      %2131 = vmatprep.subr.bf16.mxu0 0
      %2132 = vmatpush1.bf16.msra.mxu0 0
      %2133 = vmatprep.subr.bf16.mxu0 0
      %2134 = vmatpush1.bf16.msra.mxu0 0
      %2135 = vmatprep.subr.bf16.mxu0 0
      %2136 = vmatpush1.bf16.msra.mxu0 0
      %2137 = vmatprep.subr.bf16.mxu0 0
      %2138 = vmatpush1.bf16.msra.mxu0 0
      %2139 = vmatprep.subr.bf16.mxu0 0
      %2140 = vmatpush1.bf16.msra.mxu0 0
      %2141 = vmatprep.subr.bf16.mxu0 0
      %2142 = vmatpush1.bf16.msra.mxu0 0
      %2143 = vmatprep.mubr.bf16.mxu0 0
      %2144 = vmatmul.mubr.bf16.gmra.mrb[0].mxu0 %v1159
      %v2145 = vpop.f32.mrb[0].mxu0
      %v2146 = vadd.f32 0.0, %v2145
      %v2147 = vpop.f32.mrb[0].mxu0
      %v2148 = vpop.f32.mrb[0].mxu0
      %v2149 = vadd.f32 0.0, %v2148
      %v2150 = vpop.f32.mrb[0].mxu0
      %2151 = vmatprep.mubr.bf16.mxu0 0
      %2152 = vmatmul.mubr.bf16.gmra.mrb[0].mxu0 %v1162
      %v2153 = vpop.f32.mrb[0].mxu0
      %v2154 = vadd.f32 0.0, %v2153
      %v2155 = vpop.f32.mrb[0].mxu0
      %v2156 = vpop.f32.mrb[0].mxu0
      %v2157 = vadd.f32 0.0, %v2156
      %v2158 = vpop.f32.mrb[0].mxu0
      %2159 = vmatprep.mubr.bf16.mxu0 0
      %2160 = vmatmul.mubr.bf16.gmra.mrb[0].mxu0 %v1165
      %v2161 = vpop.f32.mrb[0].mxu0
      %v2162 = vadd.f32 0.0, %v2161
      %v2163 = vpop.f32.mrb[0].mxu0
      %v2164 = vpop.f32.mrb[0].mxu0
      %v2165 = vadd.f32 0.0, %v2164
      %v2166 = vpop.f32.mrb[0].mxu0
      %2167 = vmatprep.mubr.bf16.mxu0 0
      %2168 = vmatmul.mubr.bf16.gmra.mrb[0].mxu0 %v1168
      %v2169 = vpop.f32.mrb[0].mxu0
      %v2170 = vadd.f32 0.0, %v2169
      %v2171 = vpop.f32.mrb[0].mxu0
      %v2172 = vpop.f32.mrb[0].mxu0
      %v2173 = vadd.f32 0.0, %v2172
      %v2174 = vpop.f32.mrb[0].mxu0
      %2175 = vmatprep.mubr.bf16.mxu0 0
      %2176 = vmatmul.mubr.bf16.gmra.mrb[0].mxu0 %v1171
      %v2177 = vpop.f32.mrb[0].mxu0
      %v2178 = vadd.f32 0.0, %v2177
      %v2179 = vpop.f32.mrb[0].mxu0
      %v2180 = vpop.f32.mrb[0].mxu0
      %v2181 = vadd.f32 0.0, %v2180
      %v2182 = vpop.f32.mrb[0].mxu0
      %2183 = vmatprep.mubr.bf16.mxu0 0
      %2184 = vmatmul.mubr.bf16.gmra.mrb[0].mxu0 %v1174
      %v2185 = vpop.f32.mrb[0].mxu0
      %v2186 = vadd.f32 0.0, %v2185
      %v2187 = vpop.f32.mrb[0].mxu0
      %v2188 = vpop.f32.mrb[0].mxu0
      %v2189 = vadd.f32 0.0, %v2188
      %v2190 = vpop.f32.mrb[0].mxu0
      %2191 = vmatprep.mubr.bf16.mxu0 0
      %2192 = vmatmul.mubr.bf16.gmra.mrb[0].mxu0 %v1177
      %v2193 = vpop.f32.mrb[0].mxu0
      %v2194 = vadd.f32 0.0, %v2193
      %v2195 = vpop.f32.mrb[0].mxu0
      %v2196 = vpop.f32.mrb[0].mxu0
      %v2197 = vadd.f32 0.0, %v2196
      %v2198 = vpop.f32.mrb[0].mxu0
      %2199 = vmatprep.mubr.bf16.mxu0 0
      %2200 = vmatmul.mubr.bf16.gmra.mrb[0].mxu0 %v1180
      %v2201 = vpop.f32.mrb[0].mxu0
      %v2202 = vadd.f32 0.0, %v2201
      %v2203 = vpop.f32.mrb[0].mxu0
      %v2204 = vpop.f32.mrb[0].mxu0
      %v2205 = vadd.f32 0.0, %v2204
      %v2206 = vpop.f32.mrb[0].mxu0
      %2207 = vmatprep.mubr.bf16.mxu0 0
      %2208 = vmatmul.mubr.bf16.gmra.mrb[0].mxu0 %v1183
      %v2209 = vpop.f32.mrb[0].mxu0
      %v2210 = vadd.f32 0.0, %v2209
      %v2211 = vpop.f32.mrb[0].mxu0
      %v2212 = vpop.f32.mrb[0].mxu0
      %v2213 = vadd.f32 0.0, %v2212
      %v2214 = vpop.f32.mrb[0].mxu0
      %2215 = vmatprep.mubr.bf16.mxu0 0
      %2216 = vmatmul.mubr.bf16.gmra.mrb[0].mxu0 %v1186
      %v2217 = vpop.f32.mrb[0].mxu0
      %v2218 = vadd.f32 0.0, %v2217
      %v2219 = vpop.f32.mrb[0].mxu0
      %v2220 = vpop.f32.mrb[0].mxu0
      %v2221 = vadd.f32 0.0, %v2220
      %v2222 = vpop.f32.mrb[0].mxu0
      %2223 = vmatprep.mubr.bf16.mxu0 0
      %2224 = vmatmul.mubr.bf16.gmra.mrb[0].mxu0 %v1189
      %v2225 = vpop.f32.mrb[0].mxu0
      %v2226 = vadd.f32 0.0, %v2225
      %v2227 = vpop.f32.mrb[0].mxu0
      %v2228 = vpop.f32.mrb[0].mxu0
      %v2229 = vadd.f32 0.0, %v2228
      %v2230 = vpop.f32.mrb[0].mxu0
      %2231 = vmatprep.mubr.bf16.mxu0 0
      %2232 = vmatmul.mubr.bf16.gmra.mrb[0].mxu0 %v1192
      %v2233 = vpop.f32.mrb[0].mxu0
      %v2234 = vadd.f32 0.0, %v2233
      %v2235 = vpop.f32.mrb[0].mxu0
      %v2236 = vpop.f32.mrb[0].mxu0
      %v2237 = vadd.f32 0.0, %v2236
      %v2238 = vpop.f32.mrb[0].mxu0
      %2239 = vmatprep.mubr.bf16.mxu0 0
      %2240 = vmatmul.mubr.bf16.gmra.mrb[0].mxu0 %v1195
      %v2241 = vpop.f32.mrb[0].mxu0
      %v2242 = vadd.f32 0.0, %v2241
      %v2243 = vpop.f32.mrb[0].mxu0
      %v2244 = vpop.f32.mrb[0].mxu0
      %v2245 = vadd.f32 0.0, %v2244
      %v2246 = vpop.f32.mrb[0].mxu0
      %2247 = vmatprep.mubr.bf16.mxu0 0
      %2248 = vmatmul.mubr.bf16.gmra.mrb[0].mxu0 %v1198
      %v2249 = vpop.f32.mrb[0].mxu0
      %v2250 = vadd.f32 0.0, %v2249
      %v2251 = vpop.f32.mrb[0].mxu0
      %v2252 = vpop.f32.mrb[0].mxu0
      %v2253 = vadd.f32 0.0, %v2252
      %v2254 = vpop.f32.mrb[0].mxu0
      %2255 = vmatprep.mubr.bf16.mxu0 0
      %2256 = vmatmul.mubr.bf16.gmra.mrb[0].mxu0 %v1201
      %v2257 = vpop.f32.mrb[0].mxu0
      %v2258 = vadd.f32 0.0, %v2257
      %v2259 = vpop.f32.mrb[0].mxu0
      %v2260 = vpop.f32.mrb[0].mxu0
      %v2261 = vadd.f32 0.0, %v2260
      %v2262 = vpop.f32.mrb[0].mxu0
      %2263 = vmatprep.mubr.bf16.mxu0 0
      %2264 = vmatmul.mubr.bf16.gmra.mrb[0].mxu0 %v2106
      %v2265 = vpop.f32.mrb[0].mxu0
      %v2266 = vadd.f32 0.0, %v2265
      %v2267 = vpop.f32.mrb[0].mxu0
      %v2268 = vpop.f32.mrb[0].mxu0
      %v2269 = vadd.f32 0.0, %v2268
      %v2270 = vpop.f32.mrb[0].mxu0
      %2271 = vdwg.mxu0
      %v2272 = vadd.f32 %v2060, %v2146
      %v2273 = vadd.f32 %v2061, %v2149
      %v2274 = vadd.f32 %v2062, %v2154
      %v2275 = vadd.f32 %v2063, %v2157
      %v2276 = vadd.f32 %v2064, %v2162
      %v2277 = vadd.f32 %v2065, %v2165
      %v2278 = vadd.f32 %v2066, %v2170
      %v2279 = vadd.f32 %v2067, %v2173
      %v2280 = vadd.f32 %v2068, %v2178
      %v2281 = vadd.f32 %v2069, %v2181
      %v2282 = vadd.f32 %v2070, %v2186
      %v2283 = vadd.f32 %v2071, %v2189
      %v2284 = vadd.f32 %v2072, %v2194
      %v2285 = vadd.f32 %v2073, %v2197
      %v2286 = vadd.f32 %v2074, %v2202
      %v2287 = vadd.f32 %v2075, %v2205
      %v2288 = vadd.f32 %v2076, %v2210
      %v2289 = vadd.f32 %v2077, %v2213
      %v2290 = vadd.f32 %v2078, %v2218
      %v2291 = vadd.f32 %v2079, %v2221
      %v2292 = vadd.f32 %v2080, %v2226
      %v2293 = vadd.f32 %v2081, %v2229
      %v2294 = vadd.f32 %v2082, %v2234
      %v2295 = vadd.f32 %v2083, %v2237
      %v2296 = vadd.f32 %v2084, %v2242
      %v2297 = vadd.f32 %v2085, %v2245
      %v2298 = vadd.f32 %v2086, %v2250
      %v2299 = vadd.f32 %v2087, %v2253
      %v2300 = vadd.f32 %v2088, %v2258
      %v2301 = vadd.f32 %v2089, %v2261
      %v2302 = vadd.f32 %v2090, %v2266
      %v2303 = vadd.f32 %v2091, %v2269
      %v2306 = vrot.slane %v955, 1
      %v2307 = vrot.slane %v956, 1
      %v2308 = vsel %vm1596, %v2306, %v2307
      %s2309 = scalar_lea.vmem %s1, 10
      %v2310 = vld [vmem:[%s2309] sm:$0x3]
      %v2312 = vsel %vm417, %v2308, 0
      %v2315 = vsel %vm1203, %v2310, 0
      %2317 = vmatprep.subr.bf16.mxu0 0
      %2318 = vmatpush1.bf16.msra.mxu0 %v2315
      %2319 = vmatprep.subr.bf16.mxu0 0
      %2320 = vmatpush1.bf16.msra.mxu0 0
      %2321 = vmatprep.subr.bf16.mxu0 0
      %2322 = vmatpush1.bf16.msra.mxu0 0
      %2323 = vmatprep.subr.bf16.mxu0 0
      %2324 = vmatpush1.bf16.msra.mxu0 0
      %2325 = vmatprep.subr.bf16.mxu0 0
      %2326 = vmatpush1.bf16.msra.mxu0 0
      %2327 = vmatprep.subr.bf16.mxu0 0
      %2328 = vmatpush1.bf16.msra.mxu0 0
      %2329 = vmatprep.subr.bf16.mxu0 0
      %2330 = vmatpush1.bf16.msra.mxu0 0
      %2331 = vmatprep.subr.bf16.mxu0 0
      %2332 = vmatpush1.bf16.msra.mxu0 0
      %2333 = vmatprep.subr.bf16.mxu0 0
      %2334 = vmatpush1.bf16.msra.mxu0 0
      %2335 = vmatprep.subr.bf16.mxu0 0
      %2336 = vmatpush1.bf16.msra.mxu0 0
      %2337 = vmatprep.subr.bf16.mxu0 0
      %2338 = vmatpush1.bf16.msra.mxu0 0
      %2339 = vmatprep.subr.bf16.mxu0 0
      %2340 = vmatpush1.bf16.msra.mxu0 0
      %2341 = vmatprep.subr.bf16.mxu0 0
      %2342 = vmatpush1.bf16.msra.mxu0 0
      %2343 = vmatprep.subr.bf16.mxu0 0
      %2344 = vmatpush1.bf16.msra.mxu0 0
      %2345 = vmatprep.subr.bf16.mxu0 0
      %2346 = vmatpush1.bf16.msra.mxu0 0
      %2347 = vmatprep.subr.bf16.mxu0 0
      %2348 = vmatpush1.bf16.msra.mxu0 0
      %2349 = vmatprep.mubr.bf16.mxu0 0
      %2350 = vmatmul.mubr.bf16.gmra.mrb[0].mxu0 %v1651
      %v2351 = vpop.f32.mrb[0].mxu0
      %v2352 = vadd.f32 0.0, %v2351
      %v2353 = vpop.f32.mrb[0].mxu0
      %v2354 = vpop.f32.mrb[0].mxu0
      %v2355 = vadd.f32 0.0, %v2354
      %v2356 = vpop.f32.mrb[0].mxu0
      %2357 = vmatprep.mubr.bf16.mxu0 0
      %2358 = vmatmul.mubr.bf16.gmra.mrb[0].mxu0 %v1654
      %v2359 = vpop.f32.mrb[0].mxu0
      %v2360 = vadd.f32 0.0, %v2359
      %v2361 = vpop.f32.mrb[0].mxu0
      %v2362 = vpop.f32.mrb[0].mxu0
      %v2363 = vadd.f32 0.0, %v2362
      %v2364 = vpop.f32.mrb[0].mxu0
      %2365 = vmatprep.mubr.bf16.mxu0 0
      %2366 = vmatmul.mubr.bf16.gmra.mrb[0].mxu0 %v1657
      %v2367 = vpop.f32.mrb[0].mxu0
      %v2368 = vadd.f32 0.0, %v2367
      %v2369 = vpop.f32.mrb[0].mxu0
      %v2370 = vpop.f32.mrb[0].mxu0
      %v2371 = vadd.f32 0.0, %v2370
      %v2372 = vpop.f32.mrb[0].mxu0
      %2373 = vmatprep.mubr.bf16.mxu0 0
      %2374 = vmatmul.mubr.bf16.gmra.mrb[0].mxu0 %v1660
      %v2375 = vpop.f32.mrb[0].mxu0
      %v2376 = vadd.f32 0.0, %v2375
      %v2377 = vpop.f32.mrb[0].mxu0
      %v2378 = vpop.f32.mrb[0].mxu0
      %v2379 = vadd.f32 0.0, %v2378
      %v2380 = vpop.f32.mrb[0].mxu0
      %2381 = vmatprep.mubr.bf16.mxu0 0
      %2382 = vmatmul.mubr.bf16.gmra.mrb[0].mxu0 %v1663
      %v2383 = vpop.f32.mrb[0].mxu0
      %v2384 = vadd.f32 0.0, %v2383
      %v2385 = vpop.f32.mrb[0].mxu0
      %v2386 = vpop.f32.mrb[0].mxu0
      %v2387 = vadd.f32 0.0, %v2386
      %v2388 = vpop.f32.mrb[0].mxu0
      %2389 = vmatprep.mubr.bf16.mxu0 0
      %2390 = vmatmul.mubr.bf16.gmra.mrb[0].mxu0 %v1666
      %v2391 = vpop.f32.mrb[0].mxu0
      %v2392 = vadd.f32 0.0, %v2391
      %v2393 = vpop.f32.mrb[0].mxu0
      %v2394 = vpop.f32.mrb[0].mxu0
      %v2395 = vadd.f32 0.0, %v2394
      %v2396 = vpop.f32.mrb[0].mxu0
      %2397 = vmatprep.mubr.bf16.mxu0 0
      %2398 = vmatmul.mubr.bf16.gmra.mrb[0].mxu0 %v1669
      %v2399 = vpop.f32.mrb[0].mxu0
      %v2400 = vadd.f32 0.0, %v2399
      %v2401 = vpop.f32.mrb[0].mxu0
      %v2402 = vpop.f32.mrb[0].mxu0
      %v2403 = vadd.f32 0.0, %v2402
      %v2404 = vpop.f32.mrb[0].mxu0
      %2405 = vmatprep.mubr.bf16.mxu0 0
      %2406 = vmatmul.mubr.bf16.gmra.mrb[0].mxu0 %v1672
      %v2407 = vpop.f32.mrb[0].mxu0
      %v2408 = vadd.f32 0.0, %v2407
      %v2409 = vpop.f32.mrb[0].mxu0
      %v2410 = vpop.f32.mrb[0].mxu0
      %v2411 = vadd.f32 0.0, %v2410
      %v2412 = vpop.f32.mrb[0].mxu0
      %2413 = vmatprep.mubr.bf16.mxu0 0
      %2414 = vmatmul.mubr.bf16.gmra.mrb[0].mxu0 %v1675
      %v2415 = vpop.f32.mrb[0].mxu0
      %v2416 = vadd.f32 0.0, %v2415
      %v2417 = vpop.f32.mrb[0].mxu0
      %v2418 = vpop.f32.mrb[0].mxu0
      %v2419 = vadd.f32 0.0, %v2418
      %v2420 = vpop.f32.mrb[0].mxu0
      %2421 = vmatprep.mubr.bf16.mxu0 0
      %2422 = vmatmul.mubr.bf16.gmra.mrb[0].mxu0 %v1678
      %v2423 = vpop.f32.mrb[0].mxu0
      %v2424 = vadd.f32 0.0, %v2423
      %v2425 = vpop.f32.mrb[0].mxu0
      %v2426 = vpop.f32.mrb[0].mxu0
      %v2427 = vadd.f32 0.0, %v2426
      %v2428 = vpop.f32.mrb[0].mxu0
      %2429 = vmatprep.mubr.bf16.mxu0 0
      %2430 = vmatmul.mubr.bf16.gmra.mrb[0].mxu0 %v1681
      %v2431 = vpop.f32.mrb[0].mxu0
      %v2432 = vadd.f32 0.0, %v2431
      %v2433 = vpop.f32.mrb[0].mxu0
      %v2434 = vpop.f32.mrb[0].mxu0
      %v2435 = vadd.f32 0.0, %v2434
      %v2436 = vpop.f32.mrb[0].mxu0
      %2437 = vmatprep.mubr.bf16.mxu0 0
      %2438 = vmatmul.mubr.bf16.gmra.mrb[0].mxu0 %v1684
      %v2439 = vpop.f32.mrb[0].mxu0
      %v2440 = vadd.f32 0.0, %v2439
      %v2441 = vpop.f32.mrb[0].mxu0
      %v2442 = vpop.f32.mrb[0].mxu0
      %v2443 = vadd.f32 0.0, %v2442
      %v2444 = vpop.f32.mrb[0].mxu0
      %2445 = vmatprep.mubr.bf16.mxu0 0
      %2446 = vmatmul.mubr.bf16.gmra.mrb[0].mxu0 %v1687
      %v2447 = vpop.f32.mrb[0].mxu0
      %v2448 = vadd.f32 0.0, %v2447
      %v2449 = vpop.f32.mrb[0].mxu0
      %v2450 = vpop.f32.mrb[0].mxu0
      %v2451 = vadd.f32 0.0, %v2450
      %v2452 = vpop.f32.mrb[0].mxu0
      %2453 = vmatprep.mubr.bf16.mxu0 0
      %2454 = vmatmul.mubr.bf16.gmra.mrb[0].mxu0 %v1690
      %v2455 = vpop.f32.mrb[0].mxu0
      %v2456 = vadd.f32 0.0, %v2455
      %v2457 = vpop.f32.mrb[0].mxu0
      %v2458 = vpop.f32.mrb[0].mxu0
      %v2459 = vadd.f32 0.0, %v2458
      %v2460 = vpop.f32.mrb[0].mxu0
      %2461 = vmatprep.mubr.bf16.mxu0 0
      %2462 = vmatmul.mubr.bf16.gmra.mrb[0].mxu0 %v1693
      %v2463 = vpop.f32.mrb[0].mxu0
      %v2464 = vadd.f32 0.0, %v2463
      %v2465 = vpop.f32.mrb[0].mxu0
      %v2466 = vpop.f32.mrb[0].mxu0
      %v2467 = vadd.f32 0.0, %v2466
      %v2468 = vpop.f32.mrb[0].mxu0
      %2469 = vmatprep.mubr.bf16.mxu0 0
      %2470 = vmatmul.mubr.bf16.gmra.mrb[0].mxu0 %v2312
      %v2471 = vpop.f32.mrb[0].mxu0
      %v2472 = vadd.f32 0.0, %v2471
      %v2473 = vpop.f32.mrb[0].mxu0
      %v2474 = vpop.f32.mrb[0].mxu0
      %v2475 = vadd.f32 0.0, %v2474
      %v2476 = vpop.f32.mrb[0].mxu0
      %2477 = vdwg.mxu0
      %v2478 = vadd.f32 %v2272, %v2352
      %v2479 = vadd.f32 %v2273, %v2355
      %v2480 = vadd.f32 %v2274, %v2360
      %v2481 = vadd.f32 %v2275, %v2363
      %v2482 = vadd.f32 %v2276, %v2368
      %v2483 = vadd.f32 %v2277, %v2371
      %v2484 = vadd.f32 %v2278, %v2376
      %v2485 = vadd.f32 %v2279, %v2379
      %v2486 = vadd.f32 %v2280, %v2384
      %v2487 = vadd.f32 %v2281, %v2387
      %v2488 = vadd.f32 %v2282, %v2392
      %v2489 = vadd.f32 %v2283, %v2395
      %v2490 = vadd.f32 %v2284, %v2400
      %v2491 = vadd.f32 %v2285, %v2403
      %v2492 = vadd.f32 %v2286, %v2408
      %v2493 = vadd.f32 %v2287, %v2411
      %v2494 = vadd.f32 %v2288, %v2416
      %v2495 = vadd.f32 %v2289, %v2419
      %v2496 = vadd.f32 %v2290, %v2424
      %v2497 = vadd.f32 %v2291, %v2427
      %v2498 = vadd.f32 %v2292, %v2432
      %v2499 = vadd.f32 %v2293, %v2435
      %v2500 = vadd.f32 %v2294, %v2440
      %v2501 = vadd.f32 %v2295, %v2443
      %v2502 = vadd.f32 %v2296, %v2448
      %v2503 = vadd.f32 %v2297, %v2451
      %v2504 = vadd.f32 %v2298, %v2456
      %v2505 = vadd.f32 %v2299, %v2459
      %v2506 = vadd.f32 %v2300, %v2464
      %v2507 = vadd.f32 %v2301, %v2467
      %v2508 = vadd.f32 %v2302, %v2472
      %v2509 = vadd.f32 %v2303, %v2475
      %s2510 = scalar_lea.vmem %s1, 12
      %v2511 = vld [vmem:[%s2510] sm:$0x3]
      %v2513 = vsel %vm417, %v957, 0
      %v2516 = vsel %vm1203, %v2511, 0
      %2518 = vmatprep.subr.bf16.mxu0 0
      %2519 = vmatpush1.bf16.msra.mxu0 %v2516
      %2520 = vmatprep.subr.bf16.mxu0 0
      %2521 = vmatpush1.bf16.msra.mxu0 0
      %2522 = vmatprep.subr.bf16.mxu0 0
      %2523 = vmatpush1.bf16.msra.mxu0 0
      %2524 = vmatprep.subr.bf16.mxu0 0
      %2525 = vmatpush1.bf16.msra.mxu0 0
      %2526 = vmatprep.subr.bf16.mxu0 0
      %2527 = vmatpush1.bf16.msra.mxu0 0
      %2528 = vmatprep.subr.bf16.mxu0 0
      %2529 = vmatpush1.bf16.msra.mxu0 0
      %2530 = vmatprep.subr.bf16.mxu0 0
      %2531 = vmatpush1.bf16.msra.mxu0 0
      %2532 = vmatprep.subr.bf16.mxu0 0
      %2533 = vmatpush1.bf16.msra.mxu0 0
      %2534 = vmatprep.subr.bf16.mxu0 0
      %2535 = vmatpush1.bf16.msra.mxu0 0
      %2536 = vmatprep.subr.bf16.mxu0 0
      %2537 = vmatpush1.bf16.msra.mxu0 0
      %2538 = vmatprep.subr.bf16.mxu0 0
      %2539 = vmatpush1.bf16.msra.mxu0 0
      %2540 = vmatprep.subr.bf16.mxu0 0
      %2541 = vmatpush1.bf16.msra.mxu0 0
      %2542 = vmatprep.subr.bf16.mxu0 0
      %2543 = vmatpush1.bf16.msra.mxu0 0
      %2544 = vmatprep.subr.bf16.mxu0 0
      %2545 = vmatpush1.bf16.msra.mxu0 0
      %2546 = vmatprep.subr.bf16.mxu0 0
      %2547 = vmatpush1.bf16.msra.mxu0 0
      %2548 = vmatprep.subr.bf16.mxu0 0
      %2549 = vmatpush1.bf16.msra.mxu0 0
      %2550 = vmatprep.mubr.bf16.mxu0 0
      %2551 = vmatmul.mubr.bf16.gmra.mrb[0].mxu0 %v1372
      %v2552 = vpop.f32.mrb[0].mxu0
      %v2553 = vadd.f32 0.0, %v2552
      %v2554 = vpop.f32.mrb[0].mxu0
      %v2555 = vpop.f32.mrb[0].mxu0
      %v2556 = vadd.f32 0.0, %v2555
      %v2557 = vpop.f32.mrb[0].mxu0
      %2558 = vmatprep.mubr.bf16.mxu0 0
      %2559 = vmatmul.mubr.bf16.gmra.mrb[0].mxu0 %v1374
      %v2560 = vpop.f32.mrb[0].mxu0
      %v2561 = vadd.f32 0.0, %v2560
      %v2562 = vpop.f32.mrb[0].mxu0
      %v2563 = vpop.f32.mrb[0].mxu0
      %v2564 = vadd.f32 0.0, %v2563
      %v2565 = vpop.f32.mrb[0].mxu0
      %2566 = vmatprep.mubr.bf16.mxu0 0
      %2567 = vmatmul.mubr.bf16.gmra.mrb[0].mxu0 %v1376
      %v2568 = vpop.f32.mrb[0].mxu0
      %v2569 = vadd.f32 0.0, %v2568
      %v2570 = vpop.f32.mrb[0].mxu0
      %v2571 = vpop.f32.mrb[0].mxu0
      %v2572 = vadd.f32 0.0, %v2571
      %v2573 = vpop.f32.mrb[0].mxu0
      %2574 = vmatprep.mubr.bf16.mxu0 0
      %2575 = vmatmul.mubr.bf16.gmra.mrb[0].mxu0 %v1378
      %v2576 = vpop.f32.mrb[0].mxu0
      %v2577 = vadd.f32 0.0, %v2576
      %v2578 = vpop.f32.mrb[0].mxu0
      %v2579 = vpop.f32.mrb[0].mxu0
      %v2580 = vadd.f32 0.0, %v2579
      %v2581 = vpop.f32.mrb[0].mxu0
      %2582 = vmatprep.mubr.bf16.mxu0 0
      %2583 = vmatmul.mubr.bf16.gmra.mrb[0].mxu0 %v1380
      %v2584 = vpop.f32.mrb[0].mxu0
      %v2585 = vadd.f32 0.0, %v2584
      %v2586 = vpop.f32.mrb[0].mxu0
      %v2587 = vpop.f32.mrb[0].mxu0
      %v2588 = vadd.f32 0.0, %v2587
      %v2589 = vpop.f32.mrb[0].mxu0
      %2590 = vmatprep.mubr.bf16.mxu0 0
      %2591 = vmatmul.mubr.bf16.gmra.mrb[0].mxu0 %v1382
      %v2592 = vpop.f32.mrb[0].mxu0
      %v2593 = vadd.f32 0.0, %v2592
      %v2594 = vpop.f32.mrb[0].mxu0
      %v2595 = vpop.f32.mrb[0].mxu0
      %v2596 = vadd.f32 0.0, %v2595
      %v2597 = vpop.f32.mrb[0].mxu0
      %2598 = vmatprep.mubr.bf16.mxu0 0
      %2599 = vmatmul.mubr.bf16.gmra.mrb[0].mxu0 %v1384
      %v2600 = vpop.f32.mrb[0].mxu0
      %v2601 = vadd.f32 0.0, %v2600
      %v2602 = vpop.f32.mrb[0].mxu0
      %v2603 = vpop.f32.mrb[0].mxu0
      %v2604 = vadd.f32 0.0, %v2603
      %v2605 = vpop.f32.mrb[0].mxu0
      %2606 = vmatprep.mubr.bf16.mxu0 0
      %2607 = vmatmul.mubr.bf16.gmra.mrb[0].mxu0 %v1386
      %v2608 = vpop.f32.mrb[0].mxu0
      %v2609 = vadd.f32 0.0, %v2608
      %v2610 = vpop.f32.mrb[0].mxu0
      %v2611 = vpop.f32.mrb[0].mxu0
      %v2612 = vadd.f32 0.0, %v2611
      %v2613 = vpop.f32.mrb[0].mxu0
      %2614 = vmatprep.mubr.bf16.mxu0 0
      %2615 = vmatmul.mubr.bf16.gmra.mrb[0].mxu0 %v1388
      %v2616 = vpop.f32.mrb[0].mxu0
      %v2617 = vadd.f32 0.0, %v2616
      %v2618 = vpop.f32.mrb[0].mxu0
      %v2619 = vpop.f32.mrb[0].mxu0
      %v2620 = vadd.f32 0.0, %v2619
      %v2621 = vpop.f32.mrb[0].mxu0
      %2622 = vmatprep.mubr.bf16.mxu0 0
      %2623 = vmatmul.mubr.bf16.gmra.mrb[0].mxu0 %v1390
      %v2624 = vpop.f32.mrb[0].mxu0
      %v2625 = vadd.f32 0.0, %v2624
      %v2626 = vpop.f32.mrb[0].mxu0
      %v2627 = vpop.f32.mrb[0].mxu0
      %v2628 = vadd.f32 0.0, %v2627
      %v2629 = vpop.f32.mrb[0].mxu0
      %2630 = vmatprep.mubr.bf16.mxu0 0
      %2631 = vmatmul.mubr.bf16.gmra.mrb[0].mxu0 %v1392
      %v2632 = vpop.f32.mrb[0].mxu0
      %v2633 = vadd.f32 0.0, %v2632
      %v2634 = vpop.f32.mrb[0].mxu0
      %v2635 = vpop.f32.mrb[0].mxu0
      %v2636 = vadd.f32 0.0, %v2635
      %v2637 = vpop.f32.mrb[0].mxu0
      %2638 = vmatprep.mubr.bf16.mxu0 0
      %2639 = vmatmul.mubr.bf16.gmra.mrb[0].mxu0 %v1394
      %v2640 = vpop.f32.mrb[0].mxu0
      %v2641 = vadd.f32 0.0, %v2640
      %v2642 = vpop.f32.mrb[0].mxu0
      %v2643 = vpop.f32.mrb[0].mxu0
      %v2644 = vadd.f32 0.0, %v2643
      %v2645 = vpop.f32.mrb[0].mxu0
      %2646 = vmatprep.mubr.bf16.mxu0 0
      %2647 = vmatmul.mubr.bf16.gmra.mrb[0].mxu0 %v1396
      %v2648 = vpop.f32.mrb[0].mxu0
      %v2649 = vadd.f32 0.0, %v2648
      %v2650 = vpop.f32.mrb[0].mxu0
      %v2651 = vpop.f32.mrb[0].mxu0
      %v2652 = vadd.f32 0.0, %v2651
      %v2653 = vpop.f32.mrb[0].mxu0
      %2654 = vmatprep.mubr.bf16.mxu0 0
      %2655 = vmatmul.mubr.bf16.gmra.mrb[0].mxu0 %v1398
      %v2656 = vpop.f32.mrb[0].mxu0
      %v2657 = vadd.f32 0.0, %v2656
      %v2658 = vpop.f32.mrb[0].mxu0
      %v2659 = vpop.f32.mrb[0].mxu0
      %v2660 = vadd.f32 0.0, %v2659
      %v2661 = vpop.f32.mrb[0].mxu0
      %2662 = vmatprep.mubr.bf16.mxu0 0
      %2663 = vmatmul.mubr.bf16.gmra.mrb[0].mxu0 %v1894
      %v2664 = vpop.f32.mrb[0].mxu0
      %v2665 = vadd.f32 0.0, %v2664
      %v2666 = vpop.f32.mrb[0].mxu0
      %v2667 = vpop.f32.mrb[0].mxu0
      %v2668 = vadd.f32 0.0, %v2667
      %v2669 = vpop.f32.mrb[0].mxu0
      %2670 = vmatprep.mubr.bf16.mxu0 0
      %2671 = vmatmul.mubr.bf16.gmra.mrb[0].mxu0 %v2513
      %v2672 = vpop.f32.mrb[0].mxu0
      %v2673 = vadd.f32 0.0, %v2672
      %v2674 = vpop.f32.mrb[0].mxu0
      %v2675 = vpop.f32.mrb[0].mxu0
      %v2676 = vadd.f32 0.0, %v2675
      %v2677 = vpop.f32.mrb[0].mxu0
      %2678 = vdwg.mxu0
      %v2679 = vadd.f32 %v2478, %v2553
      %v2680 = vadd.f32 %v2479, %v2556
      %v2681 = vadd.f32 %v2480, %v2561
      %v2682 = vadd.f32 %v2481, %v2564
      %v2683 = vadd.f32 %v2482, %v2569
      %v2684 = vadd.f32 %v2483, %v2572
      %v2685 = vadd.f32 %v2484, %v2577
      %v2686 = vadd.f32 %v2485, %v2580
      %v2687 = vadd.f32 %v2486, %v2585
      %v2688 = vadd.f32 %v2487, %v2588
      %v2689 = vadd.f32 %v2488, %v2593
      %v2690 = vadd.f32 %v2489, %v2596
      %v2691 = vadd.f32 %v2490, %v2601
      %v2692 = vadd.f32 %v2491, %v2604
      %v2693 = vadd.f32 %v2492, %v2609
      %v2694 = vadd.f32 %v2493, %v2612
      %v2695 = vadd.f32 %v2494, %v2617
      %v2696 = vadd.f32 %v2495, %v2620
      %v2697 = vadd.f32 %v2496, %v2625
      %v2698 = vadd.f32 %v2497, %v2628
      %v2699 = vadd.f32 %v2498, %v2633
      %v2700 = vadd.f32 %v2499, %v2636
      %v2701 = vadd.f32 %v2500, %v2641
      %v2702 = vadd.f32 %v2501, %v2644
      %v2703 = vadd.f32 %v2502, %v2649
      %v2704 = vadd.f32 %v2503, %v2652
      %v2705 = vadd.f32 %v2504, %v2657
      %v2706 = vadd.f32 %v2505, %v2660
      %v2707 = vadd.f32 %v2506, %v2665
      %v2708 = vadd.f32 %v2507, %v2668
      %v2709 = vadd.f32 %v2508, %v2673
      %v2710 = vadd.f32 %v2509, %v2676
      %v2711 = vshrl.u32 %v957, 16
      %v2713 = vshll.u32 %v957, 16
      %v2715 = vrot.slane %v2713, 1
      %v2716 = vor.u32 %v2711, %v2715
      %v2718 = vshll.u32 %v958, 16
      %v2720 = vrot.slane %v2718, 1
      %v2721 = vsel %vm960, %v2716, %v2720
      %s2722 = scalar_lea.vmem %s1, 14
      %v2723 = vld [vmem:[%s2722] sm:$0x3]
      %v2725 = vsel %vm417, %v2721, 0
      %v2728 = vsel %vm1203, %v2723, 0
      %2730 = vmatprep.subr.bf16.mxu0 0
      %2731 = vmatpush1.bf16.msra.mxu0 %v2728
      %2732 = vmatprep.subr.bf16.mxu0 0
      %2733 = vmatpush1.bf16.msra.mxu0 0
      %2734 = vmatprep.subr.bf16.mxu0 0
      %2735 = vmatpush1.bf16.msra.mxu0 0
      %2736 = vmatprep.subr.bf16.mxu0 0
      %2737 = vmatpush1.bf16.msra.mxu0 0
      %2738 = vmatprep.subr.bf16.mxu0 0
      %2739 = vmatpush1.bf16.msra.mxu0 0
      %2740 = vmatprep.subr.bf16.mxu0 0
      %2741 = vmatpush1.bf16.msra.mxu0 0
      %2742 = vmatprep.subr.bf16.mxu0 0
      %2743 = vmatpush1.bf16.msra.mxu0 0
      %2744 = vmatprep.subr.bf16.mxu0 0
      %2745 = vmatpush1.bf16.msra.mxu0 0
      %2746 = vmatprep.subr.bf16.mxu0 0
      %2747 = vmatpush1.bf16.msra.mxu0 0
      %2748 = vmatprep.subr.bf16.mxu0 0
      %2749 = vmatpush1.bf16.msra.mxu0 0
      %2750 = vmatprep.subr.bf16.mxu0 0
      %2751 = vmatpush1.bf16.msra.mxu0 0
      %2752 = vmatprep.subr.bf16.mxu0 0
      %2753 = vmatpush1.bf16.msra.mxu0 0
      %2754 = vmatprep.subr.bf16.mxu0 0
      %2755 = vmatpush1.bf16.msra.mxu0 0
      %2756 = vmatprep.subr.bf16.mxu0 0
      %2757 = vmatpush1.bf16.msra.mxu0 0
      %2758 = vmatprep.subr.bf16.mxu0 0
      %2759 = vmatpush1.bf16.msra.mxu0 0
      %2760 = vmatprep.subr.bf16.mxu0 0
      %2761 = vmatpush1.bf16.msra.mxu0 0
      %2762 = vmatprep.mubr.bf16.mxu0 0
      %2763 = vmatmul.mubr.bf16.gmra.mrb[0].mxu0 %v1162
      %v2764 = vpop.f32.mrb[0].mxu0
      %v2765 = vadd.f32 0.0, %v2764
      %v2766 = vpop.f32.mrb[0].mxu0
      %v2767 = vpop.f32.mrb[0].mxu0
      %v2768 = vadd.f32 0.0, %v2767
      %v2769 = vpop.f32.mrb[0].mxu0
      %2770 = vmatprep.mubr.bf16.mxu0 0
      %2771 = vmatmul.mubr.bf16.gmra.mrb[0].mxu0 %v1165
      %v2772 = vpop.f32.mrb[0].mxu0
      %v2773 = vadd.f32 0.0, %v2772
      %v2774 = vpop.f32.mrb[0].mxu0
      %v2775 = vpop.f32.mrb[0].mxu0
      %v2776 = vadd.f32 0.0, %v2775
      %v2777 = vpop.f32.mrb[0].mxu0
      %2778 = vmatprep.mubr.bf16.mxu0 0
      %2779 = vmatmul.mubr.bf16.gmra.mrb[0].mxu0 %v1168
      %v2780 = vpop.f32.mrb[0].mxu0
      %v2781 = vadd.f32 0.0, %v2780
      %v2782 = vpop.f32.mrb[0].mxu0
      %v2783 = vpop.f32.mrb[0].mxu0
      %v2784 = vadd.f32 0.0, %v2783
      %v2785 = vpop.f32.mrb[0].mxu0
      %2786 = vmatprep.mubr.bf16.mxu0 0
      %2787 = vmatmul.mubr.bf16.gmra.mrb[0].mxu0 %v1171
      %v2788 = vpop.f32.mrb[0].mxu0
      %v2789 = vadd.f32 0.0, %v2788
      %v2790 = vpop.f32.mrb[0].mxu0
      %v2791 = vpop.f32.mrb[0].mxu0
      %v2792 = vadd.f32 0.0, %v2791
      %v2793 = vpop.f32.mrb[0].mxu0
      %2794 = vmatprep.mubr.bf16.mxu0 0
      %2795 = vmatmul.mubr.bf16.gmra.mrb[0].mxu0 %v1174
      %v2796 = vpop.f32.mrb[0].mxu0
      %v2797 = vadd.f32 0.0, %v2796
      %v2798 = vpop.f32.mrb[0].mxu0
      %v2799 = vpop.f32.mrb[0].mxu0
      %v2800 = vadd.f32 0.0, %v2799
      %v2801 = vpop.f32.mrb[0].mxu0
      %2802 = vmatprep.mubr.bf16.mxu0 0
      %2803 = vmatmul.mubr.bf16.gmra.mrb[0].mxu0 %v1177
      %v2804 = vpop.f32.mrb[0].mxu0
      %v2805 = vadd.f32 0.0, %v2804
      %v2806 = vpop.f32.mrb[0].mxu0
      %v2807 = vpop.f32.mrb[0].mxu0
      %v2808 = vadd.f32 0.0, %v2807
      %v2809 = vpop.f32.mrb[0].mxu0
      %2810 = vmatprep.mubr.bf16.mxu0 0
      %2811 = vmatmul.mubr.bf16.gmra.mrb[0].mxu0 %v1180
      %v2812 = vpop.f32.mrb[0].mxu0
      %v2813 = vadd.f32 0.0, %v2812
      %v2814 = vpop.f32.mrb[0].mxu0
      %v2815 = vpop.f32.mrb[0].mxu0
      %v2816 = vadd.f32 0.0, %v2815
      %v2817 = vpop.f32.mrb[0].mxu0
      %2818 = vmatprep.mubr.bf16.mxu0 0
      %2819 = vmatmul.mubr.bf16.gmra.mrb[0].mxu0 %v1183
      %v2820 = vpop.f32.mrb[0].mxu0
      %v2821 = vadd.f32 0.0, %v2820
      %v2822 = vpop.f32.mrb[0].mxu0
      %v2823 = vpop.f32.mrb[0].mxu0
      %v2824 = vadd.f32 0.0, %v2823
      %v2825 = vpop.f32.mrb[0].mxu0
      %2826 = vmatprep.mubr.bf16.mxu0 0
      %2827 = vmatmul.mubr.bf16.gmra.mrb[0].mxu0 %v1186
      %v2828 = vpop.f32.mrb[0].mxu0
      %v2829 = vadd.f32 0.0, %v2828
      %v2830 = vpop.f32.mrb[0].mxu0
      %v2831 = vpop.f32.mrb[0].mxu0
      %v2832 = vadd.f32 0.0, %v2831
      %v2833 = vpop.f32.mrb[0].mxu0
      %2834 = vmatprep.mubr.bf16.mxu0 0
      %2835 = vmatmul.mubr.bf16.gmra.mrb[0].mxu0 %v1189
      %v2836 = vpop.f32.mrb[0].mxu0
      %v2837 = vadd.f32 0.0, %v2836
      %v2838 = vpop.f32.mrb[0].mxu0
      %v2839 = vpop.f32.mrb[0].mxu0
      %v2840 = vadd.f32 0.0, %v2839
      %v2841 = vpop.f32.mrb[0].mxu0
      %2842 = vmatprep.mubr.bf16.mxu0 0
      %2843 = vmatmul.mubr.bf16.gmra.mrb[0].mxu0 %v1192
      %v2844 = vpop.f32.mrb[0].mxu0
      %v2845 = vadd.f32 0.0, %v2844
      %v2846 = vpop.f32.mrb[0].mxu0
      %v2847 = vpop.f32.mrb[0].mxu0
      %v2848 = vadd.f32 0.0, %v2847
      %v2849 = vpop.f32.mrb[0].mxu0
      %2850 = vmatprep.mubr.bf16.mxu0 0
      %2851 = vmatmul.mubr.bf16.gmra.mrb[0].mxu0 %v1195
      %v2852 = vpop.f32.mrb[0].mxu0
      %v2853 = vadd.f32 0.0, %v2852
      %v2854 = vpop.f32.mrb[0].mxu0
      %v2855 = vpop.f32.mrb[0].mxu0
      %v2856 = vadd.f32 0.0, %v2855
      %v2857 = vpop.f32.mrb[0].mxu0
      %2858 = vmatprep.mubr.bf16.mxu0 0
      %2859 = vmatmul.mubr.bf16.gmra.mrb[0].mxu0 %v1198
      %v2860 = vpop.f32.mrb[0].mxu0
      %v2861 = vadd.f32 0.0, %v2860
      %v2862 = vpop.f32.mrb[0].mxu0
      %v2863 = vpop.f32.mrb[0].mxu0
      %v2864 = vadd.f32 0.0, %v2863
      %v2865 = vpop.f32.mrb[0].mxu0
      %2866 = vmatprep.mubr.bf16.mxu0 0
      %2867 = vmatmul.mubr.bf16.gmra.mrb[0].mxu0 %v1201
      %v2868 = vpop.f32.mrb[0].mxu0
      %v2869 = vadd.f32 0.0, %v2868
      %v2870 = vpop.f32.mrb[0].mxu0
      %v2871 = vpop.f32.mrb[0].mxu0
      %v2872 = vadd.f32 0.0, %v2871
      %v2873 = vpop.f32.mrb[0].mxu0
      %2874 = vmatprep.mubr.bf16.mxu0 0
      %2875 = vmatmul.mubr.bf16.gmra.mrb[0].mxu0 %v2106
      %v2876 = vpop.f32.mrb[0].mxu0
      %v2877 = vadd.f32 0.0, %v2876
      %v2878 = vpop.f32.mrb[0].mxu0
      %v2879 = vpop.f32.mrb[0].mxu0
      %v2880 = vadd.f32 0.0, %v2879
      %v2881 = vpop.f32.mrb[0].mxu0
      %2882 = vmatprep.mubr.bf16.mxu0 0
      %2883 = vmatmul.mubr.bf16.gmra.mrb[0].mxu0 %v2725
      %v2884 = vpop.f32.mrb[0].mxu0
      %v2885 = vadd.f32 0.0, %v2884
      %v2886 = vpop.f32.mrb[0].mxu0
      %v2887 = vpop.f32.mrb[0].mxu0
      %v2888 = vadd.f32 0.0, %v2887
      %v2889 = vpop.f32.mrb[0].mxu0
      %2890 = vdwg.mxu0
      %v2891 = vadd.f32 %v2679, %v2765
      %v2892 = vadd.f32 %v2680, %v2768
      %v2893 = vadd.f32 %v2681, %v2773
      %v2894 = vadd.f32 %v2682, %v2776
      %v2895 = vadd.f32 %v2683, %v2781
      %v2896 = vadd.f32 %v2684, %v2784
      %v2897 = vadd.f32 %v2685, %v2789
      %v2898 = vadd.f32 %v2686, %v2792
      %v2899 = vadd.f32 %v2687, %v2797
      %v2900 = vadd.f32 %v2688, %v2800
      %v2901 = vadd.f32 %v2689, %v2805
      %v2902 = vadd.f32 %v2690, %v2808
      %v2903 = vadd.f32 %v2691, %v2813
      %v2904 = vadd.f32 %v2692, %v2816
      %v2905 = vadd.f32 %v2693, %v2821
      %v2906 = vadd.f32 %v2694, %v2824
      %v2907 = vadd.f32 %v2695, %v2829
      %v2908 = vadd.f32 %v2696, %v2832
      %v2909 = vadd.f32 %v2697, %v2837
      %v2910 = vadd.f32 %v2698, %v2840
      %v2911 = vadd.f32 %v2699, %v2845
      %v2912 = vadd.f32 %v2700, %v2848
      %v2913 = vadd.f32 %v2701, %v2853
      %v2914 = vadd.f32 %v2702, %v2856
      %v2915 = vadd.f32 %v2703, %v2861
      %v2916 = vadd.f32 %v2704, %v2864
      %v2917 = vadd.f32 %v2705, %v2869
      %v2918 = vadd.f32 %v2706, %v2872
      %v2919 = vadd.f32 %v2707, %v2877
      %v2920 = vadd.f32 %v2708, %v2880
      %v2921 = vadd.f32 %v2709, %v2885
      %v2922 = vadd.f32 %v2710, %v2888
      %v2925 = vrot.slane %v957, 1
      %v2926 = vrot.slane %v958, 1
      %v2927 = vsel %vm1596, %v2925, %v2926
      %s2928 = scalar_lea.vmem %s1, 16
      %v2929 = vld [vmem:[%s2928] sm:$0x3]
      %v2931 = vsel %vm417, %v2927, 0
      %v2934 = vsel %vm1203, %v2929, 0
      %2936 = vmatprep.subr.bf16.mxu0 0
      %2937 = vmatpush1.bf16.msra.mxu0 %v2934
      %2938 = vmatprep.subr.bf16.mxu0 0
      %2939 = vmatpush1.bf16.msra.mxu0 0
      %2940 = vmatprep.subr.bf16.mxu0 0
      %2941 = vmatpush1.bf16.msra.mxu0 0
      %2942 = vmatprep.subr.bf16.mxu0 0
      %2943 = vmatpush1.bf16.msra.mxu0 0
      %2944 = vmatprep.subr.bf16.mxu0 0
      %2945 = vmatpush1.bf16.msra.mxu0 0
      %2946 = vmatprep.subr.bf16.mxu0 0
      %2947 = vmatpush1.bf16.msra.mxu0 0
      %2948 = vmatprep.subr.bf16.mxu0 0
      %2949 = vmatpush1.bf16.msra.mxu0 0
      %2950 = vmatprep.subr.bf16.mxu0 0
      %2951 = vmatpush1.bf16.msra.mxu0 0
      %2952 = vmatprep.subr.bf16.mxu0 0
      %2953 = vmatpush1.bf16.msra.mxu0 0
      %2954 = vmatprep.subr.bf16.mxu0 0
      %2955 = vmatpush1.bf16.msra.mxu0 0
      %2956 = vmatprep.subr.bf16.mxu0 0
      %2957 = vmatpush1.bf16.msra.mxu0 0
      %2958 = vmatprep.subr.bf16.mxu0 0
      %2959 = vmatpush1.bf16.msra.mxu0 0
      %2960 = vmatprep.subr.bf16.mxu0 0
      %2961 = vmatpush1.bf16.msra.mxu0 0
      %2962 = vmatprep.subr.bf16.mxu0 0
      %2963 = vmatpush1.bf16.msra.mxu0 0
      %2964 = vmatprep.subr.bf16.mxu0 0
      %2965 = vmatpush1.bf16.msra.mxu0 0
      %2966 = vmatprep.subr.bf16.mxu0 0
      %2967 = vmatpush1.bf16.msra.mxu0 0
      %2968 = vmatprep.mubr.bf16.mxu0 0
      %2969 = vmatmul.mubr.bf16.gmra.mrb[0].mxu0 %v1654
      %v2970 = vpop.f32.mrb[0].mxu0
      %v2971 = vadd.f32 0.0, %v2970
      %v2972 = vpop.f32.mrb[0].mxu0
      %v2973 = vpop.f32.mrb[0].mxu0
      %v2974 = vadd.f32 0.0, %v2973
      %v2975 = vpop.f32.mrb[0].mxu0
      %2976 = vmatprep.mubr.bf16.mxu0 0
      %2977 = vmatmul.mubr.bf16.gmra.mrb[0].mxu0 %v1657
      %v2978 = vpop.f32.mrb[0].mxu0
      %v2979 = vadd.f32 0.0, %v2978
      %v2980 = vpop.f32.mrb[0].mxu0
      %v2981 = vpop.f32.mrb[0].mxu0
      %v2982 = vadd.f32 0.0, %v2981
      %v2983 = vpop.f32.mrb[0].mxu0
      %2984 = vmatprep.mubr.bf16.mxu0 0
      %2985 = vmatmul.mubr.bf16.gmra.mrb[0].mxu0 %v1660
      %v2986 = vpop.f32.mrb[0].mxu0
      %v2987 = vadd.f32 0.0, %v2986
      %v2988 = vpop.f32.mrb[0].mxu0
      %v2989 = vpop.f32.mrb[0].mxu0
      %v2990 = vadd.f32 0.0, %v2989
      %v2991 = vpop.f32.mrb[0].mxu0
      %2992 = vmatprep.mubr.bf16.mxu0 0
      %2993 = vmatmul.mubr.bf16.gmra.mrb[0].mxu0 %v1663
      %v2994 = vpop.f32.mrb[0].mxu0
      %v2995 = vadd.f32 0.0, %v2994
      %v2996 = vpop.f32.mrb[0].mxu0
      %v2997 = vpop.f32.mrb[0].mxu0
      %v2998 = vadd.f32 0.0, %v2997
      %v2999 = vpop.f32.mrb[0].mxu0
      %3000 = vmatprep.mubr.bf16.mxu0 0
      %3001 = vmatmul.mubr.bf16.gmra.mrb[0].mxu0 %v1666
      %v3002 = vpop.f32.mrb[0].mxu0
      %v3003 = vadd.f32 0.0, %v3002
      %v3004 = vpop.f32.mrb[0].mxu0
      %v3005 = vpop.f32.mrb[0].mxu0
      %v3006 = vadd.f32 0.0, %v3005
      %v3007 = vpop.f32.mrb[0].mxu0
      %3008 = vmatprep.mubr.bf16.mxu0 0
      %3009 = vmatmul.mubr.bf16.gmra.mrb[0].mxu0 %v1669
      %v3010 = vpop.f32.mrb[0].mxu0
      %v3011 = vadd.f32 0.0, %v3010
      %v3012 = vpop.f32.mrb[0].mxu0
      %v3013 = vpop.f32.mrb[0].mxu0
      %v3014 = vadd.f32 0.0, %v3013
      %v3015 = vpop.f32.mrb[0].mxu0
      %3016 = vmatprep.mubr.bf16.mxu0 0
      %3017 = vmatmul.mubr.bf16.gmra.mrb[0].mxu0 %v1672
      %v3018 = vpop.f32.mrb[0].mxu0
      %v3019 = vadd.f32 0.0, %v3018
      %v3020 = vpop.f32.mrb[0].mxu0
      %v3021 = vpop.f32.mrb[0].mxu0
      %v3022 = vadd.f32 0.0, %v3021
      %v3023 = vpop.f32.mrb[0].mxu0
      %3024 = vmatprep.mubr.bf16.mxu0 0
      %3025 = vmatmul.mubr.bf16.gmra.mrb[0].mxu0 %v1675
      %v3026 = vpop.f32.mrb[0].mxu0
      %v3027 = vadd.f32 0.0, %v3026
      %v3028 = vpop.f32.mrb[0].mxu0
      %v3029 = vpop.f32.mrb[0].mxu0
      %v3030 = vadd.f32 0.0, %v3029
      %v3031 = vpop.f32.mrb[0].mxu0
      %3032 = vmatprep.mubr.bf16.mxu0 0
      %3033 = vmatmul.mubr.bf16.gmra.mrb[0].mxu0 %v1678
      %v3034 = vpop.f32.mrb[0].mxu0
      %v3035 = vadd.f32 0.0, %v3034
      %v3036 = vpop.f32.mrb[0].mxu0
      %v3037 = vpop.f32.mrb[0].mxu0
      %v3038 = vadd.f32 0.0, %v3037
      %v3039 = vpop.f32.mrb[0].mxu0
      %3040 = vmatprep.mubr.bf16.mxu0 0
      %3041 = vmatmul.mubr.bf16.gmra.mrb[0].mxu0 %v1681
      %v3042 = vpop.f32.mrb[0].mxu0
      %v3043 = vadd.f32 0.0, %v3042
      %v3044 = vpop.f32.mrb[0].mxu0
      %v3045 = vpop.f32.mrb[0].mxu0
      %v3046 = vadd.f32 0.0, %v3045
      %v3047 = vpop.f32.mrb[0].mxu0
      %3048 = vmatprep.mubr.bf16.mxu0 0
      %3049 = vmatmul.mubr.bf16.gmra.mrb[0].mxu0 %v1684
      %v3050 = vpop.f32.mrb[0].mxu0
      %v3051 = vadd.f32 0.0, %v3050
      %v3052 = vpop.f32.mrb[0].mxu0
      %v3053 = vpop.f32.mrb[0].mxu0
      %v3054 = vadd.f32 0.0, %v3053
      %v3055 = vpop.f32.mrb[0].mxu0
      %3056 = vmatprep.mubr.bf16.mxu0 0
      %3057 = vmatmul.mubr.bf16.gmra.mrb[0].mxu0 %v1687
      %v3058 = vpop.f32.mrb[0].mxu0
      %v3059 = vadd.f32 0.0, %v3058
      %v3060 = vpop.f32.mrb[0].mxu0
      %v3061 = vpop.f32.mrb[0].mxu0
      %v3062 = vadd.f32 0.0, %v3061
      %v3063 = vpop.f32.mrb[0].mxu0
      %3064 = vmatprep.mubr.bf16.mxu0 0
      %3065 = vmatmul.mubr.bf16.gmra.mrb[0].mxu0 %v1690
      %v3066 = vpop.f32.mrb[0].mxu0
      %v3067 = vadd.f32 0.0, %v3066
      %v3068 = vpop.f32.mrb[0].mxu0
      %v3069 = vpop.f32.mrb[0].mxu0
      %v3070 = vadd.f32 0.0, %v3069
      %v3071 = vpop.f32.mrb[0].mxu0
      %3072 = vmatprep.mubr.bf16.mxu0 0
      %3073 = vmatmul.mubr.bf16.gmra.mrb[0].mxu0 %v1693
      %v3074 = vpop.f32.mrb[0].mxu0
      %v3075 = vadd.f32 0.0, %v3074
      %v3076 = vpop.f32.mrb[0].mxu0
      %v3077 = vpop.f32.mrb[0].mxu0
      %v3078 = vadd.f32 0.0, %v3077
      %v3079 = vpop.f32.mrb[0].mxu0
      %3080 = vmatprep.mubr.bf16.mxu0 0
      %3081 = vmatmul.mubr.bf16.gmra.mrb[0].mxu0 %v2312
      %v3082 = vpop.f32.mrb[0].mxu0
      %v3083 = vadd.f32 0.0, %v3082
      %v3084 = vpop.f32.mrb[0].mxu0
      %v3085 = vpop.f32.mrb[0].mxu0
      %v3086 = vadd.f32 0.0, %v3085
      %v3087 = vpop.f32.mrb[0].mxu0
      %3088 = vmatprep.mubr.bf16.mxu0 0
      %3089 = vmatmul.mubr.bf16.gmra.mrb[0].mxu0 %v2931
      %v3090 = vpop.f32.mrb[0].mxu0
      %v3091 = vadd.f32 0.0, %v3090
      %v3092 = vpop.f32.mrb[0].mxu0
      %v3093 = vpop.f32.mrb[0].mxu0
      %v3094 = vadd.f32 0.0, %v3093
      %v3095 = vpop.f32.mrb[0].mxu0
      %3096 = vdwg.mxu0
      %v3097 = vadd.f32 %v2891, %v2971
      %v3098 = vadd.f32 %v2892, %v2974
      %v3099 = vadd.f32 %v2893, %v2979
      %v3100 = vadd.f32 %v2894, %v2982
      %v3101 = vadd.f32 %v2895, %v2987
      %v3102 = vadd.f32 %v2896, %v2990
      %v3103 = vadd.f32 %v2897, %v2995
      %v3104 = vadd.f32 %v2898, %v2998
      %v3105 = vadd.f32 %v2899, %v3003
      %v3106 = vadd.f32 %v2900, %v3006
      %v3107 = vadd.f32 %v2901, %v3011
      %v3108 = vadd.f32 %v2902, %v3014
      %v3109 = vadd.f32 %v2903, %v3019
      %v3110 = vadd.f32 %v2904, %v3022
      %v3111 = vadd.f32 %v2905, %v3027
      %v3112 = vadd.f32 %v2906, %v3030
      %v3113 = vadd.f32 %v2907, %v3035
      %v3114 = vadd.f32 %v2908, %v3038
      %v3115 = vadd.f32 %v2909, %v3043
      %v3116 = vadd.f32 %v2910, %v3046
      %v3117 = vadd.f32 %v2911, %v3051
      %v3118 = vadd.f32 %v2912, %v3054
      %v3119 = vadd.f32 %v2913, %v3059
      %v3120 = vadd.f32 %v2914, %v3062
      %v3121 = vadd.f32 %v2915, %v3067
      %v3122 = vadd.f32 %v2916, %v3070
      %v3123 = vadd.f32 %v2917, %v3075
      %v3124 = vadd.f32 %v2918, %v3078
      %v3125 = vadd.f32 %v2919, %v3083
      %v3126 = vadd.f32 %v2920, %v3086
      %v3127 = vadd.f32 %v2921, %v3091
      %v3128 = vadd.f32 %v2922, %v3094
      %v3129 = vld [vmem:[%s2] sm:$0x1]
      %v3131 = vlaneseq
      %v3132 = vshrl.u32 %v3131, 7
      %v3133 = vsub.s32 0, %v3132
      %v3134 = vrot.slane %v3129, %v3133
      %v3136 = vadd.f32 %v3097, %v3134
      %v3137 = vadd.f32 %v3098, %v3134
      %v3138 = vadd.f32 %v3099, %v3134
      %v3139 = vadd.f32 %v3100, %v3134
      %v3140 = vadd.f32 %v3101, %v3134
      %v3141 = vadd.f32 %v3102, %v3134
      %v3142 = vadd.f32 %v3103, %v3134
      %v3143 = vadd.f32 %v3104, %v3134
      %v3144 = vadd.f32 %v3105, %v3134
      %v3145 = vadd.f32 %v3106, %v3134
      %v3146 = vadd.f32 %v3107, %v3134
      %v3147 = vadd.f32 %v3108, %v3134
      %v3148 = vadd.f32 %v3109, %v3134
      %v3149 = vadd.f32 %v3110, %v3134
      %v3150 = vadd.f32 %v3111, %v3134
      %v3151 = vadd.f32 %v3112, %v3134
      %v3152 = vadd.f32 %v3113, %v3134
      %v3153 = vadd.f32 %v3114, %v3134
      %v3154 = vadd.f32 %v3115, %v3134
      %v3155 = vadd.f32 %v3116, %v3134
      %v3156 = vadd.f32 %v3117, %v3134
      %v3157 = vadd.f32 %v3118, %v3134
      %v3158 = vadd.f32 %v3119, %v3134
      %v3159 = vadd.f32 %v3120, %v3134
      %v3160 = vadd.f32 %v3121, %v3134
      %v3161 = vadd.f32 %v3122, %v3134
      %v3162 = vadd.f32 %v3123, %v3134
      %v3163 = vadd.f32 %v3124, %v3134
      %v3164 = vadd.f32 %v3125, %v3134
      %v3165 = vadd.f32 %v3126, %v3134
      %v3166 = vadd.f32 %v3127, %v3134
      %v3167 = vadd.f32 %v3128, %v3134
      %v3168 = vmul.f32 %v3136, 0.2
      %v3169 = vmul.f32 %v3137, 0.2
      %v3170 = vmul.f32 %v3138, 0.2
      %v3171 = vmul.f32 %v3139, 0.2
      %v3172 = vmul.f32 %v3140, 0.2
      %v3173 = vmul.f32 %v3141, 0.2
      %v3174 = vmul.f32 %v3142, 0.2
      %v3175 = vmul.f32 %v3143, 0.2
      %v3176 = vmul.f32 %v3144, 0.2
      %v3177 = vmul.f32 %v3145, 0.2
      %v3178 = vmul.f32 %v3146, 0.2
      %v3179 = vmul.f32 %v3147, 0.2
      %v3180 = vmul.f32 %v3148, 0.2
      %v3181 = vmul.f32 %v3149, 0.2
      %v3182 = vmul.f32 %v3150, 0.2
      %v3183 = vmul.f32 %v3151, 0.2
      %v3184 = vmul.f32 %v3152, 0.2
      %v3185 = vmul.f32 %v3153, 0.2
      %v3186 = vmul.f32 %v3154, 0.2
      %v3187 = vmul.f32 %v3155, 0.2
      %v3188 = vmul.f32 %v3156, 0.2
      %v3189 = vmul.f32 %v3157, 0.2
      %v3190 = vmul.f32 %v3158, 0.2
      %v3191 = vmul.f32 %v3159, 0.2
      %v3192 = vmul.f32 %v3160, 0.2
      %v3193 = vmul.f32 %v3161, 0.2
      %v3194 = vmul.f32 %v3162, 0.2
      %v3195 = vmul.f32 %v3163, 0.2
      %v3196 = vmul.f32 %v3164, 0.2
      %v3197 = vmul.f32 %v3165, 0.2
      %v3198 = vmul.f32 %v3166, 0.2
      %v3199 = vmul.f32 %v3167, 0.2
      %v3200 = vmax.f32 %v3136, %v3168
      %v3201 = vmax.f32 %v3137, %v3169
      %v3202 = vmax.f32 %v3138, %v3170
      %v3203 = vmax.f32 %v3139, %v3171
      %v3204 = vmax.f32 %v3140, %v3172
      %v3205 = vmax.f32 %v3141, %v3173
      %v3206 = vmax.f32 %v3142, %v3174
      %v3207 = vmax.f32 %v3143, %v3175
      %v3208 = vmax.f32 %v3144, %v3176
      %v3209 = vmax.f32 %v3145, %v3177
      %v3210 = vmax.f32 %v3146, %v3178
      %v3211 = vmax.f32 %v3147, %v3179
      %v3212 = vmax.f32 %v3148, %v3180
      %v3213 = vmax.f32 %v3149, %v3181
      %v3214 = vmax.f32 %v3150, %v3182
      %v3215 = vmax.f32 %v3151, %v3183
      %v3216 = vmax.f32 %v3152, %v3184
      %v3217 = vmax.f32 %v3153, %v3185
      %v3218 = vmax.f32 %v3154, %v3186
      %v3219 = vmax.f32 %v3155, %v3187
      %v3220 = vmax.f32 %v3156, %v3188
      %v3221 = vmax.f32 %v3157, %v3189
      %v3222 = vmax.f32 %v3158, %v3190
      %v3223 = vmax.f32 %v3159, %v3191
      %v3224 = vmax.f32 %v3160, %v3192
      %v3225 = vmax.f32 %v3161, %v3193
      %v3226 = vmax.f32 %v3162, %v3194
      %v3227 = vmax.f32 %v3163, %v3195
      %v3228 = vmax.f32 %v3164, %v3196
      %v3229 = vmax.f32 %v3165, %v3197
      %v3230 = vmax.f32 %v3166, %v3198
      %v3231 = vmax.f32 %v3167, %v3199
      %vm3232 = vcmask 64512
      %3233 = vst.msk [vmem:[%s194] sm:$0xff] %vm3232, %v3200
      %3234 = vst.msk [vmem:[%s194 + $0x8] sm:$0xff] %vm3232, %v3201
      %3235 = vst.msk [vmem:[%s194 + $0x10] sm:$0xff] %vm3232, %v3202
      %3236 = vst.msk [vmem:[%s194 + $0x18] sm:$0xff] %vm3232, %v3203
      %3237 = vst.msk [vmem:[%s194 + $0x20] sm:$0xff] %vm3232, %v3204
      %3238 = vst.msk [vmem:[%s194 + $0x28] sm:$0xff] %vm3232, %v3205
      %3239 = vst.msk [vmem:[%s194 + $0x30] sm:$0xff] %vm3232, %v3206
      %3240 = vst.msk [vmem:[%s194 + $0x38] sm:$0xff] %vm3232, %v3207
      %3241 = vst.msk [vmem:[%s194 + $0x40] sm:$0xff] %vm3232, %v3208
      %3242 = vst.msk [vmem:[%s194 + $0x48] sm:$0xff] %vm3232, %v3209
      %3243 = vst.msk [vmem:[%s194 + $0x50] sm:$0xff] %vm3232, %v3210
      %3244 = vst.msk [vmem:[%s194 + $0x58] sm:$0xff] %vm3232, %v3211
      %3245 = vst.msk [vmem:[%s194 + $0x60] sm:$0xff] %vm3232, %v3212
      %3246 = vst.msk [vmem:[%s194 + $0x68] sm:$0xff] %vm3232, %v3213
      %3247 = vst.msk [vmem:[%s194 + $0x70] sm:$0xff] %vm3232, %v3214
      %3248 = vst.msk [vmem:[%s194 + $0x78] sm:$0xff] %vm3232, %v3215
      %3249 = vst.msk [vmem:[%s194 + $0x80] sm:$0xff] %vm3232, %v3216
      %3250 = vst.msk [vmem:[%s194 + $0x88] sm:$0xff] %vm3232, %v3217
      %3251 = vst.msk [vmem:[%s194 + $0x90] sm:$0xff] %vm3232, %v3218
      %3252 = vst.msk [vmem:[%s194 + $0x98] sm:$0xff] %vm3232, %v3219
      %3253 = vst.msk [vmem:[%s194 + $0xa0] sm:$0xff] %vm3232, %v3220
      %3254 = vst.msk [vmem:[%s194 + $0xa8] sm:$0xff] %vm3232, %v3221
      %3255 = vst.msk [vmem:[%s194 + $0xb0] sm:$0xff] %vm3232, %v3222
      %3256 = vst.msk [vmem:[%s194 + $0xb8] sm:$0xff] %vm3232, %v3223
      %3257 = vst.msk [vmem:[%s194 + $0xc0] sm:$0xff] %vm3232, %v3224
      %3258 = vst.msk [vmem:[%s194 + $0xc8] sm:$0xff] %vm3232, %v3225
      %3259 = vst.msk [vmem:[%s194 + $0xd0] sm:$0xff] %vm3232, %v3226
      %3260 = vst.msk [vmem:[%s194 + $0xd8] sm:$0xff] %vm3232, %v3227
      %3261 = vst.msk [vmem:[%s194 + $0xe0] sm:$0xff] %vm3232, %v3228
      %3262 = vst.msk [vmem:[%s194 + $0xe8] sm:$0xff] %vm3232, %v3229
      %3263 = vst.msk [vmem:[%s194 + $0xf0] sm:$0xff] %vm3232, %v3230
      %3264 = vst.msk [vmem:[%s194 + $0xf8] sm:$0xff] %vm3232, %v3231
      %s3265 = smul.u32 16, %s19
      %p3266 = scmp.lt.s32.totalorder %s18, 1
      %s3267 = scalar_select %p3266, %s18, 1
      %p3268 = scmp.lt.s32.totalorder %s3265, 15
      %s3269 = scalar_select %p3268, %s3265, 15
      %s3270 = smul.addr %s3269, 2
      %s3271 = smul.addr %s3267, 32
      %s3272 = sadd.s32 %s3270, %s3271
      %s3273 = smul.addr %s3272, 8
      %s3274 = scalar_lea.vmem %s3, %s3273
      // Predicated region
      $region33: #{tpu_custom_call.1} parent=31 // pred_check
        %p3275 = pneg %p114
      $region34: #{tpu_custom_call.1} parent=31 // pred_check_branch
        %3277 = sbr.rel (%p3275) target = $region36
      $region35: #{tpu_custom_call.1} parent=31 // pred_region
        %s3278 = smul.u32 16, %s19
      $region36: #{tpu_custom_call.1} parent=31 // pred_fallthru
        _
    $region32: #{tpu_custom_call.1} parent=5 // pred_fallthru
      _
    %p3279 = scmp.le.s32.totalorder 2, %s9
    // Predicated region
    $region37: #{tpu_custom_call.1} parent=5 // pred_check
      %p3280 = pneg %p3279
    $region38: #{tpu_custom_call.1} parent=5 // pred_check_branch
      %3282 = sbr.rel (%p3280) target = $region40
    $region39: #{tpu_custom_call.1} parent=5 // pred_region
      %s3283 = ssub.s32 %s9, 2
      // Predicated region
      $region41: #{tpu_custom_call.1} parent=39 // pred_check
        %p3284 = pneg %p120
      $region42: #{tpu_custom_call.1} parent=39 // pred_check_branch
        %3286 = sbr.rel (%p3284) target = $region44
      $region43: #{tpu_custom_call.1} parent=39 // pred_region
        %s3287 = smul.u32 16, %s21
        %p3288 = scmp.lt.s32.totalorder %s20, 1
        %s3289 = scalar_select %p3288, %s20, 1
        %p3290 = scmp.lt.s32.totalorder %s3287, 15
        %s3291 = scalar_select %p3290, %s3287, 15
        %s3292 = smul.addr %s3291, 2
        %s3293 = smul.addr %s3289, 32
        %s3294 = sadd.s32 %s3292, %s3293
        %s3295 = smul.addr %s3294, 8
        %s3296 = scalar_lea.vmem %s3, %s3295
      $region44: #{tpu_custom_call.1} parent=39 // pred_fallthru
        _
    $region40: #{tpu_custom_call.1} parent=5 // pred_fallthru
      _
  $region6: #{tpu_custom_call.1} parent=0 // loop_footer
    %s13 = sadd.s32 1, %s9
  $region7: #{tpu_custom_call.1} parent=0 // loop_footer_branch
    %8 = sbr.rel target = $region3
  $region8: #{tpu_custom_call.1} parent=0 // loop_exit
    _

</llo_original>
